<compile_context>
chip_gen: v7x
topology: tpu7x:2x2x1
jax: 0.10.0
libtpu: 0.0.40
codegen_flags: <defaults>
</compile_context>

<pallas_src>
import functools
import math

import jax
import jax.numpy as jnp
from jax.experimental import pallas as pl

D_MODEL = 32
NHEAD = 4
DIM_FF = 64
NUM_LAYERS = 2
EPS = 1e-5  # PyTorch LayerNorm default eps

PARAMS_PER_LAYER = 12  # wqkv,bqkv,wo,bo,w1,b1,w2,b2,g1,be1,g2,be2


# ----------------------------- shared math ------------------------------------
def _layernorm(x, g, b):
    mu = jnp.mean(x, axis=-1, keepdims=True)
    var = jnp.mean(jnp.square(x - mu), axis=-1, keepdims=True)
    return (x - mu) * jax.lax.rsqrt(var + EPS) * g + b


def _encoder_layer_math(x, mask, p, num_heads):
    """One post-norm encoder layer on a (B*S, D) activation slab (in-kernel)."""
    wqkv, bqkv, wo, bo, w1, b1, w2, b2, g1, be1, g2, be2 = p
    D = x.shape[-1]
    dh = D // num_heads
    scale = 1.0 / math.sqrt(dh)

    # ---- fused QKV projection: one MXU push onto a (B*S, 3D) slab ----
    qkv = jnp.dot(x, wqkv, preferred_element_type=jnp.float32) + bqkv

    # ---- multi-head attention over the whole batch at once ----
    # Cross-batch attention is suppressed with the block-diagonal `mask`.
    # Wo is folded per head: attn = sum_h (A_h V_h) @ Wo[h*dh:(h+1)*dh, :]
    # (mathematically identical to concat-then-matmul, no lane concat needed).
    attn = None
    for h in range(num_heads):                       # static, num_heads == 4
        lo = h * dh
        qh = qkv[:, lo:lo + dh]
        kh = qkv[:, D + lo:D + lo + dh]
        vh = qkv[:, 2 * D + lo:2 * D + lo + dh]
        # contract feature dims directly (no explicit kh.T / XLU transpose)
        s = jax.lax.dot_general(qh, kh, (((1,), (1,)), ((), ())),
                                preferred_element_type=jnp.float32)
        s = s * scale + mask                         # (B*S, B*S)
        s = s - jnp.max(s, axis=-1, keepdims=True)
        e = jnp.exp(s)
        # EUP reciprocal for the softmax denominator (approx=False keeps tight
        # numerical parity with the f32 reference; approx=True is a free-slot
        # option if ~1e-3 relative error is acceptable).
        prob = e * pl.reciprocal(jnp.sum(e, axis=-1, keepdims=True))
        oh = jnp.dot(prob, vh, preferred_element_type=jnp.float32)       # (BS, dh)
        contrib = jnp.dot(oh, wo[lo:lo + dh, :],
                          preferred_element_type=jnp.float32)            # (BS, D)
        attn = contrib if attn is None else attn + contrib
    attn = attn + bo

    # ---- residual + LayerNorm1 (post-norm, torch default norm_first=False) ----
    x1 = _layernorm(x + attn, g1, be1)

    # ---- feed-forward (relu) + residual + LayerNorm2 ----
    h1 = jnp.maximum(jnp.dot(x1, w1, preferred_element_type=jnp.float32) + b1, 0.0)
    ff = jnp.dot(h1, w2, preferred_element_type=jnp.float32) + b2
    return _layernorm(x1 + ff, g2, be2)


# ----------------------------- Pallas kernel ----------------------------------
def _fused_encoder_kernel(x_ref, mask_ref, *refs, num_layers, num_heads):
    out_ref = refs[-1]
    param_refs = refs[:-1]
    x = x_ref[...]           # (B*S, D)
    mask = mask_ref[...]     # (B*S, B*S) block-diagonal additive mask
    for l in range(num_layers):                      # static: both layers fused
        p = tuple(r[...] for r in
                  param_refs[l * PARAMS_PER_LAYER:(l + 1) * PARAMS_PER_LAYER])
        x = _encoder_layer_math(x, mask, p, num_heads)
    out_ref[...] = x.astype(out_ref.dtype)


# ----------------------------- wrapper ---------------------------------------
def _pack_layer_params(p):
    wqkv = jnp.concatenate([p["wq"], p["wk"], p["wv"]], axis=1)   # (D, 3D)
    bqkv = jnp.concatenate([p["bq"], p["bk"], p["bv"]], axis=1)   # (1, 3D)
    return (wqkv, bqkv, p["wo"], p["bo"], p["w1"], p["b1"], p["w2"], p["b2"],
            p["g1"], p["be1"], p["g2"], p["be2"])


def _cost_estimate(B, S, D, F, H, L):
    BS = B * S
    dh = D // H
    per_layer_flops = (
        2 * BS * D * (3 * D)                                   # fused QKV
        + H * (2 * BS * BS * dh + 2 * BS * BS * dh             # scores + A@V
               + 2 * BS * dh * D)                              # per-head Wo fold
        + 2 * BS * D * F + 2 * BS * F * D)                     # FFN
    flops = L * per_layer_flops
    transcendentals = L * (H * BS * BS + H * BS + 2 * BS)      # exp, recip, rsqrt
    n_param_f32 = L * (D * 3 * D + 3 * D + D * D + D
                       + D * F + F + F * D + D + 4 * D)
    bytes_accessed = 4 * (2 * BS * D + BS * BS + n_param_f32)
    return pl.CostEstimate(flops=int(flops),
                           transcendentals=int(transcendentals),
                           bytes_accessed=int(bytes_accessed))


def batch_first_transformer_encoder_pallas(src, layer_params, num_heads=NHEAD):
    B, S, D = src.shape
    BS = B * S
    F = layer_params[0]["w1"].shape[1]

    # Layout plumbing (free, contiguous reshape): whole batch as one slab.
    x2d = src.reshape(BS, D)

    # Block-diagonal mask: row i may only attend to columns of the same batch.
    batch_id = jnp.arange(BS, dtype=jnp.int32) // S
    mask = jnp.where(batch_id[:, None] == batch_id[None, :],
                     0.0, -1e30).astype(jnp.float32)

    flat_params = []
    for p in layer_params:
        flat_params.extend(_pack_layer_params(p))

    kernel = functools.partial(_fused_encoder_kernel,
                               num_layers=len(layer_params),
                               num_heads=num_heads)

    # No grid / no BlockSpecs: every operand is a whole-array VMEM block and
    # the kernel runs as a single step (one launch for the entire encoder).
    out2d = pl.pallas_call(
        kernel,
        out_shape=jax.ShapeDtypeStruct((BS, D), src.dtype),
        cost_estimate=_cost_estimate(B, S, D, F, num_heads, len(layer_params)),
    )(x2d, mask, *flat_params)
    return out2d.reshape(B, S, D)


# ----------------------------- parameter init --------------------------------
def _xavier_uniform(key, shape):
    # torch weight convention: shape = (out_features, in_features)
    fan_out, fan_in = shape
    bound = math.sqrt(6.0 / (fan_in + fan_out))
    return jax.random.uniform(key, shape, jnp.float32, -bound, bound)


def init_layer_params(key, d_model, nhead, dim_ff):
    ks = jax.random.split(key, 10)
    in_proj = _xavier_uniform(ks[0], (3 * d_model, d_model))  # MHA in_proj_weight
    wq_t, wk_t, wv_t = jnp.split(in_proj, 3, axis=0)
    wo_t = _xavier_uniform(ks[1], (d_model, d_model))         # out_proj.weight
    w1_t = _xavier_uniform(ks[2], (dim_ff, d_model))          # linear1.weight
    w2_t = _xavier_uniform(ks[3], (d_model, dim_ff))          # linear2.weight

    def small(k, n):
        return 0.02 * jax.random.normal(k, (1, n), jnp.float32)

    return dict(
        # pre-transposed so that y = x @ W inside the kernel
        wq=wq_t.T, wk=wk_t.T, wv=wv_t.T, wo=wo_t.T,
        bq=small(ks[4], d_model), bk=small(ks[5], d_model),
        bv=small(ks[6], d_model), bo=small(ks[7], d_model),
        w1=w1_t.T, b1=small(ks[8], dim_ff),
        w2=w2_t.T, b2=small(ks[9], d_model),
        # LayerNorm params are 1-D in torch => untouched by xavier init
        g1=jnp.ones((1, d_model), jnp.float32), be1=jnp.zeros((1, d_model), jnp.float32),
        g2=jnp.ones((1, d_model), jnp.float32), be2=jnp.zeros((1, d_model), jnp.float32),
    )


# ----------------------------- pure-JAX reference ----------------------------
def encoder_layer_ref(x, p, nhead):
    B, S, D = x.shape
    dh = D // nhead
    q = x @ p["wq"] + p["bq"]
    k = x @ p["wk"] + p["bk"]
    v = x @ p["wv"] + p["bv"]
    qh = q.reshape(B, S, nhead, dh)
    kh = k.reshape(B, S, nhead, dh)
    vh = v.reshape(B, S, nhead, dh)
    s = jnp.einsum("bshd,bthd->bhst", qh, kh) / math.sqrt(dh)
    a = jax.nn.softmax(s, axis=-1)
    o = jnp.einsum("bhst,bthd->bshd", a, vh).reshape(B, S, D)
    o = o @ p["wo"] + p["bo"]
    x1 = _layernorm(x + o, p["g1"], p["be1"])
    ff = jnp.maximum(x1 @ p["w1"] + p["b1"], 0.0) @ p["w2"] + p["b2"]
    return _layernorm(x1 + ff, p["g2"], p["be2"])


# ----------------------------- main -------------------------------------------
if __name__ == "__main__":
    key = jax.random.PRNGKey(0)
    k_x, *k_layers = jax.random.split(key, NUM_LAYERS + 1)

    B, S = 2, 8
    src = jax.random.normal(k_x, (B, S, D_MODEL), jnp.float32)   # batch-first input
    layer_params = [init_layer_params(k, D_MODEL, NHEAD, DIM_FF) for k in k_layers]

    out = jax.block_until_ready(
        batch_first_transformer_encoder_pallas(src, layer_params))

    ref = src
    for p in layer_params:
        ref = encoder_layer_ref(ref, p, NHEAD)

    assert out.shape == (B, S, D_MODEL)
    max_err = float(jnp.max(jnp.abs(out - ref)))
    assert jnp.allclose(out, ref, atol=5e-4, rtol=5e-4), max_err
    print("KERNEL_OK")
</pallas_src>

<mosaic_0001>
module attributes {stable_mosaic.version = 11 : i64} {
  func.func @_fused_encoder_kernel(%arg0: memref<16x32xf32, #tpu.memory_space<vmem>>, %arg1: memref<16x16xf32, #tpu.memory_space<vmem>>, %arg2: memref<32x96xf32, #tpu.memory_space<vmem>>, %arg3: memref<1x96xf32, #tpu.memory_space<vmem>>, %arg4: memref<32x32xf32, #tpu.memory_space<vmem>>, %arg5: memref<1x32xf32, #tpu.memory_space<vmem>>, %arg6: memref<32x64xf32, #tpu.memory_space<vmem>>, %arg7: memref<1x64xf32, #tpu.memory_space<vmem>>, %arg8: memref<64x32xf32, #tpu.memory_space<vmem>>, %arg9: memref<1x32xf32, #tpu.memory_space<vmem>>, %arg10: memref<1x32xf32, #tpu.memory_space<vmem>>, %arg11: memref<1x32xf32, #tpu.memory_space<vmem>>, %arg12: memref<1x32xf32, #tpu.memory_space<vmem>>, %arg13: memref<1x32xf32, #tpu.memory_space<vmem>>, %arg14: memref<32x96xf32, #tpu.memory_space<vmem>>, %arg15: memref<1x96xf32, #tpu.memory_space<vmem>>, %arg16: memref<32x32xf32, #tpu.memory_space<vmem>>, %arg17: memref<1x32xf32, #tpu.memory_space<vmem>>, %arg18: memref<32x64xf32, #tpu.memory_space<vmem>>, %arg19: memref<1x64xf32, #tpu.memory_space<vmem>>, %arg20: memref<64x32xf32, #tpu.memory_space<vmem>>, %arg21: memref<1x32xf32, #tpu.memory_space<vmem>>, %arg22: memref<1x32xf32, #tpu.memory_space<vmem>>, %arg23: memref<1x32xf32, #tpu.memory_space<vmem>>, %arg24: memref<1x32xf32, #tpu.memory_space<vmem>>, %arg25: memref<1x32xf32, #tpu.memory_space<vmem>>, %arg26: memref<16x32xf32, #tpu.memory_space<vmem>>) attributes {dimension_semantics = [], scalar_prefetch = 0 : i64, scratch_operands = 0 : i64, tpu.core_type = #tpu.core_type<tc>} {
    %c0 = arith.constant 0 : index
    %c0_0 = arith.constant 0 : index
    %0 = vector.load %arg0[%c0, %c0_0] : memref<16x32xf32, #tpu.memory_space<vmem>>, vector<16x32xf32>
    %c0_1 = arith.constant 0 : index
    %c0_2 = arith.constant 0 : index
    %1 = vector.load %arg1[%c0_1, %c0_2] : memref<16x16xf32, #tpu.memory_space<vmem>>, vector<16x16xf32>
    %c0_3 = arith.constant 0 : index
    %c0_4 = arith.constant 0 : index
    %2 = vector.load %arg2[%c0_3, %c0_4] : memref<32x96xf32, #tpu.memory_space<vmem>>, vector<32x96xf32>
    %c0_5 = arith.constant 0 : index
    %c0_6 = arith.constant 0 : index
    %3 = vector.load %arg3[%c0_5, %c0_6] : memref<1x96xf32, #tpu.memory_space<vmem>>, vector<1x96xf32>
    %c0_7 = arith.constant 0 : index
    %c0_8 = arith.constant 0 : index
    %4 = vector.load %arg4[%c0_7, %c0_8] : memref<32x32xf32, #tpu.memory_space<vmem>>, vector<32x32xf32>
    %c0_9 = arith.constant 0 : index
    %c0_10 = arith.constant 0 : index
    %5 = vector.load %arg5[%c0_9, %c0_10] : memref<1x32xf32, #tpu.memory_space<vmem>>, vector<1x32xf32>
    %c0_11 = arith.constant 0 : index
    %c0_12 = arith.constant 0 : index
    %6 = vector.load %arg6[%c0_11, %c0_12] : memref<32x64xf32, #tpu.memory_space<vmem>>, vector<32x64xf32>
    %c0_13 = arith.constant 0 : index
    %c0_14 = arith.constant 0 : index
    %7 = vector.load %arg7[%c0_13, %c0_14] : memref<1x64xf32, #tpu.memory_space<vmem>>, vector<1x64xf32>
    %c0_15 = arith.constant 0 : index
    %c0_16 = arith.constant 0 : index
    %8 = vector.load %arg8[%c0_15, %c0_16] : memref<64x32xf32, #tpu.memory_space<vmem>>, vector<64x32xf32>
    %c0_17 = arith.constant 0 : index
    %c0_18 = arith.constant 0 : index
    %9 = vector.load %arg9[%c0_17, %c0_18] : memref<1x32xf32, #tpu.memory_space<vmem>>, vector<1x32xf32>
    %c0_19 = arith.constant 0 : index
    %c0_20 = arith.constant 0 : index
    %10 = vector.load %arg10[%c0_19, %c0_20] : memref<1x32xf32, #tpu.memory_space<vmem>>, vector<1x32xf32>
    %c0_21 = arith.constant 0 : index
    %c0_22 = arith.constant 0 : index
    %11 = vector.load %arg11[%c0_21, %c0_22] : memref<1x32xf32, #tpu.memory_space<vmem>>, vector<1x32xf32>
    %c0_23 = arith.constant 0 : index
    %c0_24 = arith.constant 0 : index
    %12 = vector.load %arg12[%c0_23, %c0_24] : memref<1x32xf32, #tpu.memory_space<vmem>>, vector<1x32xf32>
    %c0_25 = arith.constant 0 : index
    %c0_26 = arith.constant 0 : index
    %13 = vector.load %arg13[%c0_25, %c0_26] : memref<1x32xf32, #tpu.memory_space<vmem>>, vector<1x32xf32>
    %cst = arith.constant dense<0.000000e+00> : vector<16x96xf32>
    %14 = tpu.matmul %0, %2, %cst {dimension_numbers = #tpu.dot_dimension_numbers<[1], [0], [0], [1], [0, 0, 1, 1], [], []>} : vector<16x32xf32>, vector<32x96xf32>, vector<16x96xf32> -> vector<16x96xf32>
    %15 = vector.broadcast %3 : vector<1x96xf32> to vector<16x96xf32>
    %16 = arith.addf %14, %15 : vector<16x96xf32>
    %17 = vector.extract_strided_slice %16 {offsets = [0, 0], sizes = [16, 8], strides = [1, 1]} : vector<16x96xf32> to vector<16x8xf32>
    %18 = vector.extract_strided_slice %16 {offsets = [0, 32], sizes = [16, 8], strides = [1, 1]} : vector<16x96xf32> to vector<16x8xf32>
    %19 = vector.extract_strided_slice %16 {offsets = [0, 64], sizes = [16, 8], strides = [1, 1]} : vector<16x96xf32> to vector<16x8xf32>
    %cst_27 = arith.constant dense<0.000000e+00> : vector<16x16xf32>
    %20 = tpu.matmul %17, %18, %cst_27 {dimension_numbers = #tpu.dot_dimension_numbers<[1], [1], [0], [0], [0, 0, 1, 0], [], []>} : vector<16x8xf32>, vector<16x8xf32>, vector<16x16xf32> -> vector<16x16xf32>
    %cst_28 = arith.constant 0.353553385 : f32
    %21 = vector.broadcast %cst_28 : f32 to vector<16x16xf32>
    %22 = arith.mulf %20, %21 : vector<16x16xf32>
    %23 = arith.addf %22, %1 : vector<16x16xf32>
    %cst_29 = arith.constant dense<0xFF800000> : vector<16xf32>
    %24 = vector.multi_reduction <maximumf>, %23, %cst_29 [1] : vector<16x16xf32> to vector<16xf32>
    %25 = vector.shape_cast %24 : vector<16xf32> to vector<16x1xf32>
    %26 = vector.broadcast %25 : vector<16x1xf32> to vector<16x16xf32>
    %27 = arith.subf %23, %26 : vector<16x16xf32>
    %28 = math.exp %27 : vector<16x16xf32>
    %cst_30 = arith.constant dense<0.000000e+00> : vector<16xf32>
    %29 = vector.multi_reduction <add>, %28, %cst_30 [1] : vector<16x16xf32> to vector<16xf32>
    %30 = vector.shape_cast %29 : vector<16xf32> to vector<16x1xf32>
    %31 = tpu.reciprocal %30 : vector<16x1xf32> -> vector<16x1xf32>
    %32 = vector.broadcast %31 : vector<16x1xf32> to vector<16x16xf32>
    %33 = arith.mulf %28, %32 : vector<16x16xf32>
    %cst_31 = arith.constant dense<0.000000e+00> : vector<16x8xf32>
    %34 = tpu.matmul %33, %19, %cst_31 {dimension_numbers = #tpu.dot_dimension_numbers<[1], [0], [0], [1], [0, 0, 1, 1], [], []>} : vector<16x16xf32>, vector<16x8xf32>, vector<16x8xf32> -> vector<16x8xf32>
    %35 = vector.extract_strided_slice %4 {offsets = [0, 0], sizes = [8, 32], strides = [1, 1]} : vector<32x32xf32> to vector<8x32xf32>
    %cst_32 = arith.constant dense<0.000000e+00> : vector<16x32xf32>
    %36 = tpu.matmul %34, %35, %cst_32 {dimension_numbers = #tpu.dot_dimension_numbers<[1], [0], [0], [1], [0, 0, 1, 1], [], []>} : vector<16x8xf32>, vector<8x32xf32>, vector<16x32xf32> -> vector<16x32xf32>
    %37 = vector.extract_strided_slice %16 {offsets = [0, 8], sizes = [16, 8], strides = [1, 1]} : vector<16x96xf32> to vector<16x8xf32>
    %38 = vector.extract_strided_slice %16 {offsets = [0, 40], sizes = [16, 8], strides = [1, 1]} : vector<16x96xf32> to vector<16x8xf32>
    %39 = vector.extract_strided_slice %16 {offsets = [0, 72], sizes = [16, 8], strides = [1, 1]} : vector<16x96xf32> to vector<16x8xf32>
    %cst_33 = arith.constant dense<0.000000e+00> : vector<16x16xf32>
    %40 = tpu.matmul %37, %38, %cst_33 {dimension_numbers = #tpu.dot_dimension_numbers<[1], [1], [0], [0], [0, 0, 1, 0], [], []>} : vector<16x8xf32>, vector<16x8xf32>, vector<16x16xf32> -> vector<16x16xf32>
    %cst_34 = arith.constant 0.353553385 : f32
    %41 = vector.broadcast %cst_34 : f32 to vector<16x16xf32>
    %42 = arith.mulf %40, %41 : vector<16x16xf32>
    %43 = arith.addf %42, %1 : vector<16x16xf32>
    %cst_35 = arith.constant dense<0xFF800000> : vector<16xf32>
    %44 = vector.multi_reduction <maximumf>, %43, %cst_35 [1] : vector<16x16xf32> to vector<16xf32>
    %45 = vector.shape_cast %44 : vector<16xf32> to vector<16x1xf32>
    %46 = vector.broadcast %45 : vector<16x1xf32> to vector<16x16xf32>
    %47 = arith.subf %43, %46 : vector<16x16xf32>
    %48 = math.exp %47 : vector<16x16xf32>
    %cst_36 = arith.constant dense<0.000000e+00> : vector<16xf32>
    %49 = vector.multi_reduction <add>, %48, %cst_36 [1] : vector<16x16xf32> to vector<16xf32>
    %50 = vector.shape_cast %49 : vector<16xf32> to vector<16x1xf32>
    %51 = tpu.reciprocal %50 : vector<16x1xf32> -> vector<16x1xf32>
    %52 = vector.broadcast %51 : vector<16x1xf32> to vector<16x16xf32>
    %53 = arith.mulf %48, %52 : vector<16x16xf32>
    %cst_37 = arith.constant dense<0.000000e+00> : vector<16x8xf32>
    %54 = tpu.matmul %53, %39, %cst_37 {dimension_numbers = #tpu.dot_dimension_numbers<[1], [0], [0], [1], [0, 0, 1, 1], [], []>} : vector<16x16xf32>, vector<16x8xf32>, vector<16x8xf32> -> vector<16x8xf32>
    %55 = vector.extract_strided_slice %4 {offsets = [8, 0], sizes = [8, 32], strides = [1, 1]} : vector<32x32xf32> to vector<8x32xf32>
    %cst_38 = arith.constant dense<0.000000e+00> : vector<16x32xf32>
    %56 = tpu.matmul %54, %55, %cst_38 {dimension_numbers = #tpu.dot_dimension_numbers<[1], [0], [0], [1], [0, 0, 1, 1], [], []>} : vector<16x8xf32>, vector<8x32xf32>, vector<16x32xf32> -> vector<16x32xf32>
    %57 = arith.addf %36, %56 : vector<16x32xf32>
    %58 = vector.extract_strided_slice %16 {offsets = [0, 16], sizes = [16, 8], strides = [1, 1]} : vector<16x96xf32> to vector<16x8xf32>
    %59 = vector.extract_strided_slice %16 {offsets = [0, 48], sizes = [16, 8], strides = [1, 1]} : vector<16x96xf32> to vector<16x8xf32>
    %60 = vector.extract_strided_slice %16 {offsets = [0, 80], sizes = [16, 8], strides = [1, 1]} : vector<16x96xf32> to vector<16x8xf32>
    %cst_39 = arith.constant dense<0.000000e+00> : vector<16x16xf32>
    %61 = tpu.matmul %58, %59, %cst_39 {dimension_numbers = #tpu.dot_dimension_numbers<[1], [1], [0], [0], [0, 0, 1, 0], [], []>} : vector<16x8xf32>, vector<16x8xf32>, vector<16x16xf32> -> vector<16x16xf32>
    %cst_40 = arith.constant 0.353553385 : f32
    %62 = vector.broadcast %cst_40 : f32 to vector<16x16xf32>
    %63 = arith.mulf %61, %62 : vector<16x16xf32>
    %64 = arith.addf %63, %1 : vector<16x16xf32>
    %cst_41 = arith.constant dense<0xFF800000> : vector<16xf32>
    %65 = vector.multi_reduction <maximumf>, %64, %cst_41 [1] : vector<16x16xf32> to vector<16xf32>
    %66 = vector.shape_cast %65 : vector<16xf32> to vector<16x1xf32>
    %67 = vector.broadcast %66 : vector<16x1xf32> to vector<16x16xf32>
    %68 = arith.subf %64, %67 : vector<16x16xf32>
    %69 = math.exp %68 : vector<16x16xf32>
    %cst_42 = arith.constant dense<0.000000e+00> : vector<16xf32>
    %70 = vector.multi_reduction <add>, %69, %cst_42 [1] : vector<16x16xf32> to vector<16xf32>
    %71 = vector.shape_cast %70 : vector<16xf32> to vector<16x1xf32>
    %72 = tpu.reciprocal %71 : vector<16x1xf32> -> vector<16x1xf32>
    %73 = vector.broadcast %72 : vector<16x1xf32> to vector<16x16xf32>
    %74 = arith.mulf %69, %73 : vector<16x16xf32>
    %cst_43 = arith.constant dense<0.000000e+00> : vector<16x8xf32>
    %75 = tpu.matmul %74, %60, %cst_43 {dimension_numbers = #tpu.dot_dimension_numbers<[1], [0], [0], [1], [0, 0, 1, 1], [], []>} : vector<16x16xf32>, vector<16x8xf32>, vector<16x8xf32> -> vector<16x8xf32>
    %76 = vector.extract_strided_slice %4 {offsets = [16, 0], sizes = [8, 32], strides = [1, 1]} : vector<32x32xf32> to vector<8x32xf32>
    %cst_44 = arith.constant dense<0.000000e+00> : vector<16x32xf32>
    %77 = tpu.matmul %75, %76, %cst_44 {dimension_numbers = #tpu.dot_dimension_numbers<[1], [0], [0], [1], [0, 0, 1, 1], [], []>} : vector<16x8xf32>, vector<8x32xf32>, vector<16x32xf32> -> vector<16x32xf32>
    %78 = arith.addf %57, %77 : vector<16x32xf32>
    %79 = vector.extract_strided_slice %16 {offsets = [0, 24], sizes = [16, 8], strides = [1, 1]} : vector<16x96xf32> to vector<16x8xf32>
    %80 = vector.extract_strided_slice %16 {offsets = [0, 56], sizes = [16, 8], strides = [1, 1]} : vector<16x96xf32> to vector<16x8xf32>
    %81 = vector.extract_strided_slice %16 {offsets = [0, 88], sizes = [16, 8], strides = [1, 1]} : vector<16x96xf32> to vector<16x8xf32>
    %cst_45 = arith.constant dense<0.000000e+00> : vector<16x16xf32>
    %82 = tpu.matmul %79, %80, %cst_45 {dimension_numbers = #tpu.dot_dimension_numbers<[1], [1], [0], [0], [0, 0, 1, 0], [], []>} : vector<16x8xf32>, vector<16x8xf32>, vector<16x16xf32> -> vector<16x16xf32>
    %cst_46 = arith.constant 0.353553385 : f32
    %83 = vector.broadcast %cst_46 : f32 to vector<16x16xf32>
    %84 = arith.mulf %82, %83 : vector<16x16xf32>
    %85 = arith.addf %84, %1 : vector<16x16xf32>
    %cst_47 = arith.constant dense<0xFF800000> : vector<16xf32>
    %86 = vector.multi_reduction <maximumf>, %85, %cst_47 [1] : vector<16x16xf32> to vector<16xf32>
    %87 = vector.shape_cast %86 : vector<16xf32> to vector<16x1xf32>
    %88 = vector.broadcast %87 : vector<16x1xf32> to vector<16x16xf32>
    %89 = arith.subf %85, %88 : vector<16x16xf32>
    %90 = math.exp %89 : vector<16x16xf32>
    %cst_48 = arith.constant dense<0.000000e+00> : vector<16xf32>
    %91 = vector.multi_reduction <add>, %90, %cst_48 [1] : vector<16x16xf32> to vector<16xf32>
    %92 = vector.shape_cast %91 : vector<16xf32> to vector<16x1xf32>
    %93 = tpu.reciprocal %92 : vector<16x1xf32> -> vector<16x1xf32>
    %94 = vector.broadcast %93 : vector<16x1xf32> to vector<16x16xf32>
    %95 = arith.mulf %90, %94 : vector<16x16xf32>
    %cst_49 = arith.constant dense<0.000000e+00> : vector<16x8xf32>
    %96 = tpu.matmul %95, %81, %cst_49 {dimension_numbers = #tpu.dot_dimension_numbers<[1], [0], [0], [1], [0, 0, 1, 1], [], []>} : vector<16x16xf32>, vector<16x8xf32>, vector<16x8xf32> -> vector<16x8xf32>
    %97 = vector.extract_strided_slice %4 {offsets = [24, 0], sizes = [8, 32], strides = [1, 1]} : vector<32x32xf32> to vector<8x32xf32>
    %cst_50 = arith.constant dense<0.000000e+00> : vector<16x32xf32>
    %98 = tpu.matmul %96, %97, %cst_50 {dimension_numbers = #tpu.dot_dimension_numbers<[1], [0], [0], [1], [0, 0, 1, 1], [], []>} : vector<16x8xf32>, vector<8x32xf32>, vector<16x32xf32> -> vector<16x32xf32>
    %99 = arith.addf %78, %98 : vector<16x32xf32>
    %100 = vector.broadcast %5 : vector<1x32xf32> to vector<16x32xf32>
    %101 = arith.addf %99, %100 : vector<16x32xf32>
    %102 = arith.addf %0, %101 : vector<16x32xf32>
    %cst_51 = arith.constant dense<0.000000e+00> : vector<16xf32>
    %103 = vector.multi_reduction <add>, %102, %cst_51 [1] : vector<16x32xf32> to vector<16xf32>
    %104 = vector.shape_cast %103 : vector<16xf32> to vector<16x1xf32>
    %cst_52 = arith.constant 3.200000e+01 : f32
    %105 = vector.broadcast %cst_52 : f32 to vector<16x1xf32>
    %106 = arith.divf %104, %105 : vector<16x1xf32>
    %107 = vector.broadcast %106 : vector<16x1xf32> to vector<16x32xf32>
    %108 = arith.subf %102, %107 : vector<16x32xf32>
    %109 = arith.mulf %108, %108 : vector<16x32xf32>
    %cst_53 = arith.constant dense<0.000000e+00> : vector<16xf32>
    %110 = vector.multi_reduction <add>, %109, %cst_53 [1] : vector<16x32xf32> to vector<16xf32>
    %111 = vector.shape_cast %110 : vector<16xf32> to vector<16x1xf32>
    %cst_54 = arith.constant 3.200000e+01 : f32
    %112 = vector.broadcast %cst_54 : f32 to vector<16x1xf32>
    %113 = arith.divf %111, %112 : vector<16x1xf32>
    %114 = vector.broadcast %106 : vector<16x1xf32> to vector<16x32xf32>
    %115 = arith.subf %102, %114 : vector<16x32xf32>
    %cst_55 = arith.constant 9.99999974E-6 : f32
    %116 = vector.broadcast %cst_55 : f32 to vector<16x1xf32>
    %117 = arith.addf %113, %116 : vector<16x1xf32>
    %118 = math.rsqrt %117 : vector<16x1xf32>
    %119 = vector.broadcast %118 : vector<16x1xf32> to vector<16x32xf32>
    %120 = arith.mulf %115, %119 : vector<16x32xf32>
    %121 = vector.broadcast %10 : vector<1x32xf32> to vector<16x32xf32>
    %122 = arith.mulf %120, %121 : vector<16x32xf32>
    %123 = vector.broadcast %11 : vector<1x32xf32> to vector<16x32xf32>
    %124 = arith.addf %122, %123 : vector<16x32xf32>
    %cst_56 = arith.constant dense<0.000000e+00> : vector<16x64xf32>
    %125 = tpu.matmul %124, %6, %cst_56 {dimension_numbers = #tpu.dot_dimension_numbers<[1], [0], [0], [1], [0, 0, 1, 1], [], []>} : vector<16x32xf32>, vector<32x64xf32>, vector<16x64xf32> -> vector<16x64xf32>
    %126 = vector.broadcast %7 : vector<1x64xf32> to vector<16x64xf32>
    %127 = arith.addf %125, %126 : vector<16x64xf32>
    %cst_57 = arith.constant 0.000000e+00 : f32
    %128 = vector.broadcast %cst_57 : f32 to vector<16x64xf32>
    %129 = arith.maximumf %127, %128 : vector<16x64xf32>
    %cst_58 = arith.constant dense<0.000000e+00> : vector<16x32xf32>
    %130 = tpu.matmul %129, %8, %cst_58 {dimension_numbers = #tpu.dot_dimension_numbers<[1], [0], [0], [1], [0, 0, 1, 1], [], []>} : vector<16x64xf32>, vector<64x32xf32>, vector<16x32xf32> -> vector<16x32xf32>
    %131 = vector.broadcast %9 : vector<1x32xf32> to vector<16x32xf32>
    %132 = arith.addf %130, %131 : vector<16x32xf32>
    %133 = arith.addf %124, %132 : vector<16x32xf32>
    %cst_59 = arith.constant dense<0.000000e+00> : vector<16xf32>
    %134 = vector.multi_reduction <add>, %133, %cst_59 [1] : vector<16x32xf32> to vector<16xf32>
    %135 = vector.shape_cast %134 : vector<16xf32> to vector<16x1xf32>
    %cst_60 = arith.constant 3.200000e+01 : f32
    %136 = vector.broadcast %cst_60 : f32 to vector<16x1xf32>
    %137 = arith.divf %135, %136 : vector<16x1xf32>
    %138 = vector.broadcast %137 : vector<16x1xf32> to vector<16x32xf32>
    %139 = arith.subf %133, %138 : vector<16x32xf32>
    %140 = arith.mulf %139, %139 : vector<16x32xf32>
    %cst_61 = arith.constant dense<0.000000e+00> : vector<16xf32>
    %141 = vector.multi_reduction <add>, %140, %cst_61 [1] : vector<16x32xf32> to vector<16xf32>
    %142 = vector.shape_cast %141 : vector<16xf32> to vector<16x1xf32>
    %cst_62 = arith.constant 3.200000e+01 : f32
    %143 = vector.broadcast %cst_62 : f32 to vector<16x1xf32>
    %144 = arith.divf %142, %143 : vector<16x1xf32>
    %145 = vector.broadcast %137 : vector<16x1xf32> to vector<16x32xf32>
    %146 = arith.subf %133, %145 : vector<16x32xf32>
    %cst_63 = arith.constant 9.99999974E-6 : f32
    %147 = vector.broadcast %cst_63 : f32 to vector<16x1xf32>
    %148 = arith.addf %144, %147 : vector<16x1xf32>
    %149 = math.rsqrt %148 : vector<16x1xf32>
    %150 = vector.broadcast %149 : vector<16x1xf32> to vector<16x32xf32>
    %151 = arith.mulf %146, %150 : vector<16x32xf32>
    %152 = vector.broadcast %12 : vector<1x32xf32> to vector<16x32xf32>
    %153 = arith.mulf %151, %152 : vector<16x32xf32>
    %154 = vector.broadcast %13 : vector<1x32xf32> to vector<16x32xf32>
    %155 = arith.addf %153, %154 : vector<16x32xf32>
    %c0_64 = arith.constant 0 : index
    %c0_65 = arith.constant 0 : index
    %156 = vector.load %arg14[%c0_64, %c0_65] : memref<32x96xf32, #tpu.memory_space<vmem>>, vector<32x96xf32>
    %c0_66 = arith.constant 0 : index
    %c0_67 = arith.constant 0 : index
    %157 = vector.load %arg15[%c0_66, %c0_67] : memref<1x96xf32, #tpu.memory_space<vmem>>, vector<1x96xf32>
    %c0_68 = arith.constant 0 : index
    %c0_69 = arith.constant 0 : index
    %158 = vector.load %arg16[%c0_68, %c0_69] : memref<32x32xf32, #tpu.memory_space<vmem>>, vector<32x32xf32>
    %c0_70 = arith.constant 0 : index
    %c0_71 = arith.constant 0 : index
    %159 = vector.load %arg17[%c0_70, %c0_71] : memref<1x32xf32, #tpu.memory_space<vmem>>, vector<1x32xf32>
    %c0_72 = arith.constant 0 : index
    %c0_73 = arith.constant 0 : index
    %160 = vector.load %arg18[%c0_72, %c0_73] : memref<32x64xf32, #tpu.memory_space<vmem>>, vector<32x64xf32>
    %c0_74 = arith.constant 0 : index
    %c0_75 = arith.constant 0 : index
    %161 = vector.load %arg19[%c0_74, %c0_75] : memref<1x64xf32, #tpu.memory_space<vmem>>, vector<1x64xf32>
    %c0_76 = arith.constant 0 : index
    %c0_77 = arith.constant 0 : index
    %162 = vector.load %arg20[%c0_76, %c0_77] : memref<64x32xf32, #tpu.memory_space<vmem>>, vector<64x32xf32>
    %c0_78 = arith.constant 0 : index
    %c0_79 = arith.constant 0 : index
    %163 = vector.load %arg21[%c0_78, %c0_79] : memref<1x32xf32, #tpu.memory_space<vmem>>, vector<1x32xf32>
    %c0_80 = arith.constant 0 : index
    %c0_81 = arith.constant 0 : index
    %164 = vector.load %arg22[%c0_80, %c0_81] : memref<1x32xf32, #tpu.memory_space<vmem>>, vector<1x32xf32>
    %c0_82 = arith.constant 0 : index
    %c0_83 = arith.constant 0 : index
    %165 = vector.load %arg23[%c0_82, %c0_83] : memref<1x32xf32, #tpu.memory_space<vmem>>, vector<1x32xf32>
    %c0_84 = arith.constant 0 : index
    %c0_85 = arith.constant 0 : index
    %166 = vector.load %arg24[%c0_84, %c0_85] : memref<1x32xf32, #tpu.memory_space<vmem>>, vector<1x32xf32>
    %c0_86 = arith.constant 0 : index
    %c0_87 = arith.constant 0 : index
    %167 = vector.load %arg25[%c0_86, %c0_87] : memref<1x32xf32, #tpu.memory_space<vmem>>, vector<1x32xf32>
    %cst_88 = arith.constant dense<0.000000e+00> : vector<16x96xf32>
    %168 = tpu.matmul %155, %156, %cst_88 {dimension_numbers = #tpu.dot_dimension_numbers<[1], [0], [0], [1], [0, 0, 1, 1], [], []>} : vector<16x32xf32>, vector<32x96xf32>, vector<16x96xf32> -> vector<16x96xf32>
    %169 = vector.broadcast %157 : vector<1x96xf32> to vector<16x96xf32>
    %170 = arith.addf %168, %169 : vector<16x96xf32>
    %171 = vector.extract_strided_slice %170 {offsets = [0, 0], sizes = [16, 8], strides = [1, 1]} : vector<16x96xf32> to vector<16x8xf32>
    %172 = vector.extract_strided_slice %170 {offsets = [0, 32], sizes = [16, 8], strides = [1, 1]} : vector<16x96xf32> to vector<16x8xf32>
    %173 = vector.extract_strided_slice %170 {offsets = [0, 64], sizes = [16, 8], strides = [1, 1]} : vector<16x96xf32> to vector<16x8xf32>
    %cst_89 = arith.constant dense<0.000000e+00> : vector<16x16xf32>
    %174 = tpu.matmul %171, %172, %cst_89 {dimension_numbers = #tpu.dot_dimension_numbers<[1], [1], [0], [0], [0, 0, 1, 0], [], []>} : vector<16x8xf32>, vector<16x8xf32>, vector<16x16xf32> -> vector<16x16xf32>
    %cst_90 = arith.constant 0.353553385 : f32
    %175 = vector.broadcast %cst_90 : f32 to vector<16x16xf32>
    %176 = arith.mulf %174, %175 : vector<16x16xf32>
    %177 = arith.addf %176, %1 : vector<16x16xf32>
    %cst_91 = arith.constant dense<0xFF800000> : vector<16xf32>
    %178 = vector.multi_reduction <maximumf>, %177, %cst_91 [1] : vector<16x16xf32> to vector<16xf32>
    %179 = vector.shape_cast %178 : vector<16xf32> to vector<16x1xf32>
    %180 = vector.broadcast %179 : vector<16x1xf32> to vector<16x16xf32>
    %181 = arith.subf %177, %180 : vector<16x16xf32>
    %182 = math.exp %181 : vector<16x16xf32>
    %cst_92 = arith.constant dense<0.000000e+00> : vector<16xf32>
    %183 = vector.multi_reduction <add>, %182, %cst_92 [1] : vector<16x16xf32> to vector<16xf32>
    %184 = vector.shape_cast %183 : vector<16xf32> to vector<16x1xf32>
    %185 = tpu.reciprocal %184 : vector<16x1xf32> -> vector<16x1xf32>
    %186 = vector.broadcast %185 : vector<16x1xf32> to vector<16x16xf32>
    %187 = arith.mulf %182, %186 : vector<16x16xf32>
    %cst_93 = arith.constant dense<0.000000e+00> : vector<16x8xf32>
    %188 = tpu.matmul %187, %173, %cst_93 {dimension_numbers = #tpu.dot_dimension_numbers<[1], [0], [0], [1], [0, 0, 1, 1], [], []>} : vector<16x16xf32>, vector<16x8xf32>, vector<16x8xf32> -> vector<16x8xf32>
    %189 = vector.extract_strided_slice %158 {offsets = [0, 0], sizes = [8, 32], strides = [1, 1]} : vector<32x32xf32> to vector<8x32xf32>
    %cst_94 = arith.constant dense<0.000000e+00> : vector<16x32xf32>
    %190 = tpu.matmul %188, %189, %cst_94 {dimension_numbers = #tpu.dot_dimension_numbers<[1], [0], [0], [1], [0, 0, 1, 1], [], []>} : vector<16x8xf32>, vector<8x32xf32>, vector<16x32xf32> -> vector<16x32xf32>
    %191 = vector.extract_strided_slice %170 {offsets = [0, 8], sizes = [16, 8], strides = [1, 1]} : vector<16x96xf32> to vector<16x8xf32>
    %192 = vector.extract_strided_slice %170 {offsets = [0, 40], sizes = [16, 8], strides = [1, 1]} : vector<16x96xf32> to vector<16x8xf32>
    %193 = vector.extract_strided_slice %170 {offsets = [0, 72], sizes = [16, 8], strides = [1, 1]} : vector<16x96xf32> to vector<16x8xf32>
    %cst_95 = arith.constant dense<0.000000e+00> : vector<16x16xf32>
    %194 = tpu.matmul %191, %192, %cst_95 {dimension_numbers = #tpu.dot_dimension_numbers<[1], [1], [0], [0], [0, 0, 1, 0], [], []>} : vector<16x8xf32>, vector<16x8xf32>, vector<16x16xf32> -> vector<16x16xf32>
    %cst_96 = arith.constant 0.353553385 : f32
    %195 = vector.broadcast %cst_96 : f32 to vector<16x16xf32>
    %196 = arith.mulf %194, %195 : vector<16x16xf32>
    %197 = arith.addf %196, %1 : vector<16x16xf32>
    %cst_97 = arith.constant dense<0xFF800000> : vector<16xf32>
    %198 = vector.multi_reduction <maximumf>, %197, %cst_97 [1] : vector<16x16xf32> to vector<16xf32>
    %199 = vector.shape_cast %198 : vector<16xf32> to vector<16x1xf32>
    %200 = vector.broadcast %199 : vector<16x1xf32> to vector<16x16xf32>
    %201 = arith.subf %197, %200 : vector<16x16xf32>
    %202 = math.exp %201 : vector<16x16xf32>
    %cst_98 = arith.constant dense<0.000000e+00> : vector<16xf32>
    %203 = vector.multi_reduction <add>, %202, %cst_98 [1] : vector<16x16xf32> to vector<16xf32>
    %204 = vector.shape_cast %203 : vector<16xf32> to vector<16x1xf32>
    %205 = tpu.reciprocal %204 : vector<16x1xf32> -> vector<16x1xf32>
    %206 = vector.broadcast %205 : vector<16x1xf32> to vector<16x16xf32>
    %207 = arith.mulf %202, %206 : vector<16x16xf32>
    %cst_99 = arith.constant dense<0.000000e+00> : vector<16x8xf32>
    %208 = tpu.matmul %207, %193, %cst_99 {dimension_numbers = #tpu.dot_dimension_numbers<[1], [0], [0], [1], [0, 0, 1, 1], [], []>} : vector<16x16xf32>, vector<16x8xf32>, vector<16x8xf32> -> vector<16x8xf32>
    %209 = vector.extract_strided_slice %158 {offsets = [8, 0], sizes = [8, 32], strides = [1, 1]} : vector<32x32xf32> to vector<8x32xf32>
    %cst_100 = arith.constant dense<0.000000e+00> : vector<16x32xf32>
    %210 = tpu.matmul %208, %209, %cst_100 {dimension_numbers = #tpu.dot_dimension_numbers<[1], [0], [0], [1], [0, 0, 1, 1], [], []>} : vector<16x8xf32>, vector<8x32xf32>, vector<16x32xf32> -> vector<16x32xf32>
    %211 = arith.addf %190, %210 : vector<16x32xf32>
    %212 = vector.extract_strided_slice %170 {offsets = [0, 16], sizes = [16, 8], strides = [1, 1]} : vector<16x96xf32> to vector<16x8xf32>
    %213 = vector.extract_strided_slice %170 {offsets = [0, 48], sizes = [16, 8], strides = [1, 1]} : vector<16x96xf32> to vector<16x8xf32>
    %214 = vector.extract_strided_slice %170 {offsets = [0, 80], sizes = [16, 8], strides = [1, 1]} : vector<16x96xf32> to vector<16x8xf32>
    %cst_101 = arith.constant dense<0.000000e+00> : vector<16x16xf32>
    %215 = tpu.matmul %212, %213, %cst_101 {dimension_numbers = #tpu.dot_dimension_numbers<[1], [1], [0], [0], [0, 0, 1, 0], [], []>} : vector<16x8xf32>, vector<16x8xf32>, vector<16x16xf32> -> vector<16x16xf32>
    %cst_102 = arith.constant 0.353553385 : f32
    %216 = vector.broadcast %cst_102 : f32 to vector<16x16xf32>
    %217 = arith.mulf %215, %216 : vector<16x16xf32>
    %218 = arith.addf %217, %1 : vector<16x16xf32>
    %cst_103 = arith.constant dense<0xFF800000> : vector<16xf32>
    %219 = vector.multi_reduction <maximumf>, %218, %cst_103 [1] : vector<16x16xf32> to vector<16xf32>
    %220 = vector.shape_cast %219 : vector<16xf32> to vector<16x1xf32>
    %221 = vector.broadcast %220 : vector<16x1xf32> to vector<16x16xf32>
    %222 = arith.subf %218, %221 : vector<16x16xf32>
    %223 = math.exp %222 : vector<16x16xf32>
    %cst_104 = arith.constant dense<0.000000e+00> : vector<16xf32>
    %224 = vector.multi_reduction <add>, %223, %cst_104 [1] : vector<16x16xf32> to vector<16xf32>
    %225 = vector.shape_cast %224 : vector<16xf32> to vector<16x1xf32>
    %226 = tpu.reciprocal %225 : vector<16x1xf32> -> vector<16x1xf32>
    %227 = vector.broadcast %226 : vector<16x1xf32> to vector<16x16xf32>
    %228 = arith.mulf %223, %227 : vector<16x16xf32>
    %cst_105 = arith.constant dense<0.000000e+00> : vector<16x8xf32>
    %229 = tpu.matmul %228, %214, %cst_105 {dimension_numbers = #tpu.dot_dimension_numbers<[1], [0], [0], [1], [0, 0, 1, 1], [], []>} : vector<16x16xf32>, vector<16x8xf32>, vector<16x8xf32> -> vector<16x8xf32>
    %230 = vector.extract_strided_slice %158 {offsets = [16, 0], sizes = [8, 32], strides = [1, 1]} : vector<32x32xf32> to vector<8x32xf32>
    %cst_106 = arith.constant dense<0.000000e+00> : vector<16x32xf32>
    %231 = tpu.matmul %229, %230, %cst_106 {dimension_numbers = #tpu.dot_dimension_numbers<[1], [0], [0], [1], [0, 0, 1, 1], [], []>} : vector<16x8xf32>, vector<8x32xf32>, vector<16x32xf32> -> vector<16x32xf32>
    %232 = arith.addf %211, %231 : vector<16x32xf32>
    %233 = vector.extract_strided_slice %170 {offsets = [0, 24], sizes = [16, 8], strides = [1, 1]} : vector<16x96xf32> to vector<16x8xf32>
    %234 = vector.extract_strided_slice %170 {offsets = [0, 56], sizes = [16, 8], strides = [1, 1]} : vector<16x96xf32> to vector<16x8xf32>
    %235 = vector.extract_strided_slice %170 {offsets = [0, 88], sizes = [16, 8], strides = [1, 1]} : vector<16x96xf32> to vector<16x8xf32>
    %cst_107 = arith.constant dense<0.000000e+00> : vector<16x16xf32>
    %236 = tpu.matmul %233, %234, %cst_107 {dimension_numbers = #tpu.dot_dimension_numbers<[1], [1], [0], [0], [0, 0, 1, 0], [], []>} : vector<16x8xf32>, vector<16x8xf32>, vector<16x16xf32> -> vector<16x16xf32>
    %cst_108 = arith.constant 0.353553385 : f32
    %237 = vector.broadcast %cst_108 : f32 to vector<16x16xf32>
    %238 = arith.mulf %236, %237 : vector<16x16xf32>
    %239 = arith.addf %238, %1 : vector<16x16xf32>
    %cst_109 = arith.constant dense<0xFF800000> : vector<16xf32>
    %240 = vector.multi_reduction <maximumf>, %239, %cst_109 [1] : vector<16x16xf32> to vector<16xf32>
    %241 = vector.shape_cast %240 : vector<16xf32> to vector<16x1xf32>
    %242 = vector.broadcast %241 : vector<16x1xf32> to vector<16x16xf32>
    %243 = arith.subf %239, %242 : vector<16x16xf32>
    %244 = math.exp %243 : vector<16x16xf32>
    %cst_110 = arith.constant dense<0.000000e+00> : vector<16xf32>
    %245 = vector.multi_reduction <add>, %244, %cst_110 [1] : vector<16x16xf32> to vector<16xf32>
    %246 = vector.shape_cast %245 : vector<16xf32> to vector<16x1xf32>
    %247 = tpu.reciprocal %246 : vector<16x1xf32> -> vector<16x1xf32>
    %248 = vector.broadcast %247 : vector<16x1xf32> to vector<16x16xf32>
    %249 = arith.mulf %244, %248 : vector<16x16xf32>
    %cst_111 = arith.constant dense<0.000000e+00> : vector<16x8xf32>
    %250 = tpu.matmul %249, %235, %cst_111 {dimension_numbers = #tpu.dot_dimension_numbers<[1], [0], [0], [1], [0, 0, 1, 1], [], []>} : vector<16x16xf32>, vector<16x8xf32>, vector<16x8xf32> -> vector<16x8xf32>
    %251 = vector.extract_strided_slice %158 {offsets = [24, 0], sizes = [8, 32], strides = [1, 1]} : vector<32x32xf32> to vector<8x32xf32>
    %cst_112 = arith.constant dense<0.000000e+00> : vector<16x32xf32>
    %252 = tpu.matmul %250, %251, %cst_112 {dimension_numbers = #tpu.dot_dimension_numbers<[1], [0], [0], [1], [0, 0, 1, 1], [], []>} : vector<16x8xf32>, vector<8x32xf32>, vector<16x32xf32> -> vector<16x32xf32>
    %253 = arith.addf %232, %252 : vector<16x32xf32>
    %254 = vector.broadcast %159 : vector<1x32xf32> to vector<16x32xf32>
    %255 = arith.addf %253, %254 : vector<16x32xf32>
    %256 = arith.addf %155, %255 : vector<16x32xf32>
    %cst_113 = arith.constant dense<0.000000e+00> : vector<16xf32>
    %257 = vector.multi_reduction <add>, %256, %cst_113 [1] : vector<16x32xf32> to vector<16xf32>
    %258 = vector.shape_cast %257 : vector<16xf32> to vector<16x1xf32>
    %cst_114 = arith.constant 3.200000e+01 : f32
    %259 = vector.broadcast %cst_114 : f32 to vector<16x1xf32>
    %260 = arith.divf %258, %259 : vector<16x1xf32>
    %261 = vector.broadcast %260 : vector<16x1xf32> to vector<16x32xf32>
    %262 = arith.subf %256, %261 : vector<16x32xf32>
    %263 = arith.mulf %262, %262 : vector<16x32xf32>
    %cst_115 = arith.constant dense<0.000000e+00> : vector<16xf32>
    %264 = vector.multi_reduction <add>, %263, %cst_115 [1] : vector<16x32xf32> to vector<16xf32>
    %265 = vector.shape_cast %264 : vector<16xf32> to vector<16x1xf32>
    %cst_116 = arith.constant 3.200000e+01 : f32
    %266 = vector.broadcast %cst_116 : f32 to vector<16x1xf32>
    %267 = arith.divf %265, %266 : vector<16x1xf32>
    %268 = vector.broadcast %260 : vector<16x1xf32> to vector<16x32xf32>
    %269 = arith.subf %256, %268 : vector<16x32xf32>
    %cst_117 = arith.constant 9.99999974E-6 : f32
    %270 = vector.broadcast %cst_117 : f32 to vector<16x1xf32>
    %271 = arith.addf %267, %270 : vector<16x1xf32>
    %272 = math.rsqrt %271 : vector<16x1xf32>
    %273 = vector.broadcast %272 : vector<16x1xf32> to vector<16x32xf32>
    %274 = arith.mulf %269, %273 : vector<16x32xf32>
    %275 = vector.broadcast %164 : vector<1x32xf32> to vector<16x32xf32>
    %276 = arith.mulf %274, %275 : vector<16x32xf32>
    %277 = vector.broadcast %165 : vector<1x32xf32> to vector<16x32xf32>
    %278 = arith.addf %276, %277 : vector<16x32xf32>
    %cst_118 = arith.constant dense<0.000000e+00> : vector<16x64xf32>
    %279 = tpu.matmul %278, %160, %cst_118 {dimension_numbers = #tpu.dot_dimension_numbers<[1], [0], [0], [1], [0, 0, 1, 1], [], []>} : vector<16x32xf32>, vector<32x64xf32>, vector<16x64xf32> -> vector<16x64xf32>
    %280 = vector.broadcast %161 : vector<1x64xf32> to vector<16x64xf32>
    %281 = arith.addf %279, %280 : vector<16x64xf32>
    %cst_119 = arith.constant 0.000000e+00 : f32
    %282 = vector.broadcast %cst_119 : f32 to vector<16x64xf32>
    %283 = arith.maximumf %281, %282 : vector<16x64xf32>
    %cst_120 = arith.constant dense<0.000000e+00> : vector<16x32xf32>
    %284 = tpu.matmul %283, %162, %cst_120 {dimension_numbers = #tpu.dot_dimension_numbers<[1], [0], [0], [1], [0, 0, 1, 1], [], []>} : vector<16x64xf32>, vector<64x32xf32>, vector<16x32xf32> -> vector<16x32xf32>
    %285 = vector.broadcast %163 : vector<1x32xf32> to vector<16x32xf32>
    %286 = arith.addf %284, %285 : vector<16x32xf32>
    %287 = arith.addf %278, %286 : vector<16x32xf32>
    %cst_121 = arith.constant dense<0.000000e+00> : vector<16xf32>
    %288 = vector.multi_reduction <add>, %287, %cst_121 [1] : vector<16x32xf32> to vector<16xf32>
    %289 = vector.shape_cast %288 : vector<16xf32> to vector<16x1xf32>
    %cst_122 = arith.constant 3.200000e+01 : f32
    %290 = vector.broadcast %cst_122 : f32 to vector<16x1xf32>
    %291 = arith.divf %289, %290 : vector<16x1xf32>
    %292 = vector.broadcast %291 : vector<16x1xf32> to vector<16x32xf32>
    %293 = arith.subf %287, %292 : vector<16x32xf32>
    %294 = arith.mulf %293, %293 : vector<16x32xf32>
    %cst_123 = arith.constant dense<0.000000e+00> : vector<16xf32>
    %295 = vector.multi_reduction <add>, %294, %cst_123 [1] : vector<16x32xf32> to vector<16xf32>
    %296 = vector.shape_cast %295 : vector<16xf32> to vector<16x1xf32>
    %cst_124 = arith.constant 3.200000e+01 : f32
    %297 = vector.broadcast %cst_124 : f32 to vector<16x1xf32>
    %298 = arith.divf %296, %297 : vector<16x1xf32>
    %299 = vector.broadcast %291 : vector<16x1xf32> to vector<16x32xf32>
    %300 = arith.subf %287, %299 : vector<16x32xf32>
    %cst_125 = arith.constant 9.99999974E-6 : f32
    %301 = vector.broadcast %cst_125 : f32 to vector<16x1xf32>
    %302 = arith.addf %298, %301 : vector<16x1xf32>
    %303 = math.rsqrt %302 : vector<16x1xf32>
    %304 = vector.broadcast %303 : vector<16x1xf32> to vector<16x32xf32>
    %305 = arith.mulf %300, %304 : vector<16x32xf32>
    %306 = vector.broadcast %166 : vector<1x32xf32> to vector<16x32xf32>
    %307 = arith.mulf %305, %306 : vector<16x32xf32>
    %308 = vector.broadcast %167 : vector<1x32xf32> to vector<16x32xf32>
    %309 = arith.addf %307, %308 : vector<16x32xf32>
    %c0_126 = arith.constant 0 : index
    %c0_127 = arith.constant 0 : index
    %310 = vector.load %arg26[%c0_126, %c0_127] : memref<16x32xf32, #tpu.memory_space<vmem>>, vector<16x32xf32>
    tpu.vector_store %arg26[%c0_126, %c0_127], %309 {strides = array<i32>} : memref<16x32xf32, #tpu.memory_space<vmem>>, vector<16x32xf32>,
    return
  }
}

</mosaic_0001>

<llo_original>
// kernel: tpu_custom_call.1
$region0: #{tpu_custom_call.1}
  #allocation0 [shape = 'u32[]', space=smem, size = 0x4, offset = 0x4, fixed_abs, tag = 'smem constant byte address 0x4 - core index']
  #allocation1 [shape = 'u32[144,128]{1,0:T(1,128)}', space=vmem, size = 0x12000, scoped, tag = 'internal scratch']
  %s0 = inlined_call_operand.hbm [shape: f32[16,32], index: 0, kind: input, shape index: {}]
  %s1 = inlined_call_operand.hbm [shape: f32[16,16], index: 1, kind: input, shape index: {}]
  %s2 = inlined_call_operand.vmem [shape: f32[32,96], index: 2, kind: input, shape index: {}]
  %s3 = inlined_call_operand.vmem [shape: f32[1,96], index: 3, kind: input, shape index: {}]
  %s4 = inlined_call_operand.vmem [shape: f32[32,32], index: 4, kind: input, shape index: {}]
  %s5 = inlined_call_operand.vmem [shape: f32[1,32], index: 5, kind: input, shape index: {}]
  %s6 = inlined_call_operand.vmem [shape: f32[32,64], index: 6, kind: input, shape index: {}]
  %s7 = inlined_call_operand.hbm [shape: f32[1,64], index: 7, kind: input, shape index: {}]
  %s8 = inlined_call_operand.vmem [shape: f32[64,32], index: 8, kind: input, shape index: {}]
  %s9 = inlined_call_operand.hbm [shape: f32[1,32], index: 9, kind: input, shape index: {}]
  %s10 = inlined_call_operand.vmem [shape: f32[1,32], index: 10, kind: input, shape index: {}]
  %s11 = inlined_call_operand.vmem [shape: f32[1,32], index: 11, kind: input, shape index: {}]
  %s12 = inlined_call_operand.vmem [shape: f32[1,32], index: 12, kind: input, shape index: {}]
  %s13 = inlined_call_operand.vmem [shape: f32[1,32], index: 13, kind: input, shape index: {}]
  %s14 = inlined_call_operand.vmem [shape: f32[32,96], index: 14, kind: input, shape index: {}]
  %s15 = inlined_call_operand.vmem [shape: f32[1,96], index: 15, kind: input, shape index: {}]
  %s16 = inlined_call_operand.vmem [shape: f32[32,32], index: 16, kind: input, shape index: {}]
  %s17 = inlined_call_operand.vmem [shape: f32[1,32], index: 17, kind: input, shape index: {}]
  %s18 = inlined_call_operand.vmem [shape: f32[32,64], index: 18, kind: input, shape index: {}]
  %s19 = inlined_call_operand.vmem [shape: f32[1,64], index: 19, kind: input, shape index: {}]
  %s20 = inlined_call_operand.vmem [shape: f32[64,32], index: 20, kind: input, shape index: {}]
  %s21 = inlined_call_operand.vmem [shape: f32[1,32], index: 21, kind: input, shape index: {}]
  %s22 = inlined_call_operand.vmem [shape: f32[1,32], index: 22, kind: input, shape index: {}]
  %s23 = inlined_call_operand.vmem [shape: f32[1,32], index: 23, kind: input, shape index: {}]
  %s24 = inlined_call_operand.vmem [shape: f32[1,32], index: 24, kind: input, shape index: {}]
  %s25 = inlined_call_operand.vmem [shape: f32[1,32], index: 25, kind: input, shape index: {}]
  %s26 = inlined_call_operand.hbm [shape: f32[16,32], index: 26, kind: output, shape index: {}]
  %s27 = sld [smem:[#allocation0]]
  $region130: #{tpu_custom_call.1} parent=0
    _
  %s29 = ssub.s32 1, %s27
  %s30 = scalar_select 0, %s29, %s27
  $region1: #{tpu_custom_call.1} parent=0
    #allocation2 [shape = 'u8[8192]{0}', space=vmem, size = 0x2000, scoped, tag = 'input window, operand 0, single buffered']
    #allocation3 [shape = 's32[1]{0}', space=sflag, size = 0x4, scoped, tag = 'scoped memory for tpu_custom_call.1']
    #allocation4 [shape = 's32[1]{0}', space=sflag, size = 0x4, scoped, tag = 'scoped memory for tpu_custom_call.1']
    #allocation5 [shape = 'u8[8192]{0}', space=vmem, size = 0x2000, scoped, tag = 'input window, operand 1, single buffered']
    #allocation6 [shape = 's32[1]{0}', space=sflag, size = 0x4, scoped, tag = 'scoped memory for tpu_custom_call.1']
    #allocation7 [shape = 'u8[512]{0}', space=vmem, size = 0x400, scoped, tag = 'input window, operand 7, single buffered']
    #allocation8 [shape = 'u8[512]{0}', space=vmem, size = 0x400, scoped, tag = 'input window, operand 9, single buffered']
    #allocation9 [shape = 's32[1]{0}', space=sflag, size = 0x4, scoped, tag = 'scoped memory for tpu_custom_call.1']
    #allocation10 [shape = 'u8[8192]{0}', space=vmem, size = 0x2000, scoped, tag = 'output window, operand 0, single buffered']
    %31 = vsyncpa [#allocation3], 0
    %32 = vsyncpa [#allocation6], 0
    %33 = vsyncpa [#allocation9], 0
    %34 = vsyncpa [#allocation4], 0
    // Predicated region
    $region2: #{tpu_custom_call.1} parent=1 // pred_check
      _
    $region3: #{tpu_custom_call.1} parent=1 // pred_check_branch
      %36 = sbr.rel (0) target = $region5
    $region4: #{tpu_custom_call.1} parent=1 // pred_region
      %s38 = ssub.s32 256, 256
      %39 = vsyncadd [#allocation3], %s38
      %s40 = sshll.u32 [#allocation2], 4
      %s41 = int_to_ptr.vmem [resolvable:$true] %s40
      %46 = dma.hbm_to_vmem [thread:$0]  %s0, 256, %s41, [#allocation3], 128, 128, 8
    $region5: #{tpu_custom_call.1} parent=1 // pred_fallthru
      _
    // Predicated region
    $region6: #{tpu_custom_call.1} parent=1 // pred_check
      _
    $region7: #{tpu_custom_call.1} parent=1 // pred_check_branch
      %48 = sbr.rel (0) target = $region9
    $region8: #{tpu_custom_call.1} parent=1 // pred_region
      %s50 = ssub.s32 256, 256
      %51 = vsyncadd [#allocation6], %s50
      %s52 = sshll.u32 [#allocation5], 4
      %s53 = int_to_ptr.vmem [resolvable:$true] %s52
      %58 = dma.hbm_to_vmem [thread:$0]  %s1, 256, %s53, [#allocation6], 128, 128, 8
    $region9: #{tpu_custom_call.1} parent=1 // pred_fallthru
      _
    // Predicated region
    $region10: #{tpu_custom_call.1} parent=1 // pred_check
      _
    $region11: #{tpu_custom_call.1} parent=1 // pred_check_branch
      %60 = sbr.rel (0) target = $region13
    $region12: #{tpu_custom_call.1} parent=1 // pred_region
      _
    $region13: #{tpu_custom_call.1} parent=1 // pred_fallthru
      _
    // Predicated region
    $region14: #{tpu_custom_call.1} parent=1 // pred_check
      _
    $region15: #{tpu_custom_call.1} parent=1 // pred_check_branch
      %62 = sbr.rel (0) target = $region17
    $region16: #{tpu_custom_call.1} parent=1 // pred_region
      _
    $region17: #{tpu_custom_call.1} parent=1 // pred_fallthru
      _
    // Predicated region
    $region18: #{tpu_custom_call.1} parent=1 // pred_check
      _
    $region19: #{tpu_custom_call.1} parent=1 // pred_check_branch
      %64 = sbr.rel (0) target = $region21
    $region20: #{tpu_custom_call.1} parent=1 // pred_region
      _
    $region21: #{tpu_custom_call.1} parent=1 // pred_fallthru
      _
    // Predicated region
    $region22: #{tpu_custom_call.1} parent=1 // pred_check
      _
    $region23: #{tpu_custom_call.1} parent=1 // pred_check_branch
      %66 = sbr.rel (0) target = $region25
    $region24: #{tpu_custom_call.1} parent=1 // pred_region
      _
    $region25: #{tpu_custom_call.1} parent=1 // pred_fallthru
      _
    // Predicated region
    $region26: #{tpu_custom_call.1} parent=1 // pred_check
      _
    $region27: #{tpu_custom_call.1} parent=1 // pred_check_branch
      %68 = sbr.rel (0) target = $region29
    $region28: #{tpu_custom_call.1} parent=1 // pred_region
      _
    $region29: #{tpu_custom_call.1} parent=1 // pred_fallthru
      _
    // Predicated region
    $region30: #{tpu_custom_call.1} parent=1 // pred_check
      _
    $region31: #{tpu_custom_call.1} parent=1 // pred_check_branch
      %70 = sbr.rel (0) target = $region33
    $region32: #{tpu_custom_call.1} parent=1 // pred_region
      %s72 = ssub.s32 16, 16
      %73 = vsyncadd [#allocation6], %s72
      %s75 = sshll.u32 [#allocation7], 4
      %s76 = int_to_ptr.vmem [resolvable:$true] %s75
      %78 = dma.hbm_to_vmem [thread:$0]  %s7, 16, %s76, [#allocation6]
    $region33: #{tpu_custom_call.1} parent=1 // pred_fallthru
      _
    // Predicated region
    $region34: #{tpu_custom_call.1} parent=1 // pred_check
      _
    $region35: #{tpu_custom_call.1} parent=1 // pred_check_branch
      %80 = sbr.rel (0) target = $region37
    $region36: #{tpu_custom_call.1} parent=1 // pred_region
      _
    $region37: #{tpu_custom_call.1} parent=1 // pred_fallthru
      _
    // Predicated region
    $region38: #{tpu_custom_call.1} parent=1 // pred_check
      _
    $region39: #{tpu_custom_call.1} parent=1 // pred_check_branch
      %82 = sbr.rel (0) target = $region41
    $region40: #{tpu_custom_call.1} parent=1 // pred_region
      %s84 = ssub.s32 16, 16
      %85 = vsyncadd [#allocation9], %s84
      %s87 = sshll.u32 [#allocation8], 4
      %s88 = int_to_ptr.vmem [resolvable:$true] %s87
      %90 = dma.hbm_to_vmem [thread:$0]  %s9, 16, %s88, [#allocation9]
    $region41: #{tpu_custom_call.1} parent=1 // pred_fallthru
      _
    // Predicated region
    $region42: #{tpu_custom_call.1} parent=1 // pred_check
      _
    $region43: #{tpu_custom_call.1} parent=1 // pred_check_branch
      %92 = sbr.rel (0) target = $region45
    $region44: #{tpu_custom_call.1} parent=1 // pred_region
      _
    $region45: #{tpu_custom_call.1} parent=1 // pred_fallthru
      _
    // Predicated region
    $region46: #{tpu_custom_call.1} parent=1 // pred_check
      _
    $region47: #{tpu_custom_call.1} parent=1 // pred_check_branch
      %94 = sbr.rel (0) target = $region49
    $region48: #{tpu_custom_call.1} parent=1 // pred_region
      _
    $region49: #{tpu_custom_call.1} parent=1 // pred_fallthru
      _
    // Predicated region
    $region50: #{tpu_custom_call.1} parent=1 // pred_check
      _
    $region51: #{tpu_custom_call.1} parent=1 // pred_check_branch
      %96 = sbr.rel (0) target = $region53
    $region52: #{tpu_custom_call.1} parent=1 // pred_region
      _
    $region53: #{tpu_custom_call.1} parent=1 // pred_fallthru
      _
    // Predicated region
    $region54: #{tpu_custom_call.1} parent=1 // pred_check
      _
    $region55: #{tpu_custom_call.1} parent=1 // pred_check_branch
      %98 = sbr.rel (0) target = $region57
    $region56: #{tpu_custom_call.1} parent=1 // pred_region
      _
    $region57: #{tpu_custom_call.1} parent=1 // pred_fallthru
      _
    // Predicated region
    $region58: #{tpu_custom_call.1} parent=1 // pred_check
      _
    $region59: #{tpu_custom_call.1} parent=1 // pred_check_branch
      %100 = sbr.rel (0) target = $region61
    $region60: #{tpu_custom_call.1} parent=1 // pred_region
      _
    $region61: #{tpu_custom_call.1} parent=1 // pred_fallthru
      _
    // Predicated region
    $region62: #{tpu_custom_call.1} parent=1 // pred_check
      _
    $region63: #{tpu_custom_call.1} parent=1 // pred_check_branch
      %102 = sbr.rel (0) target = $region65
    $region64: #{tpu_custom_call.1} parent=1 // pred_region
      _
    $region65: #{tpu_custom_call.1} parent=1 // pred_fallthru
      _
    // Predicated region
    $region66: #{tpu_custom_call.1} parent=1 // pred_check
      _
    $region67: #{tpu_custom_call.1} parent=1 // pred_check_branch
      %104 = sbr.rel (0) target = $region69
    $region68: #{tpu_custom_call.1} parent=1 // pred_region
      _
    $region69: #{tpu_custom_call.1} parent=1 // pred_fallthru
      _
    // Predicated region
    $region70: #{tpu_custom_call.1} parent=1 // pred_check
      _
    $region71: #{tpu_custom_call.1} parent=1 // pred_check_branch
      %106 = sbr.rel (0) target = $region73
    $region72: #{tpu_custom_call.1} parent=1 // pred_region
      _
    $region73: #{tpu_custom_call.1} parent=1 // pred_fallthru
      _
    // Predicated region
    $region74: #{tpu_custom_call.1} parent=1 // pred_check
      _
    $region75: #{tpu_custom_call.1} parent=1 // pred_check_branch
      %108 = sbr.rel (0) target = $region77
    $region76: #{tpu_custom_call.1} parent=1 // pred_region
      _
    $region77: #{tpu_custom_call.1} parent=1 // pred_fallthru
      _
    // Predicated region
    $region78: #{tpu_custom_call.1} parent=1 // pred_check
      _
    $region79: #{tpu_custom_call.1} parent=1 // pred_check_branch
      %110 = sbr.rel (0) target = $region81
    $region80: #{tpu_custom_call.1} parent=1 // pred_region
      _
    $region81: #{tpu_custom_call.1} parent=1 // pred_fallthru
      _
    // Predicated region
    $region82: #{tpu_custom_call.1} parent=1 // pred_check
      _
    $region83: #{tpu_custom_call.1} parent=1 // pred_check_branch
      %112 = sbr.rel (0) target = $region85
    $region84: #{tpu_custom_call.1} parent=1 // pred_region
      _
    $region85: #{tpu_custom_call.1} parent=1 // pred_fallthru
      _
    // Predicated region
    $region86: #{tpu_custom_call.1} parent=1 // pred_check
      _
    $region87: #{tpu_custom_call.1} parent=1 // pred_check_branch
      %114 = sbr.rel (0) target = $region89
    $region88: #{tpu_custom_call.1} parent=1 // pred_region
      _
    $region89: #{tpu_custom_call.1} parent=1 // pred_fallthru
      _
    // Predicated region
    $region90: #{tpu_custom_call.1} parent=1 // pred_check
      _
    $region91: #{tpu_custom_call.1} parent=1 // pred_check_branch
      %116 = sbr.rel (0) target = $region93
    $region92: #{tpu_custom_call.1} parent=1 // pred_region
      _
    $region93: #{tpu_custom_call.1} parent=1 // pred_fallthru
      _
    // Predicated region
    $region94: #{tpu_custom_call.1} parent=1 // pred_check
      _
    $region95: #{tpu_custom_call.1} parent=1 // pred_check_branch
      %118 = sbr.rel (0) target = $region97
    $region96: #{tpu_custom_call.1} parent=1 // pred_region
      _
    $region97: #{tpu_custom_call.1} parent=1 // pred_fallthru
      _
    // Predicated region
    $region98: #{tpu_custom_call.1} parent=1 // pred_check
      _
    $region99: #{tpu_custom_call.1} parent=1 // pred_check_branch
      %120 = sbr.rel (0) target = $region101
    $region100: #{tpu_custom_call.1} parent=1 // pred_region
      _
    $region101: #{tpu_custom_call.1} parent=1 // pred_fallthru
      _
    // Predicated region
    $region102: #{tpu_custom_call.1} parent=1 // pred_check
      _
    $region103: #{tpu_custom_call.1} parent=1 // pred_check_branch
      %122 = sbr.rel (0) target = $region105
    $region104: #{tpu_custom_call.1} parent=1 // pred_region
      _
    $region105: #{tpu_custom_call.1} parent=1 // pred_fallthru
      _
    // Predicated region
    $region106: #{tpu_custom_call.1} parent=1 // pred_check
      _
    $region107: #{tpu_custom_call.1} parent=1 // pred_check_branch
      %124 = sbr.rel (0) target = $region109
    $region108: #{tpu_custom_call.1} parent=1 // pred_region
      %125 = dma.done [#allocation3], 256
    $region109: #{tpu_custom_call.1} parent=1 // pred_fallthru
      _
    // Predicated region
    $region110: #{tpu_custom_call.1} parent=1 // pred_check
      _
    $region111: #{tpu_custom_call.1} parent=1 // pred_check_branch
      %127 = sbr.rel (0) target = $region113
    $region112: #{tpu_custom_call.1} parent=1 // pred_region
      %128 = dma.done [#allocation6], 256
    $region113: #{tpu_custom_call.1} parent=1 // pred_fallthru
      _
    // Predicated region
    $region114: #{tpu_custom_call.1} parent=1 // pred_check
      _
    $region115: #{tpu_custom_call.1} parent=1 // pred_check_branch
      %130 = sbr.rel (0) target = $region117
    $region116: #{tpu_custom_call.1} parent=1 // pred_region
      %131 = dma.done [#allocation6], 16
    $region117: #{tpu_custom_call.1} parent=1 // pred_fallthru
      _
    // Predicated region
    $region118: #{tpu_custom_call.1} parent=1 // pred_check
      _
    $region119: #{tpu_custom_call.1} parent=1 // pred_check_branch
      %133 = sbr.rel (0) target = $region121
    $region120: #{tpu_custom_call.1} parent=1 // pred_region
      %134 = dma.done [#allocation9], 16
    $region121: #{tpu_custom_call.1} parent=1 // pred_fallthru
      _
    %v135 = vld [vmem:[#allocation2] sm:$0xff]
    %v136 = vld [vmem:[#allocation2 + $0x8] sm:$0xff]
    %v137 = vld [vmem:[#allocation5] sm:$0xff]
    %v138 = vld [vmem:[#allocation5 + $0x8] sm:$0xff]
    %v139 = vld [vmem:[%s2] sm:$0xff]
    %v140 = vld [vmem:[%s2 + $0x8] sm:$0xff]
    %v141 = vld [vmem:[%s2 + $0x10] sm:$0xff]
    %v142 = vld [vmem:[%s2 + $0x18] sm:$0xff]
    %v143 = vld [vmem:[%s3] sm:$0x1]
    %v144 = vld [vmem:[%s4] sm:$0xff]
    %v145 = vld [vmem:[%s4 + $0x8] sm:$0xff]
    %v146 = vld [vmem:[%s4 + $0x10] sm:$0xff]
    %v147 = vld [vmem:[%s4 + $0x18] sm:$0xff]
    %v148 = vld [vmem:[%s5] sm:$0x1]
    %v149 = vld [vmem:[%s6] sm:$0xff]
    %v150 = vld [vmem:[%s6 + $0x8] sm:$0xff]
    %v151 = vld [vmem:[%s6 + $0x10] sm:$0xff]
    %v152 = vld [vmem:[%s6 + $0x18] sm:$0xff]
    %v153 = vld [vmem:[#allocation7] sm:$0x1]
    %v154 = vld [vmem:[%s8] sm:$0xff]
    %v155 = vld [vmem:[%s8 + $0x8] sm:$0xff]
    %v156 = vld [vmem:[%s8 + $0x10] sm:$0xff]
    %v157 = vld [vmem:[%s8 + $0x18] sm:$0xff]
    %v158 = vld [vmem:[%s8 + $0x20] sm:$0xff]
    %v159 = vld [vmem:[%s8 + $0x28] sm:$0xff]
    %v160 = vld [vmem:[%s8 + $0x30] sm:$0xff]
    %v161 = vld [vmem:[%s8 + $0x38] sm:$0xff]
    %v162 = vld [vmem:[#allocation8] sm:$0x1]
    %v163 = vld [vmem:[%s10] sm:$0x1]
    %v164 = vld [vmem:[%s11] sm:$0x1]
    %v165 = vld [vmem:[%s12] sm:$0x1]
    %v166 = vld [vmem:[%s13] sm:$0x1]
    %v168 = vlaneseq
    %v169 = vshrl.u32 %v168, 7
    %v170 = vsub.s32 0, %v169
    %v171 = vrot.slane %v143, %v170
    %vm173 = vcmask 261120
    %v175 = vsel %vm173, %v135, 0
    %v178 = vsel %vm173, %v136, 0
    %180 = vmatprep.subr.mxu0 0.0
    %181 = vmatpush1.msra.mxu0 %v139
    %182 = vmatprep.subr.mxu0 0.0
    %183 = vmatpush1.msra.mxu0 %v140
    %184 = vmatprep.subr.mxu0 0.0
    %185 = vmatpush1.msra.mxu0 %v141
    %186 = vmatprep.subr.mxu0 0.0
    %187 = vmatpush1.msra.mxu0 %v142
    %188 = vmatprep.subr.mxu0 0.0
    %189 = vmatpush1.msra.mxu0 0.0
    %190 = vmatprep.subr.mxu0 0.0
    %191 = vmatpush1.msra.mxu0 0.0
    %192 = vmatprep.subr.mxu0 0.0
    %193 = vmatpush1.msra.mxu0 0.0
    %194 = vmatprep.subr.mxu0 0.0
    %195 = vmatpush1.msra.mxu0 0.0
    %196 = vmatprep.subr.mxu0 0.0
    %197 = vmatpush1.msra.mxu0 0.0
    %198 = vmatprep.subr.mxu0 0.0
    %199 = vmatpush1.msra.mxu0 0.0
    %200 = vmatprep.subr.mxu0 0.0
    %201 = vmatpush1.msra.mxu0 0.0
    %202 = vmatprep.subr.mxu0 0.0
    %203 = vmatpush1.msra.mxu0 0.0
    %204 = vmatprep.subr.mxu0 0.0
    %205 = vmatpush1.msra.mxu0 0.0
    %206 = vmatprep.subr.mxu0 0.0
    %207 = vmatpush1.msra.mxu0 0.0
    %208 = vmatprep.subr.mxu0 0.0
    %209 = vmatpush1.msra.mxu0 0.0
    %210 = vmatprep.subr.mxu0 0.0
    %211 = vmatpush1.msra.mxu0 0.0
    %212 = vmatprep.subr.mxu0 0.0
    %213 = vmatpush1.msra.mxu0 0.0
    %214 = vmatprep.subr.mxu0 0.0
    %215 = vmatpush1.msra.mxu0 0.0
    %216 = vmatprep.subr.mxu0 0.0
    %217 = vmatpush1.msra.mxu0 0.0
    %218 = vmatprep.subr.mxu0 0.0
    %219 = vmatpush1.msra.mxu0 0.0
    %220 = vmatprep.subr.mxu0 0.0
    %221 = vmatpush1.msra.mxu0 0.0
    %222 = vmatprep.subr.mxu0 0.0
    %223 = vmatpush1.msra.mxu0 0.0
    %224 = vmatprep.subr.mxu0 0.0
    %225 = vmatpush1.msra.mxu0 0.0
    %226 = vmatprep.subr.mxu0 0.0
    %227 = vmatpush1.msra.mxu0 0.0
    %228 = vmatprep.subr.mxu0 0.0
    %229 = vmatpush1.msra.mxu0 0.0
    %230 = vmatprep.subr.mxu0 0.0
    %231 = vmatpush1.msra.mxu0 0.0
    %232 = vmatprep.subr.mxu0 0.0
    %233 = vmatpush1.msra.mxu0 0.0
    %234 = vmatprep.subr.mxu0 0.0
    %235 = vmatpush1.msra.mxu0 0.0
    %236 = vmatprep.subr.mxu0 0.0
    %237 = vmatpush1.msra.mxu0 0.0
    %238 = vmatprep.subr.mxu0 0.0
    %239 = vmatpush1.msra.mxu0 0.0
    %240 = vmatprep.subr.mxu0 0.0
    %241 = vmatpush1.msra.mxu0 0.0
    %242 = vmatprep.subr.mxu0 0.0
    %243 = vmatpush1.msra.mxu0 0.0
    %244 = vmatprep.mubr.f32.mxu0 0.0
    %245 = vmatmul.mubr.f32.gmra.mrb[0].mxu0 %v175
    %v246 = vpop.f32.mrb[0].mxu0
    %v247 = vadd.f32 %v171, %v246
    %v248 = vpop.f32.mrb[0].mxu0
    %249 = vmatprep.mubr.f32.mxu0 0.0
    %250 = vmatmul.mubr.f32.gmra.mrb[0].mxu0 %v178
    %v251 = vpop.f32.mrb[0].mxu0
    %v252 = vadd.f32 %v171, %v251
    %v253 = vpop.f32.mrb[0].mxu0
    %254 = vdwg.mxu0
    %257 = vrot.lane.b32.xlu0 %v247, 96
    %v258 = vpop.permute.xlu0 %257
    %259 = vrot.lane.b32.xlu0 %v252, 96
    %v260 = vpop.permute.xlu0 %259
    %vm261 = vcmask 64512
    %v262 = vsel %vm261, %v247, 0
    %v264 = vsel %vm261, %v252, 0
    %v266 = vsel %vm261, %v258, 0
    %v268 = vsel %vm261, %v260, 0
    %270 = vmatprep.subr.mxu0 0.0
    %271 = vmatpush1.xpose.msra.mxu0 %v266
    %272 = vmatprep.subr.mxu0 0.0
    %273 = vmatpush1.xpose.msra.mxu0 %v268
    %274 = vmatprep.subr.mxu0 0.0
    %275 = vmatpush1.xpose.msra.mxu0 0.0
    %276 = vmatprep.subr.mxu0 0.0
    %277 = vmatpush1.xpose.msra.mxu0 0.0
    %278 = vmatprep.subr.mxu0 0.0
    %279 = vmatpush1.xpose.msra.mxu0 0.0
    %280 = vmatprep.subr.mxu0 0.0
    %281 = vmatpush1.xpose.msra.mxu0 0.0
    %282 = vmatprep.subr.mxu0 0.0
    %283 = vmatpush1.xpose.msra.mxu0 0.0
    %284 = vmatprep.subr.mxu0 0.0
    %285 = vmatpush1.xpose.msra.mxu0 0.0
    %286 = vmatprep.subr.mxu0 0.0
    %287 = vmatpush1.xpose.msra.mxu0 0.0
    %288 = vmatprep.subr.mxu0 0.0
    %289 = vmatpush1.xpose.msra.mxu0 0.0
    %290 = vmatprep.subr.mxu0 0.0
    %291 = vmatpush1.xpose.msra.mxu0 0.0
    %292 = vmatprep.subr.mxu0 0.0
    %293 = vmatpush1.xpose.msra.mxu0 0.0
    %294 = vmatprep.subr.mxu0 0.0
    %295 = vmatpush1.xpose.msra.mxu0 0.0
    %296 = vmatprep.subr.mxu0 0.0
    %297 = vmatpush1.xpose.msra.mxu0 0.0
    %298 = vmatprep.subr.mxu0 0.0
    %299 = vmatpush1.xpose.msra.mxu0 0.0
    %300 = vmatprep.subr.mxu0 0.0
    %301 = vmatpush1.xpose.msra.mxu0 0.0
    %302 = vmatprep.subr.mxu0 0.0
    %303 = vmatpush1.xpose.msra.mxu0 0.0
    %304 = vmatprep.subr.mxu0 0.0
    %305 = vmatpush1.xpose.msra.mxu0 0.0
    %306 = vmatprep.subr.mxu0 0.0
    %307 = vmatpush1.xpose.msra.mxu0 0.0
    %308 = vmatprep.subr.mxu0 0.0
    %309 = vmatpush1.xpose.msra.mxu0 0.0
    %310 = vmatprep.subr.mxu0 0.0
    %311 = vmatpush1.xpose.msra.mxu0 0.0
    %312 = vmatprep.subr.mxu0 0.0
    %313 = vmatpush1.xpose.msra.mxu0 0.0
    %314 = vmatprep.subr.mxu0 0.0
    %315 = vmatpush1.xpose.msra.mxu0 0.0
    %316 = vmatprep.subr.mxu0 0.0
    %317 = vmatpush1.xpose.msra.mxu0 0.0
    %318 = vmatprep.subr.mxu0 0.0
    %319 = vmatpush1.xpose.msra.mxu0 0.0
    %320 = vmatprep.subr.mxu0 0.0
    %321 = vmatpush1.xpose.msra.mxu0 0.0
    %322 = vmatprep.subr.mxu0 0.0
    %323 = vmatpush1.xpose.msra.mxu0 0.0
    %324 = vmatprep.subr.mxu0 0.0
    %325 = vmatpush1.xpose.msra.mxu0 0.0
    %326 = vmatprep.subr.mxu0 0.0
    %327 = vmatpush1.xpose.msra.mxu0 0.0
    %328 = vmatprep.subr.mxu0 0.0
    %329 = vmatpush1.xpose.msra.mxu0 0.0
    %330 = vmatprep.subr.mxu0 0.0
    %331 = vmatpush1.xpose.msra.mxu0 0.0
    %332 = vmatprep.subr.mxu0 0.0
    %333 = vmatpush1.xpose.msra.mxu0 0.0
    %334 = vmatprep.mubr.f32.mxu0 0.0
    %335 = vmatmul.mubr.f32.gmra.mrb[0].mxu0 %v262
    %v336 = vpop.f32.mrb[0].mxu0
    %v337 = vadd.f32 0.0, %v336
    %v338 = vpop.f32.mrb[0].mxu0
    %339 = vmatprep.mubr.f32.mxu0 0.0
    %340 = vmatmul.mubr.f32.gmra.mrb[0].mxu0 %v264
    %v341 = vpop.f32.mrb[0].mxu0
    %v342 = vadd.f32 0.0, %v341
    %v343 = vpop.f32.mrb[0].mxu0
    %344 = vdwg.mxu0
    %v345 = vmul.f32 %v337, 0.35355338
    %v346 = vmul.f32 %v342, 0.35355338
    %v347 = vadd.f32 %v345, %v137
    %v348 = vadd.f32 %v346, %v138
    %vm349 = vcmask 130048
    %v350 = vsel %vm349, %v347, -inf
    %351 = vmax.xlane.f32.xlu0 %v350
    %v352 = vpop.xlane.xlu0 %351
    %v353 = vsel %vm349, %v348, -inf
    %354 = vmax.xlane.f32.xlu0 %v353
    %v355 = vpop.xlane.xlu0 %354
    %v356 = vsub.f32 %v347, %v352
    %v357 = vsub.f32 %v348, %v355
    %v358 = vmul.f32 %v356, 1.442695
    %v359 = vpow.pop %v358
    %v360 = vmul.f32 %v357, 1.442695
    %v361 = vpow.pop %v360
    %v362 = vsel %vm349, %v359, 0.0
    %363 = vadd.xlane.f32.xlu0 %v362
    %v364 = vpop.xlane.xlu0 %363
    %v365 = vsel %vm349, %v361, 0.0
    %366 = vadd.xlane.f32.xlu0 %v365
    %v367 = vpop.xlane.xlu0 %366
    %v368 = vrcp.pop %v364
    %v369 = vrcp.pop %v367
    %v370 = vmul.f32 %v359, %v368
    %v371 = vmul.f32 %v361, %v369
    %372 = vrot.lane.b32.xlu0 %v247, 64
    %v373 = vpop.permute.xlu0 %372
    %374 = vrot.lane.b32.xlu0 %v252, 64
    %v375 = vpop.permute.xlu0 %374
    %v379 = vsel %vm349, %v370, 0
    %v382 = vsel %vm349, %v371, 0
    %384 = vmatprep.subr.mxu0 0.0
    %385 = vmatpush1.msra.mxu0 %v373
    %386 = vmatprep.subr.mxu0 0.0
    %387 = vmatpush1.msra.mxu0 %v375
    %388 = vmatprep.subr.mxu0 0.0
    %389 = vmatpush1.msra.mxu0 0.0
    %390 = vmatprep.subr.mxu0 0.0
    %391 = vmatpush1.msra.mxu0 0.0
    %392 = vmatprep.subr.mxu0 0.0
    %393 = vmatpush1.msra.mxu0 0.0
    %394 = vmatprep.subr.mxu0 0.0
    %395 = vmatpush1.msra.mxu0 0.0
    %396 = vmatprep.subr.mxu0 0.0
    %397 = vmatpush1.msra.mxu0 0.0
    %398 = vmatprep.subr.mxu0 0.0
    %399 = vmatpush1.msra.mxu0 0.0
    %400 = vmatprep.subr.mxu0 0.0
    %401 = vmatpush1.msra.mxu0 0.0
    %402 = vmatprep.subr.mxu0 0.0
    %403 = vmatpush1.msra.mxu0 0.0
    %404 = vmatprep.subr.mxu0 0.0
    %405 = vmatpush1.msra.mxu0 0.0
    %406 = vmatprep.subr.mxu0 0.0
    %407 = vmatpush1.msra.mxu0 0.0
    %408 = vmatprep.subr.mxu0 0.0
    %409 = vmatpush1.msra.mxu0 0.0
    %410 = vmatprep.subr.mxu0 0.0
    %411 = vmatpush1.msra.mxu0 0.0
    %412 = vmatprep.subr.mxu0 0.0
    %413 = vmatpush1.msra.mxu0 0.0
    %414 = vmatprep.subr.mxu0 0.0
    %415 = vmatpush1.msra.mxu0 0.0
    %416 = vmatprep.subr.mxu0 0.0
    %417 = vmatpush1.msra.mxu0 0.0
    %418 = vmatprep.subr.mxu0 0.0
    %419 = vmatpush1.msra.mxu0 0.0
    %420 = vmatprep.subr.mxu0 0.0
    %421 = vmatpush1.msra.mxu0 0.0
    %422 = vmatprep.subr.mxu0 0.0
    %423 = vmatpush1.msra.mxu0 0.0
    %424 = vmatprep.subr.mxu0 0.0
    %425 = vmatpush1.msra.mxu0 0.0
    %426 = vmatprep.subr.mxu0 0.0
    %427 = vmatpush1.msra.mxu0 0.0
    %428 = vmatprep.subr.mxu0 0.0
    %429 = vmatpush1.msra.mxu0 0.0
    %430 = vmatprep.subr.mxu0 0.0
    %431 = vmatpush1.msra.mxu0 0.0
    %432 = vmatprep.subr.mxu0 0.0
    %433 = vmatpush1.msra.mxu0 0.0
    %434 = vmatprep.subr.mxu0 0.0
    %435 = vmatpush1.msra.mxu0 0.0
    %436 = vmatprep.subr.mxu0 0.0
    %437 = vmatpush1.msra.mxu0 0.0
    %438 = vmatprep.subr.mxu0 0.0
    %439 = vmatpush1.msra.mxu0 0.0
    %440 = vmatprep.subr.mxu0 0.0
    %441 = vmatpush1.msra.mxu0 0.0
    %442 = vmatprep.subr.mxu0 0.0
    %443 = vmatpush1.msra.mxu0 0.0
    %444 = vmatprep.subr.mxu0 0.0
    %445 = vmatpush1.msra.mxu0 0.0
    %446 = vmatprep.subr.mxu0 0.0
    %447 = vmatpush1.msra.mxu0 0.0
    %448 = vmatprep.mubr.f32.mxu0 0.0
    %449 = vmatmul.mubr.f32.gmra.mrb[0].mxu0 %v379
    %v450 = vpop.f32.mrb[0].mxu0
    %v451 = vadd.f32 0.0, %v450
    %v452 = vpop.f32.mrb[0].mxu0
    %453 = vmatprep.mubr.f32.mxu0 0.0
    %454 = vmatmul.mubr.f32.gmra.mrb[0].mxu0 %v382
    %v455 = vpop.f32.mrb[0].mxu0
    %v456 = vadd.f32 0.0, %v455
    %v457 = vpop.f32.mrb[0].mxu0
    %458 = vdwg.mxu0
    %459 = vrot.lane.b32.xlu0 %v247, 120
    %v460 = vpop.permute.xlu0 %459
    %461 = vrot.lane.b32.xlu0 %v252, 120
    %v462 = vpop.permute.xlu0 %461
    %463 = vrot.lane.b32.xlu0 %v247, 88
    %v464 = vpop.permute.xlu0 %463
    %465 = vrot.lane.b32.xlu0 %v252, 88
    %v466 = vpop.permute.xlu0 %465
    %v467 = vsel %vm261, %v460, 0
    %v469 = vsel %vm261, %v462, 0
    %v471 = vsel %vm261, %v464, 0
    %v473 = vsel %vm261, %v466, 0
    %475 = vmatprep.subr.mxu0 0.0
    %476 = vmatpush1.xpose.msra.mxu0 %v471
    %477 = vmatprep.subr.mxu0 0.0
    %478 = vmatpush1.xpose.msra.mxu0 %v473
    %479 = vmatprep.subr.mxu0 0.0
    %480 = vmatpush1.xpose.msra.mxu0 0.0
    %481 = vmatprep.subr.mxu0 0.0
    %482 = vmatpush1.xpose.msra.mxu0 0.0
    %483 = vmatprep.subr.mxu0 0.0
    %484 = vmatpush1.xpose.msra.mxu0 0.0
    %485 = vmatprep.subr.mxu0 0.0
    %486 = vmatpush1.xpose.msra.mxu0 0.0
    %487 = vmatprep.subr.mxu0 0.0
    %488 = vmatpush1.xpose.msra.mxu0 0.0
    %489 = vmatprep.subr.mxu0 0.0
    %490 = vmatpush1.xpose.msra.mxu0 0.0
    %491 = vmatprep.subr.mxu0 0.0
    %492 = vmatpush1.xpose.msra.mxu0 0.0
    %493 = vmatprep.subr.mxu0 0.0
    %494 = vmatpush1.xpose.msra.mxu0 0.0
    %495 = vmatprep.subr.mxu0 0.0
    %496 = vmatpush1.xpose.msra.mxu0 0.0
    %497 = vmatprep.subr.mxu0 0.0
    %498 = vmatpush1.xpose.msra.mxu0 0.0
    %499 = vmatprep.subr.mxu0 0.0
    %500 = vmatpush1.xpose.msra.mxu0 0.0
    %501 = vmatprep.subr.mxu0 0.0
    %502 = vmatpush1.xpose.msra.mxu0 0.0
    %503 = vmatprep.subr.mxu0 0.0
    %504 = vmatpush1.xpose.msra.mxu0 0.0
    %505 = vmatprep.subr.mxu0 0.0
    %506 = vmatpush1.xpose.msra.mxu0 0.0
    %507 = vmatprep.subr.mxu0 0.0
    %508 = vmatpush1.xpose.msra.mxu0 0.0
    %509 = vmatprep.subr.mxu0 0.0
    %510 = vmatpush1.xpose.msra.mxu0 0.0
    %511 = vmatprep.subr.mxu0 0.0
    %512 = vmatpush1.xpose.msra.mxu0 0.0
    %513 = vmatprep.subr.mxu0 0.0
    %514 = vmatpush1.xpose.msra.mxu0 0.0
    %515 = vmatprep.subr.mxu0 0.0
    %516 = vmatpush1.xpose.msra.mxu0 0.0
    %517 = vmatprep.subr.mxu0 0.0
    %518 = vmatpush1.xpose.msra.mxu0 0.0
    %519 = vmatprep.subr.mxu0 0.0
    %520 = vmatpush1.xpose.msra.mxu0 0.0
    %521 = vmatprep.subr.mxu0 0.0
    %522 = vmatpush1.xpose.msra.mxu0 0.0
    %523 = vmatprep.subr.mxu0 0.0
    %524 = vmatpush1.xpose.msra.mxu0 0.0
    %525 = vmatprep.subr.mxu0 0.0
    %526 = vmatpush1.xpose.msra.mxu0 0.0
    %527 = vmatprep.subr.mxu0 0.0
    %528 = vmatpush1.xpose.msra.mxu0 0.0
    %529 = vmatprep.subr.mxu0 0.0
    %530 = vmatpush1.xpose.msra.mxu0 0.0
    %531 = vmatprep.subr.mxu0 0.0
    %532 = vmatpush1.xpose.msra.mxu0 0.0
    %533 = vmatprep.subr.mxu0 0.0
    %534 = vmatpush1.xpose.msra.mxu0 0.0
    %535 = vmatprep.subr.mxu0 0.0
    %536 = vmatpush1.xpose.msra.mxu0 0.0
    %537 = vmatprep.subr.mxu0 0.0
    %538 = vmatpush1.xpose.msra.mxu0 0.0
    %539 = vmatprep.mubr.f32.mxu0 0.0
    %540 = vmatmul.mubr.f32.gmra.mrb[0].mxu0 %v467
    %v541 = vpop.f32.mrb[0].mxu0
    %v542 = vadd.f32 0.0, %v541
    %v543 = vpop.f32.mrb[0].mxu0
    %544 = vmatprep.mubr.f32.mxu0 0.0
    %545 = vmatmul.mubr.f32.gmra.mrb[0].mxu0 %v469
    %v546 = vpop.f32.mrb[0].mxu0
    %v547 = vadd.f32 0.0, %v546
    %v548 = vpop.f32.mrb[0].mxu0
    %549 = vdwg.mxu0
    %v550 = vmul.f32 %v542, 0.35355338
    %v551 = vmul.f32 %v547, 0.35355338
    %v552 = vadd.f32 %v550, %v137
    %v553 = vadd.f32 %v551, %v138
    %v554 = vsel %vm349, %v552, -inf
    %555 = vmax.xlane.f32.xlu0 %v554
    %v556 = vpop.xlane.xlu0 %555
    %v557 = vsel %vm349, %v553, -inf
    %558 = vmax.xlane.f32.xlu0 %v557
    %v559 = vpop.xlane.xlu0 %558
    %v560 = vsub.f32 %v552, %v556
    %v561 = vsub.f32 %v553, %v559
    %v562 = vmul.f32 %v560, 1.442695
    %v563 = vpow.pop %v562
    %v564 = vmul.f32 %v561, 1.442695
    %v565 = vpow.pop %v564
    %v566 = vsel %vm349, %v563, 0.0
    %567 = vadd.xlane.f32.xlu0 %v566
    %v568 = vpop.xlane.xlu0 %567
    %v569 = vsel %vm349, %v565, 0.0
    %570 = vadd.xlane.f32.xlu0 %v569
    %v571 = vpop.xlane.xlu0 %570
    %v572 = vrcp.pop %v568
    %v573 = vrcp.pop %v571
    %v574 = vmul.f32 %v563, %v572
    %v575 = vmul.f32 %v565, %v573
    %576 = vrot.lane.b32.xlu0 %v247, 56
    %v577 = vpop.permute.xlu0 %576
    %578 = vrot.lane.b32.xlu0 %v252, 56
    %v579 = vpop.permute.xlu0 %578
    %v583 = vsel %vm349, %v574, 0
    %v586 = vsel %vm349, %v575, 0
    %588 = vmatprep.subr.mxu0 0.0
    %589 = vmatpush1.msra.mxu0 %v577
    %590 = vmatprep.subr.mxu0 0.0
    %591 = vmatpush1.msra.mxu0 %v579
    %592 = vmatprep.subr.mxu0 0.0
    %593 = vmatpush1.msra.mxu0 0.0
    %594 = vmatprep.subr.mxu0 0.0
    %595 = vmatpush1.msra.mxu0 0.0
    %596 = vmatprep.subr.mxu0 0.0
    %597 = vmatpush1.msra.mxu0 0.0
    %598 = vmatprep.subr.mxu0 0.0
    %599 = vmatpush1.msra.mxu0 0.0
    %600 = vmatprep.subr.mxu0 0.0
    %601 = vmatpush1.msra.mxu0 0.0
    %602 = vmatprep.subr.mxu0 0.0
    %603 = vmatpush1.msra.mxu0 0.0
    %604 = vmatprep.subr.mxu0 0.0
    %605 = vmatpush1.msra.mxu0 0.0
    %606 = vmatprep.subr.mxu0 0.0
    %607 = vmatpush1.msra.mxu0 0.0
    %608 = vmatprep.subr.mxu0 0.0
    %609 = vmatpush1.msra.mxu0 0.0
    %610 = vmatprep.subr.mxu0 0.0
    %611 = vmatpush1.msra.mxu0 0.0
    %612 = vmatprep.subr.mxu0 0.0
    %613 = vmatpush1.msra.mxu0 0.0
    %614 = vmatprep.subr.mxu0 0.0
    %615 = vmatpush1.msra.mxu0 0.0
    %616 = vmatprep.subr.mxu0 0.0
    %617 = vmatpush1.msra.mxu0 0.0
    %618 = vmatprep.subr.mxu0 0.0
    %619 = vmatpush1.msra.mxu0 0.0
    %620 = vmatprep.subr.mxu0 0.0
    %621 = vmatpush1.msra.mxu0 0.0
    %622 = vmatprep.subr.mxu0 0.0
    %623 = vmatpush1.msra.mxu0 0.0
    %624 = vmatprep.subr.mxu0 0.0
    %625 = vmatpush1.msra.mxu0 0.0
    %626 = vmatprep.subr.mxu0 0.0
    %627 = vmatpush1.msra.mxu0 0.0
    %628 = vmatprep.subr.mxu0 0.0
    %629 = vmatpush1.msra.mxu0 0.0
    %630 = vmatprep.subr.mxu0 0.0
    %631 = vmatpush1.msra.mxu0 0.0
    %632 = vmatprep.subr.mxu0 0.0
    %633 = vmatpush1.msra.mxu0 0.0
    %634 = vmatprep.subr.mxu0 0.0
    %635 = vmatpush1.msra.mxu0 0.0
    %636 = vmatprep.subr.mxu0 0.0
    %637 = vmatpush1.msra.mxu0 0.0
    %638 = vmatprep.subr.mxu0 0.0
    %639 = vmatpush1.msra.mxu0 0.0
    %640 = vmatprep.subr.mxu0 0.0
    %641 = vmatpush1.msra.mxu0 0.0
    %642 = vmatprep.subr.mxu0 0.0
    %643 = vmatpush1.msra.mxu0 0.0
    %644 = vmatprep.subr.mxu0 0.0
    %645 = vmatpush1.msra.mxu0 0.0
    %646 = vmatprep.subr.mxu0 0.0
    %647 = vmatpush1.msra.mxu0 0.0
    %648 = vmatprep.subr.mxu0 0.0
    %649 = vmatpush1.msra.mxu0 0.0
    %650 = vmatprep.subr.mxu0 0.0
    %651 = vmatpush1.msra.mxu0 0.0
    %652 = vmatprep.mubr.f32.mxu0 0.0
    %653 = vmatmul.mubr.f32.gmra.mrb[0].mxu0 %v583
    %v654 = vpop.f32.mrb[0].mxu0
    %v655 = vadd.f32 0.0, %v654
    %v656 = vpop.f32.mrb[0].mxu0
    %657 = vmatprep.mubr.f32.mxu0 0.0
    %658 = vmatmul.mubr.f32.gmra.mrb[0].mxu0 %v586
    %v659 = vpop.f32.mrb[0].mxu0
    %v660 = vadd.f32 0.0, %v659
    %v661 = vpop.f32.mrb[0].mxu0
    %662 = vdwg.mxu0
    %v664 = vsel %vm261, %v655, 0
    %v667 = vsel %vm261, %v660, 0
    %669 = vmatprep.subr.mxu0 0.0
    %670 = vmatpush1.msra.mxu0 %v145
    %671 = vmatprep.subr.mxu0 0.0
    %672 = vmatpush1.msra.mxu0 0.0
    %673 = vmatprep.subr.mxu0 0.0
    %674 = vmatpush1.msra.mxu0 0.0
    %675 = vmatprep.subr.mxu0 0.0
    %676 = vmatpush1.msra.mxu0 0.0
    %677 = vmatprep.subr.mxu0 0.0
    %678 = vmatpush1.msra.mxu0 0.0
    %679 = vmatprep.subr.mxu0 0.0
    %680 = vmatpush1.msra.mxu0 0.0
    %681 = vmatprep.subr.mxu0 0.0
    %682 = vmatpush1.msra.mxu0 0.0
    %683 = vmatprep.subr.mxu0 0.0
    %684 = vmatpush1.msra.mxu0 0.0
    %685 = vmatprep.subr.mxu0 0.0
    %686 = vmatpush1.msra.mxu0 0.0
    %687 = vmatprep.subr.mxu0 0.0
    %688 = vmatpush1.msra.mxu0 0.0
    %689 = vmatprep.subr.mxu0 0.0
    %690 = vmatpush1.msra.mxu0 0.0
    %691 = vmatprep.subr.mxu0 0.0
    %692 = vmatpush1.msra.mxu0 0.0
    %693 = vmatprep.subr.mxu0 0.0
    %694 = vmatpush1.msra.mxu0 0.0
    %695 = vmatprep.subr.mxu0 0.0
    %696 = vmatpush1.msra.mxu0 0.0
    %697 = vmatprep.subr.mxu0 0.0
    %698 = vmatpush1.msra.mxu0 0.0
    %699 = vmatprep.subr.mxu0 0.0
    %700 = vmatpush1.msra.mxu0 0.0
    %701 = vmatprep.subr.mxu0 0.0
    %702 = vmatpush1.msra.mxu0 0.0
    %703 = vmatprep.subr.mxu0 0.0
    %704 = vmatpush1.msra.mxu0 0.0
    %705 = vmatprep.subr.mxu0 0.0
    %706 = vmatpush1.msra.mxu0 0.0
    %707 = vmatprep.subr.mxu0 0.0
    %708 = vmatpush1.msra.mxu0 0.0
    %709 = vmatprep.subr.mxu0 0.0
    %710 = vmatpush1.msra.mxu0 0.0
    %711 = vmatprep.subr.mxu0 0.0
    %712 = vmatpush1.msra.mxu0 0.0
    %713 = vmatprep.subr.mxu0 0.0
    %714 = vmatpush1.msra.mxu0 0.0
    %715 = vmatprep.subr.mxu0 0.0
    %716 = vmatpush1.msra.mxu0 0.0
    %717 = vmatprep.subr.mxu0 0.0
    %718 = vmatpush1.msra.mxu0 0.0
    %719 = vmatprep.subr.mxu0 0.0
    %720 = vmatpush1.msra.mxu0 0.0
    %721 = vmatprep.subr.mxu0 0.0
    %722 = vmatpush1.msra.mxu0 0.0
    %723 = vmatprep.subr.mxu0 0.0
    %724 = vmatpush1.msra.mxu0 0.0
    %725 = vmatprep.subr.mxu0 0.0
    %726 = vmatpush1.msra.mxu0 0.0
    %727 = vmatprep.subr.mxu0 0.0
    %728 = vmatpush1.msra.mxu0 0.0
    %729 = vmatprep.subr.mxu0 0.0
    %730 = vmatpush1.msra.mxu0 0.0
    %731 = vmatprep.subr.mxu0 0.0
    %732 = vmatpush1.msra.mxu0 0.0
    %733 = vmatprep.mubr.f32.mxu0 0.0
    %734 = vmatmul.mubr.f32.gmra.mrb[0].mxu0 %v664
    %v735 = vpop.f32.mrb[0].mxu0
    %v736 = vadd.f32 0.0, %v735
    %v737 = vpop.f32.mrb[0].mxu0
    %738 = vmatprep.mubr.f32.mxu0 0.0
    %739 = vmatmul.mubr.f32.gmra.mrb[0].mxu0 %v667
    %v740 = vpop.f32.mrb[0].mxu0
    %v741 = vadd.f32 0.0, %v740
    %v742 = vpop.f32.mrb[0].mxu0
    %743 = vdwg.mxu0
    %v745 = vsel %vm261, %v451, 0
    %v748 = vsel %vm261, %v456, 0
    %750 = vmatprep.subr.mxu0 0.0
    %751 = vmatpush1.msra.mxu0 %v144
    %752 = vmatprep.subr.mxu0 0.0
    %753 = vmatpush1.msra.mxu0 0.0
    %754 = vmatprep.subr.mxu0 0.0
    %755 = vmatpush1.msra.mxu0 0.0
    %756 = vmatprep.subr.mxu0 0.0
    %757 = vmatpush1.msra.mxu0 0.0
    %758 = vmatprep.subr.mxu0 0.0
    %759 = vmatpush1.msra.mxu0 0.0
    %760 = vmatprep.subr.mxu0 0.0
    %761 = vmatpush1.msra.mxu0 0.0
    %762 = vmatprep.subr.mxu0 0.0
    %763 = vmatpush1.msra.mxu0 0.0
    %764 = vmatprep.subr.mxu0 0.0
    %765 = vmatpush1.msra.mxu0 0.0
    %766 = vmatprep.subr.mxu0 0.0
    %767 = vmatpush1.msra.mxu0 0.0
    %768 = vmatprep.subr.mxu0 0.0
    %769 = vmatpush1.msra.mxu0 0.0
    %770 = vmatprep.subr.mxu0 0.0
    %771 = vmatpush1.msra.mxu0 0.0
    %772 = vmatprep.subr.mxu0 0.0
    %773 = vmatpush1.msra.mxu0 0.0
    %774 = vmatprep.subr.mxu0 0.0
    %775 = vmatpush1.msra.mxu0 0.0
    %776 = vmatprep.subr.mxu0 0.0
    %777 = vmatpush1.msra.mxu0 0.0
    %778 = vmatprep.subr.mxu0 0.0
    %779 = vmatpush1.msra.mxu0 0.0
    %780 = vmatprep.subr.mxu0 0.0
    %781 = vmatpush1.msra.mxu0 0.0
    %782 = vmatprep.subr.mxu0 0.0
    %783 = vmatpush1.msra.mxu0 0.0
    %784 = vmatprep.subr.mxu0 0.0
    %785 = vmatpush1.msra.mxu0 0.0
    %786 = vmatprep.subr.mxu0 0.0
    %787 = vmatpush1.msra.mxu0 0.0
    %788 = vmatprep.subr.mxu0 0.0
    %789 = vmatpush1.msra.mxu0 0.0
    %790 = vmatprep.subr.mxu0 0.0
    %791 = vmatpush1.msra.mxu0 0.0
    %792 = vmatprep.subr.mxu0 0.0
    %793 = vmatpush1.msra.mxu0 0.0
    %794 = vmatprep.subr.mxu0 0.0
    %795 = vmatpush1.msra.mxu0 0.0
    %796 = vmatprep.subr.mxu0 0.0
    %797 = vmatpush1.msra.mxu0 0.0
    %798 = vmatprep.subr.mxu0 0.0
    %799 = vmatpush1.msra.mxu0 0.0
    %800 = vmatprep.subr.mxu0 0.0
    %801 = vmatpush1.msra.mxu0 0.0
    %802 = vmatprep.subr.mxu0 0.0
    %803 = vmatpush1.msra.mxu0 0.0
    %804 = vmatprep.subr.mxu0 0.0
    %805 = vmatpush1.msra.mxu0 0.0
    %806 = vmatprep.subr.mxu0 0.0
    %807 = vmatpush1.msra.mxu0 0.0
    %808 = vmatprep.subr.mxu0 0.0
    %809 = vmatpush1.msra.mxu0 0.0
    %810 = vmatprep.subr.mxu0 0.0
    %811 = vmatpush1.msra.mxu0 0.0
    %812 = vmatprep.subr.mxu0 0.0
    %813 = vmatpush1.msra.mxu0 0.0
    %814 = vmatprep.mubr.f32.mxu0 0.0
    %815 = vmatmul.mubr.f32.gmra.mrb[0].mxu0 %v745
    %v816 = vpop.f32.mrb[0].mxu0
    %v817 = vadd.f32 %v736, %v816
    %v818 = vpop.f32.mrb[0].mxu0
    %819 = vmatprep.mubr.f32.mxu0 0.0
    %820 = vmatmul.mubr.f32.gmra.mrb[0].mxu0 %v748
    %v821 = vpop.f32.mrb[0].mxu0
    %v822 = vadd.f32 %v741, %v821
    %v823 = vpop.f32.mrb[0].mxu0
    %824 = vdwg.mxu0
    %825 = vrot.lane.b32.xlu0 %v247, 112
    %v826 = vpop.permute.xlu0 %825
    %827 = vrot.lane.b32.xlu0 %v252, 112
    %v828 = vpop.permute.xlu0 %827
    %829 = vrot.lane.b32.xlu0 %v247, 80
    %v830 = vpop.permute.xlu0 %829
    %831 = vrot.lane.b32.xlu0 %v252, 80
    %v832 = vpop.permute.xlu0 %831
    %v833 = vsel %vm261, %v826, 0
    %v835 = vsel %vm261, %v828, 0
    %v837 = vsel %vm261, %v830, 0
    %v839 = vsel %vm261, %v832, 0
    %841 = vmatprep.subr.mxu0 0.0
    %842 = vmatpush1.xpose.msra.mxu0 %v837
    %843 = vmatprep.subr.mxu0 0.0
    %844 = vmatpush1.xpose.msra.mxu0 %v839
    %845 = vmatprep.subr.mxu0 0.0
    %846 = vmatpush1.xpose.msra.mxu0 0.0
    %847 = vmatprep.subr.mxu0 0.0
    %848 = vmatpush1.xpose.msra.mxu0 0.0
    %849 = vmatprep.subr.mxu0 0.0
    %850 = vmatpush1.xpose.msra.mxu0 0.0
    %851 = vmatprep.subr.mxu0 0.0
    %852 = vmatpush1.xpose.msra.mxu0 0.0
    %853 = vmatprep.subr.mxu0 0.0
    %854 = vmatpush1.xpose.msra.mxu0 0.0
    %855 = vmatprep.subr.mxu0 0.0
    %856 = vmatpush1.xpose.msra.mxu0 0.0
    %857 = vmatprep.subr.mxu0 0.0
    %858 = vmatpush1.xpose.msra.mxu0 0.0
    %859 = vmatprep.subr.mxu0 0.0
    %860 = vmatpush1.xpose.msra.mxu0 0.0
    %861 = vmatprep.subr.mxu0 0.0
    %862 = vmatpush1.xpose.msra.mxu0 0.0
    %863 = vmatprep.subr.mxu0 0.0
    %864 = vmatpush1.xpose.msra.mxu0 0.0
    %865 = vmatprep.subr.mxu0 0.0
    %866 = vmatpush1.xpose.msra.mxu0 0.0
    %867 = vmatprep.subr.mxu0 0.0
    %868 = vmatpush1.xpose.msra.mxu0 0.0
    %869 = vmatprep.subr.mxu0 0.0
    %870 = vmatpush1.xpose.msra.mxu0 0.0
    %871 = vmatprep.subr.mxu0 0.0
    %872 = vmatpush1.xpose.msra.mxu0 0.0
    %873 = vmatprep.subr.mxu0 0.0
    %874 = vmatpush1.xpose.msra.mxu0 0.0
    %875 = vmatprep.subr.mxu0 0.0
    %876 = vmatpush1.xpose.msra.mxu0 0.0
    %877 = vmatprep.subr.mxu0 0.0
    %878 = vmatpush1.xpose.msra.mxu0 0.0
    %879 = vmatprep.subr.mxu0 0.0
    %880 = vmatpush1.xpose.msra.mxu0 0.0
    %881 = vmatprep.subr.mxu0 0.0
    %882 = vmatpush1.xpose.msra.mxu0 0.0
    %883 = vmatprep.subr.mxu0 0.0
    %884 = vmatpush1.xpose.msra.mxu0 0.0
    %885 = vmatprep.subr.mxu0 0.0
    %886 = vmatpush1.xpose.msra.mxu0 0.0
    %887 = vmatprep.subr.mxu0 0.0
    %888 = vmatpush1.xpose.msra.mxu0 0.0
    %889 = vmatprep.subr.mxu0 0.0
    %890 = vmatpush1.xpose.msra.mxu0 0.0
    %891 = vmatprep.subr.mxu0 0.0
    %892 = vmatpush1.xpose.msra.mxu0 0.0
    %893 = vmatprep.subr.mxu0 0.0
    %894 = vmatpush1.xpose.msra.mxu0 0.0
    %895 = vmatprep.subr.mxu0 0.0
    %896 = vmatpush1.xpose.msra.mxu0 0.0
    %897 = vmatprep.subr.mxu0 0.0
    %898 = vmatpush1.xpose.msra.mxu0 0.0
    %899 = vmatprep.subr.mxu0 0.0
    %900 = vmatpush1.xpose.msra.mxu0 0.0
    %901 = vmatprep.subr.mxu0 0.0
    %902 = vmatpush1.xpose.msra.mxu0 0.0
    %903 = vmatprep.subr.mxu0 0.0
    %904 = vmatpush1.xpose.msra.mxu0 0.0
    %905 = vmatprep.mubr.f32.mxu0 0.0
    %906 = vmatmul.mubr.f32.gmra.mrb[0].mxu0 %v833
    %v907 = vpop.f32.mrb[0].mxu0
    %v908 = vadd.f32 0.0, %v907
    %v909 = vpop.f32.mrb[0].mxu0
    %910 = vmatprep.mubr.f32.mxu0 0.0
    %911 = vmatmul.mubr.f32.gmra.mrb[0].mxu0 %v835
    %v912 = vpop.f32.mrb[0].mxu0
    %v913 = vadd.f32 0.0, %v912
    %v914 = vpop.f32.mrb[0].mxu0
    %915 = vdwg.mxu0
    %v916 = vmul.f32 %v908, 0.35355338
    %v917 = vmul.f32 %v913, 0.35355338
    %v918 = vadd.f32 %v916, %v137
    %v919 = vadd.f32 %v917, %v138
    %v920 = vsel %vm349, %v918, -inf
    %921 = vmax.xlane.f32.xlu0 %v920
    %v922 = vpop.xlane.xlu0 %921
    %v923 = vsel %vm349, %v919, -inf
    %924 = vmax.xlane.f32.xlu0 %v923
    %v925 = vpop.xlane.xlu0 %924
    %v926 = vsub.f32 %v918, %v922
    %v927 = vsub.f32 %v919, %v925
    %v928 = vmul.f32 %v926, 1.442695
    %v929 = vpow.pop %v928
    %v930 = vmul.f32 %v927, 1.442695
    %v931 = vpow.pop %v930
    %v932 = vsel %vm349, %v929, 0.0
    %933 = vadd.xlane.f32.xlu0 %v932
    %v934 = vpop.xlane.xlu0 %933
    %v935 = vsel %vm349, %v931, 0.0
    %936 = vadd.xlane.f32.xlu0 %v935
    %v937 = vpop.xlane.xlu0 %936
    %v938 = vrcp.pop %v934
    %v939 = vrcp.pop %v937
    %v940 = vmul.f32 %v929, %v938
    %v941 = vmul.f32 %v931, %v939
    %942 = vrot.lane.b32.xlu0 %v247, 48
    %v943 = vpop.permute.xlu0 %942
    %944 = vrot.lane.b32.xlu0 %v252, 48
    %v945 = vpop.permute.xlu0 %944
    %v949 = vsel %vm349, %v940, 0
    %v952 = vsel %vm349, %v941, 0
    %954 = vmatprep.subr.mxu0 0.0
    %955 = vmatpush1.msra.mxu0 %v943
    %956 = vmatprep.subr.mxu0 0.0
    %957 = vmatpush1.msra.mxu0 %v945
    %958 = vmatprep.subr.mxu0 0.0
    %959 = vmatpush1.msra.mxu0 0.0
    %960 = vmatprep.subr.mxu0 0.0
    %961 = vmatpush1.msra.mxu0 0.0
    %962 = vmatprep.subr.mxu0 0.0
    %963 = vmatpush1.msra.mxu0 0.0
    %964 = vmatprep.subr.mxu0 0.0
    %965 = vmatpush1.msra.mxu0 0.0
    %966 = vmatprep.subr.mxu0 0.0
    %967 = vmatpush1.msra.mxu0 0.0
    %968 = vmatprep.subr.mxu0 0.0
    %969 = vmatpush1.msra.mxu0 0.0
    %970 = vmatprep.subr.mxu0 0.0
    %971 = vmatpush1.msra.mxu0 0.0
    %972 = vmatprep.subr.mxu0 0.0
    %973 = vmatpush1.msra.mxu0 0.0
    %974 = vmatprep.subr.mxu0 0.0
    %975 = vmatpush1.msra.mxu0 0.0
    %976 = vmatprep.subr.mxu0 0.0
    %977 = vmatpush1.msra.mxu0 0.0
    %978 = vmatprep.subr.mxu0 0.0
    %979 = vmatpush1.msra.mxu0 0.0
    %980 = vmatprep.subr.mxu0 0.0
    %981 = vmatpush1.msra.mxu0 0.0
    %982 = vmatprep.subr.mxu0 0.0
    %983 = vmatpush1.msra.mxu0 0.0
    %984 = vmatprep.subr.mxu0 0.0
    %985 = vmatpush1.msra.mxu0 0.0
    %986 = vmatprep.subr.mxu0 0.0
    %987 = vmatpush1.msra.mxu0 0.0
    %988 = vmatprep.subr.mxu0 0.0
    %989 = vmatpush1.msra.mxu0 0.0
    %990 = vmatprep.subr.mxu0 0.0
    %991 = vmatpush1.msra.mxu0 0.0
    %992 = vmatprep.subr.mxu0 0.0
    %993 = vmatpush1.msra.mxu0 0.0
    %994 = vmatprep.subr.mxu0 0.0
    %995 = vmatpush1.msra.mxu0 0.0
    %996 = vmatprep.subr.mxu0 0.0
    %997 = vmatpush1.msra.mxu0 0.0
    %998 = vmatprep.subr.mxu0 0.0
    %999 = vmatpush1.msra.mxu0 0.0
    %1000 = vmatprep.subr.mxu0 0.0
    %1001 = vmatpush1.msra.mxu0 0.0
    %1002 = vmatprep.subr.mxu0 0.0
    %1003 = vmatpush1.msra.mxu0 0.0
    %1004 = vmatprep.subr.mxu0 0.0
    %1005 = vmatpush1.msra.mxu0 0.0
    %1006 = vmatprep.subr.mxu0 0.0
    %1007 = vmatpush1.msra.mxu0 0.0
    %1008 = vmatprep.subr.mxu0 0.0
    %1009 = vmatpush1.msra.mxu0 0.0
    %1010 = vmatprep.subr.mxu0 0.0
    %1011 = vmatpush1.msra.mxu0 0.0
    %1012 = vmatprep.subr.mxu0 0.0
    %1013 = vmatpush1.msra.mxu0 0.0
    %1014 = vmatprep.subr.mxu0 0.0
    %1015 = vmatpush1.msra.mxu0 0.0
    %1016 = vmatprep.subr.mxu0 0.0
    %1017 = vmatpush1.msra.mxu0 0.0
    %1018 = vmatprep.mubr.f32.mxu0 0.0
    %1019 = vmatmul.mubr.f32.gmra.mrb[0].mxu0 %v949
    %v1020 = vpop.f32.mrb[0].mxu0
    %v1021 = vadd.f32 0.0, %v1020
    %v1022 = vpop.f32.mrb[0].mxu0
    %1023 = vmatprep.mubr.f32.mxu0 0.0
    %1024 = vmatmul.mubr.f32.gmra.mrb[0].mxu0 %v952
    %v1025 = vpop.f32.mrb[0].mxu0
    %v1026 = vadd.f32 0.0, %v1025
    %v1027 = vpop.f32.mrb[0].mxu0
    %1028 = vdwg.mxu0
    %v1030 = vsel %vm261, %v1021, 0
    %v1033 = vsel %vm261, %v1026, 0
    %1035 = vmatprep.subr.mxu0 0.0
    %1036 = vmatpush1.msra.mxu0 %v146
    %1037 = vmatprep.subr.mxu0 0.0
    %1038 = vmatpush1.msra.mxu0 0.0
    %1039 = vmatprep.subr.mxu0 0.0
    %1040 = vmatpush1.msra.mxu0 0.0
    %1041 = vmatprep.subr.mxu0 0.0
    %1042 = vmatpush1.msra.mxu0 0.0
    %1043 = vmatprep.subr.mxu0 0.0
    %1044 = vmatpush1.msra.mxu0 0.0
    %1045 = vmatprep.subr.mxu0 0.0
    %1046 = vmatpush1.msra.mxu0 0.0
    %1047 = vmatprep.subr.mxu0 0.0
    %1048 = vmatpush1.msra.mxu0 0.0
    %1049 = vmatprep.subr.mxu0 0.0
    %1050 = vmatpush1.msra.mxu0 0.0
    %1051 = vmatprep.subr.mxu0 0.0
    %1052 = vmatpush1.msra.mxu0 0.0
    %1053 = vmatprep.subr.mxu0 0.0
    %1054 = vmatpush1.msra.mxu0 0.0
    %1055 = vmatprep.subr.mxu0 0.0
    %1056 = vmatpush1.msra.mxu0 0.0
    %1057 = vmatprep.subr.mxu0 0.0
    %1058 = vmatpush1.msra.mxu0 0.0
    %1059 = vmatprep.subr.mxu0 0.0
    %1060 = vmatpush1.msra.mxu0 0.0
    %1061 = vmatprep.subr.mxu0 0.0
    %1062 = vmatpush1.msra.mxu0 0.0
    %1063 = vmatprep.subr.mxu0 0.0
    %1064 = vmatpush1.msra.mxu0 0.0
    %1065 = vmatprep.subr.mxu0 0.0
    %1066 = vmatpush1.msra.mxu0 0.0
    %1067 = vmatprep.subr.mxu0 0.0
    %1068 = vmatpush1.msra.mxu0 0.0
    %1069 = vmatprep.subr.mxu0 0.0
    %1070 = vmatpush1.msra.mxu0 0.0
    %1071 = vmatprep.subr.mxu0 0.0
    %1072 = vmatpush1.msra.mxu0 0.0
    %1073 = vmatprep.subr.mxu0 0.0
    %1074 = vmatpush1.msra.mxu0 0.0
    %1075 = vmatprep.subr.mxu0 0.0
    %1076 = vmatpush1.msra.mxu0 0.0
    %1077 = vmatprep.subr.mxu0 0.0
    %1078 = vmatpush1.msra.mxu0 0.0
    %1079 = vmatprep.subr.mxu0 0.0
    %1080 = vmatpush1.msra.mxu0 0.0
    %1081 = vmatprep.subr.mxu0 0.0
    %1082 = vmatpush1.msra.mxu0 0.0
    %1083 = vmatprep.subr.mxu0 0.0
    %1084 = vmatpush1.msra.mxu0 0.0
    %1085 = vmatprep.subr.mxu0 0.0
    %1086 = vmatpush1.msra.mxu0 0.0
    %1087 = vmatprep.subr.mxu0 0.0
    %1088 = vmatpush1.msra.mxu0 0.0
    %1089 = vmatprep.subr.mxu0 0.0
    %1090 = vmatpush1.msra.mxu0 0.0
    %1091 = vmatprep.subr.mxu0 0.0
    %1092 = vmatpush1.msra.mxu0 0.0
    %1093 = vmatprep.subr.mxu0 0.0
    %1094 = vmatpush1.msra.mxu0 0.0
    %1095 = vmatprep.subr.mxu0 0.0
    %1096 = vmatpush1.msra.mxu0 0.0
    %1097 = vmatprep.subr.mxu0 0.0
    %1098 = vmatpush1.msra.mxu0 0.0
    %1099 = vmatprep.mubr.f32.mxu0 0.0
    %1100 = vmatmul.mubr.f32.gmra.mrb[0].mxu0 %v1030
    %v1101 = vpop.f32.mrb[0].mxu0
    %v1102 = vadd.f32 0.0, %v1101
    %v1103 = vpop.f32.mrb[0].mxu0
    %1104 = vmatprep.mubr.f32.mxu0 0.0
    %1105 = vmatmul.mubr.f32.gmra.mrb[0].mxu0 %v1033
    %v1106 = vpop.f32.mrb[0].mxu0
    %v1107 = vadd.f32 0.0, %v1106
    %v1108 = vpop.f32.mrb[0].mxu0
    %1109 = vdwg.mxu0
    %v1110 = vadd.f32 %v817, %v1102
    %v1111 = vadd.f32 %v822, %v1107
    %1112 = vrot.lane.b32.xlu0 %v247, 104
    %v1113 = vpop.permute.xlu0 %1112
    %1114 = vrot.lane.b32.xlu0 %v252, 104
    %v1115 = vpop.permute.xlu0 %1114
    %1116 = vrot.lane.b32.xlu0 %v247, 72
    %v1117 = vpop.permute.xlu0 %1116
    %1118 = vrot.lane.b32.xlu0 %v252, 72
    %v1119 = vpop.permute.xlu0 %1118
    %v1120 = vsel %vm261, %v1113, 0
    %v1122 = vsel %vm261, %v1115, 0
    %v1124 = vsel %vm261, %v1117, 0
    %v1126 = vsel %vm261, %v1119, 0
    %1128 = vmatprep.subr.mxu0 0.0
    %1129 = vmatpush1.xpose.msra.mxu0 %v1124
    %1130 = vmatprep.subr.mxu0 0.0
    %1131 = vmatpush1.xpose.msra.mxu0 %v1126
    %1132 = vmatprep.subr.mxu0 0.0
    %1133 = vmatpush1.xpose.msra.mxu0 0.0
    %1134 = vmatprep.subr.mxu0 0.0
    %1135 = vmatpush1.xpose.msra.mxu0 0.0
    %1136 = vmatprep.subr.mxu0 0.0
    %1137 = vmatpush1.xpose.msra.mxu0 0.0
    %1138 = vmatprep.subr.mxu0 0.0
    %1139 = vmatpush1.xpose.msra.mxu0 0.0
    %1140 = vmatprep.subr.mxu0 0.0
    %1141 = vmatpush1.xpose.msra.mxu0 0.0
    %1142 = vmatprep.subr.mxu0 0.0
    %1143 = vmatpush1.xpose.msra.mxu0 0.0
    %1144 = vmatprep.subr.mxu0 0.0
    %1145 = vmatpush1.xpose.msra.mxu0 0.0
    %1146 = vmatprep.subr.mxu0 0.0
    %1147 = vmatpush1.xpose.msra.mxu0 0.0
    %1148 = vmatprep.subr.mxu0 0.0
    %1149 = vmatpush1.xpose.msra.mxu0 0.0
    %1150 = vmatprep.subr.mxu0 0.0
    %1151 = vmatpush1.xpose.msra.mxu0 0.0
    %1152 = vmatprep.subr.mxu0 0.0
    %1153 = vmatpush1.xpose.msra.mxu0 0.0
    %1154 = vmatprep.subr.mxu0 0.0
    %1155 = vmatpush1.xpose.msra.mxu0 0.0
    %1156 = vmatprep.subr.mxu0 0.0
    %1157 = vmatpush1.xpose.msra.mxu0 0.0
    %1158 = vmatprep.subr.mxu0 0.0
    %1159 = vmatpush1.xpose.msra.mxu0 0.0
    %1160 = vmatprep.subr.mxu0 0.0
    %1161 = vmatpush1.xpose.msra.mxu0 0.0
    %1162 = vmatprep.subr.mxu0 0.0
    %1163 = vmatpush1.xpose.msra.mxu0 0.0
    %1164 = vmatprep.subr.mxu0 0.0
    %1165 = vmatpush1.xpose.msra.mxu0 0.0
    %1166 = vmatprep.subr.mxu0 0.0
    %1167 = vmatpush1.xpose.msra.mxu0 0.0
    %1168 = vmatprep.subr.mxu0 0.0
    %1169 = vmatpush1.xpose.msra.mxu0 0.0
    %1170 = vmatprep.subr.mxu0 0.0
    %1171 = vmatpush1.xpose.msra.mxu0 0.0
    %1172 = vmatprep.subr.mxu0 0.0
    %1173 = vmatpush1.xpose.msra.mxu0 0.0
    %1174 = vmatprep.subr.mxu0 0.0
    %1175 = vmatpush1.xpose.msra.mxu0 0.0
    %1176 = vmatprep.subr.mxu0 0.0
    %1177 = vmatpush1.xpose.msra.mxu0 0.0
    %1178 = vmatprep.subr.mxu0 0.0
    %1179 = vmatpush1.xpose.msra.mxu0 0.0
    %1180 = vmatprep.subr.mxu0 0.0
    %1181 = vmatpush1.xpose.msra.mxu0 0.0
    %1182 = vmatprep.subr.mxu0 0.0
    %1183 = vmatpush1.xpose.msra.mxu0 0.0
    %1184 = vmatprep.subr.mxu0 0.0
    %1185 = vmatpush1.xpose.msra.mxu0 0.0
    %1186 = vmatprep.subr.mxu0 0.0
    %1187 = vmatpush1.xpose.msra.mxu0 0.0
    %1188 = vmatprep.subr.mxu0 0.0
    %1189 = vmatpush1.xpose.msra.mxu0 0.0
    %1190 = vmatprep.subr.mxu0 0.0
    %1191 = vmatpush1.xpose.msra.mxu0 0.0
    %1192 = vmatprep.mubr.f32.mxu0 0.0
    %1193 = vmatmul.mubr.f32.gmra.mrb[0].mxu0 %v1120
    %v1194 = vpop.f32.mrb[0].mxu0
    %v1195 = vadd.f32 0.0, %v1194
    %v1196 = vpop.f32.mrb[0].mxu0
    %1197 = vmatprep.mubr.f32.mxu0 0.0
    %1198 = vmatmul.mubr.f32.gmra.mrb[0].mxu0 %v1122
    %v1199 = vpop.f32.mrb[0].mxu0
    %v1200 = vadd.f32 0.0, %v1199
    %v1201 = vpop.f32.mrb[0].mxu0
    %1202 = vdwg.mxu0
    %v1203 = vmul.f32 %v1195, 0.35355338
    %v1204 = vmul.f32 %v1200, 0.35355338
    %v1205 = vadd.f32 %v1203, %v137
    %v1206 = vadd.f32 %v1204, %v138
    %v1207 = vsel %vm349, %v1205, -inf
    %1208 = vmax.xlane.f32.xlu0 %v1207
    %v1209 = vpop.xlane.xlu0 %1208
    %v1210 = vsel %vm349, %v1206, -inf
    %1211 = vmax.xlane.f32.xlu0 %v1210
    %v1212 = vpop.xlane.xlu0 %1211
    %v1213 = vsub.f32 %v1205, %v1209
    %v1214 = vsub.f32 %v1206, %v1212
    %v1215 = vmul.f32 %v1213, 1.442695
    %v1216 = vpow.pop %v1215
    %v1217 = vmul.f32 %v1214, 1.442695
    %v1218 = vpow.pop %v1217
    %v1219 = vsel %vm349, %v1216, 0.0
    %1220 = vadd.xlane.f32.xlu0 %v1219
    %v1221 = vpop.xlane.xlu0 %1220
    %v1222 = vsel %vm349, %v1218, 0.0
    %1223 = vadd.xlane.f32.xlu0 %v1222
    %v1224 = vpop.xlane.xlu0 %1223
    %v1225 = vrcp.pop %v1221
    %v1226 = vrcp.pop %v1224
    %v1227 = vmul.f32 %v1216, %v1225
    %v1228 = vmul.f32 %v1218, %v1226
    %1229 = vrot.lane.b32.xlu0 %v247, 40
    %v1230 = vpop.permute.xlu0 %1229
    %1231 = vrot.lane.b32.xlu0 %v252, 40
    %v1232 = vpop.permute.xlu0 %1231
    %v1236 = vsel %vm349, %v1227, 0
    %v1239 = vsel %vm349, %v1228, 0
    %1241 = vmatprep.subr.mxu0 0.0
    %1242 = vmatpush1.msra.mxu0 %v1230
    %1243 = vmatprep.subr.mxu0 0.0
    %1244 = vmatpush1.msra.mxu0 %v1232
    %1245 = vmatprep.subr.mxu0 0.0
    %1246 = vmatpush1.msra.mxu0 0.0
    %1247 = vmatprep.subr.mxu0 0.0
    %1248 = vmatpush1.msra.mxu0 0.0
    %1249 = vmatprep.subr.mxu0 0.0
    %1250 = vmatpush1.msra.mxu0 0.0
    %1251 = vmatprep.subr.mxu0 0.0
    %1252 = vmatpush1.msra.mxu0 0.0
    %1253 = vmatprep.subr.mxu0 0.0
    %1254 = vmatpush1.msra.mxu0 0.0
    %1255 = vmatprep.subr.mxu0 0.0
    %1256 = vmatpush1.msra.mxu0 0.0
    %1257 = vmatprep.subr.mxu0 0.0
    %1258 = vmatpush1.msra.mxu0 0.0
    %1259 = vmatprep.subr.mxu0 0.0
    %1260 = vmatpush1.msra.mxu0 0.0
    %1261 = vmatprep.subr.mxu0 0.0
    %1262 = vmatpush1.msra.mxu0 0.0
    %1263 = vmatprep.subr.mxu0 0.0
    %1264 = vmatpush1.msra.mxu0 0.0
    %1265 = vmatprep.subr.mxu0 0.0
    %1266 = vmatpush1.msra.mxu0 0.0
    %1267 = vmatprep.subr.mxu0 0.0
    %1268 = vmatpush1.msra.mxu0 0.0
    %1269 = vmatprep.subr.mxu0 0.0
    %1270 = vmatpush1.msra.mxu0 0.0
    %1271 = vmatprep.subr.mxu0 0.0
    %1272 = vmatpush1.msra.mxu0 0.0
    %1273 = vmatprep.subr.mxu0 0.0
    %1274 = vmatpush1.msra.mxu0 0.0
    %1275 = vmatprep.subr.mxu0 0.0
    %1276 = vmatpush1.msra.mxu0 0.0
    %1277 = vmatprep.subr.mxu0 0.0
    %1278 = vmatpush1.msra.mxu0 0.0
    %1279 = vmatprep.subr.mxu0 0.0
    %1280 = vmatpush1.msra.mxu0 0.0
    %1281 = vmatprep.subr.mxu0 0.0
    %1282 = vmatpush1.msra.mxu0 0.0
    %1283 = vmatprep.subr.mxu0 0.0
    %1284 = vmatpush1.msra.mxu0 0.0
    %1285 = vmatprep.subr.mxu0 0.0
    %1286 = vmatpush1.msra.mxu0 0.0
    %1287 = vmatprep.subr.mxu0 0.0
    %1288 = vmatpush1.msra.mxu0 0.0
    %1289 = vmatprep.subr.mxu0 0.0
    %1290 = vmatpush1.msra.mxu0 0.0
    %1291 = vmatprep.subr.mxu0 0.0
    %1292 = vmatpush1.msra.mxu0 0.0
    %1293 = vmatprep.subr.mxu0 0.0
    %1294 = vmatpush1.msra.mxu0 0.0
    %1295 = vmatprep.subr.mxu0 0.0
    %1296 = vmatpush1.msra.mxu0 0.0
    %1297 = vmatprep.subr.mxu0 0.0
    %1298 = vmatpush1.msra.mxu0 0.0
    %1299 = vmatprep.subr.mxu0 0.0
    %1300 = vmatpush1.msra.mxu0 0.0
    %1301 = vmatprep.subr.mxu0 0.0
    %1302 = vmatpush1.msra.mxu0 0.0
    %1303 = vmatprep.subr.mxu0 0.0
    %1304 = vmatpush1.msra.mxu0 0.0
    %1305 = vmatprep.mubr.f32.mxu0 0.0
    %1306 = vmatmul.mubr.f32.gmra.mrb[0].mxu0 %v1236
    %v1307 = vpop.f32.mrb[0].mxu0
    %v1308 = vadd.f32 0.0, %v1307
    %v1309 = vpop.f32.mrb[0].mxu0
    %1310 = vmatprep.mubr.f32.mxu0 0.0
    %1311 = vmatmul.mubr.f32.gmra.mrb[0].mxu0 %v1239
    %v1312 = vpop.f32.mrb[0].mxu0
    %v1313 = vadd.f32 0.0, %v1312
    %v1314 = vpop.f32.mrb[0].mxu0
    %1315 = vdwg.mxu0
    %v1317 = vsel %vm261, %v1308, 0
    %v1320 = vsel %vm261, %v1313, 0
    %1322 = vmatprep.subr.mxu0 0.0
    %1323 = vmatpush1.msra.mxu0 %v147
    %1324 = vmatprep.subr.mxu0 0.0
    %1325 = vmatpush1.msra.mxu0 0.0
    %1326 = vmatprep.subr.mxu0 0.0
    %1327 = vmatpush1.msra.mxu0 0.0
    %1328 = vmatprep.subr.mxu0 0.0
    %1329 = vmatpush1.msra.mxu0 0.0
    %1330 = vmatprep.subr.mxu0 0.0
    %1331 = vmatpush1.msra.mxu0 0.0
    %1332 = vmatprep.subr.mxu0 0.0
    %1333 = vmatpush1.msra.mxu0 0.0
    %1334 = vmatprep.subr.mxu0 0.0
    %1335 = vmatpush1.msra.mxu0 0.0
    %1336 = vmatprep.subr.mxu0 0.0
    %1337 = vmatpush1.msra.mxu0 0.0
    %1338 = vmatprep.subr.mxu0 0.0
    %1339 = vmatpush1.msra.mxu0 0.0
    %1340 = vmatprep.subr.mxu0 0.0
    %1341 = vmatpush1.msra.mxu0 0.0
    %1342 = vmatprep.subr.mxu0 0.0
    %1343 = vmatpush1.msra.mxu0 0.0
    %1344 = vmatprep.subr.mxu0 0.0
    %1345 = vmatpush1.msra.mxu0 0.0
    %1346 = vmatprep.subr.mxu0 0.0
    %1347 = vmatpush1.msra.mxu0 0.0
    %1348 = vmatprep.subr.mxu0 0.0
    %1349 = vmatpush1.msra.mxu0 0.0
    %1350 = vmatprep.subr.mxu0 0.0
    %1351 = vmatpush1.msra.mxu0 0.0
    %1352 = vmatprep.subr.mxu0 0.0
    %1353 = vmatpush1.msra.mxu0 0.0
    %1354 = vmatprep.subr.mxu0 0.0
    %1355 = vmatpush1.msra.mxu0 0.0
    %1356 = vmatprep.subr.mxu0 0.0
    %1357 = vmatpush1.msra.mxu0 0.0
    %1358 = vmatprep.subr.mxu0 0.0
    %1359 = vmatpush1.msra.mxu0 0.0
    %1360 = vmatprep.subr.mxu0 0.0
    %1361 = vmatpush1.msra.mxu0 0.0
    %1362 = vmatprep.subr.mxu0 0.0
    %1363 = vmatpush1.msra.mxu0 0.0
    %1364 = vmatprep.subr.mxu0 0.0
    %1365 = vmatpush1.msra.mxu0 0.0
    %1366 = vmatprep.subr.mxu0 0.0
    %1367 = vmatpush1.msra.mxu0 0.0
    %1368 = vmatprep.subr.mxu0 0.0
    %1369 = vmatpush1.msra.mxu0 0.0
    %1370 = vmatprep.subr.mxu0 0.0
    %1371 = vmatpush1.msra.mxu0 0.0
    %1372 = vmatprep.subr.mxu0 0.0
    %1373 = vmatpush1.msra.mxu0 0.0
    %1374 = vmatprep.subr.mxu0 0.0
    %1375 = vmatpush1.msra.mxu0 0.0
    %1376 = vmatprep.subr.mxu0 0.0
    %1377 = vmatpush1.msra.mxu0 0.0
    %1378 = vmatprep.subr.mxu0 0.0
    %1379 = vmatpush1.msra.mxu0 0.0
    %1380 = vmatprep.subr.mxu0 0.0
    %1381 = vmatpush1.msra.mxu0 0.0
    %1382 = vmatprep.subr.mxu0 0.0
    %1383 = vmatpush1.msra.mxu0 0.0
    %1384 = vmatprep.subr.mxu0 0.0
    %1385 = vmatpush1.msra.mxu0 0.0
    %1386 = vmatprep.mubr.f32.mxu0 0.0
    %1387 = vmatmul.mubr.f32.gmra.mrb[0].mxu0 %v1317
    %v1388 = vpop.f32.mrb[0].mxu0
    %v1389 = vadd.f32 0.0, %v1388
    %v1390 = vpop.f32.mrb[0].mxu0
    %1391 = vmatprep.mubr.f32.mxu0 0.0
    %1392 = vmatmul.mubr.f32.gmra.mrb[0].mxu0 %v1320
    %v1393 = vpop.f32.mrb[0].mxu0
    %v1394 = vadd.f32 0.0, %v1393
    %v1395 = vpop.f32.mrb[0].mxu0
    %1396 = vdwg.mxu0
    %v1397 = vadd.f32 %v1110, %v1389
    %v1398 = vadd.f32 %v1111, %v1394
    %v1400 = vlaneseq
    %v1401 = vshrl.u32 %v1400, 7
    %v1402 = vsub.s32 0, %v1401
    %v1403 = vrot.slane %v148, %v1402
    %v1405 = vadd.f32 %v1397, %v1403
    %v1406 = vadd.f32 %v1398, %v1403
    %v1407 = vadd.f32 %v135, %v1405
    %v1408 = vadd.f32 %v136, %v1406
    %v1409 = vsel %vm173, %v1407, 0.0
    %1410 = vadd.xlane.f32.xlu0 %v1409
    %v1411 = vpop.xlane.xlu0 %1410
    %v1412 = vsel %vm173, %v1408, 0.0
    %1413 = vadd.xlane.f32.xlu0 %v1412
    %v1414 = vpop.xlane.xlu0 %1413
    %v1415 = vrcp.pop 32.0
    %v1416 = vmul.f32 %v1411, %v1415
    %v1417 = vmul.f32 %v1414, %v1415
    %v1418 = vsub.f32 %v1407, %v1416
    %v1419 = vsub.f32 %v1408, %v1417
    %v1420 = vmul.f32 %v1418, %v1418
    %v1421 = vmul.f32 %v1419, %v1419
    %v1422 = vsel %vm173, %v1420, 0.0
    %1423 = vadd.xlane.f32.xlu0 %v1422
    %v1424 = vpop.xlane.xlu0 %1423
    %v1425 = vsel %vm173, %v1421, 0.0
    %1426 = vadd.xlane.f32.xlu0 %v1425
    %v1427 = vpop.xlane.xlu0 %1426
    %v1428 = vmul.f32 %v1424, %v1415
    %v1429 = vmul.f32 %v1427, %v1415
    %v1430 = vadd.f32 %v1428, 1e-05
    %v1431 = vadd.f32 %v1429, 1e-05
    %v1432 = vrsqrt.pop %v1430
    %v1433 = vrsqrt.pop %v1431
    %v1434 = vmul.f32 %v1418, %v1432
    %v1435 = vmul.f32 %v1419, %v1433
    %v1437 = vlaneseq
    %v1438 = vshrl.u32 %v1437, 7
    %v1439 = vsub.s32 0, %v1438
    %v1440 = vrot.slane %v163, %v1439
    %v1442 = vmul.f32 %v1434, %v1440
    %v1443 = vmul.f32 %v1435, %v1440
    %v1445 = vlaneseq
    %v1446 = vshrl.u32 %v1445, 7
    %v1447 = vsub.s32 0, %v1446
    %v1448 = vrot.slane %v164, %v1447
    %v1450 = vadd.f32 %v1442, %v1448
    %v1451 = vadd.f32 %v1443, %v1448
    %v1453 = vlaneseq
    %v1454 = vshrl.u32 %v1453, 7
    %v1455 = vsub.s32 0, %v1454
    %v1456 = vrot.slane %v153, %v1455
    %v1459 = vsel %vm173, %v1450, 0
    %v1462 = vsel %vm173, %v1451, 0
    %1464 = vmatprep.subr.mxu0 0.0
    %1465 = vmatpush1.msra.mxu0 %v149
    %1466 = vmatprep.subr.mxu0 0.0
    %1467 = vmatpush1.msra.mxu0 %v150
    %1468 = vmatprep.subr.mxu0 0.0
    %1469 = vmatpush1.msra.mxu0 %v151
    %1470 = vmatprep.subr.mxu0 0.0
    %1471 = vmatpush1.msra.mxu0 %v152
    %1472 = vmatprep.subr.mxu0 0.0
    %1473 = vmatpush1.msra.mxu0 0.0
    %1474 = vmatprep.subr.mxu0 0.0
    %1475 = vmatpush1.msra.mxu0 0.0
    %1476 = vmatprep.subr.mxu0 0.0
    %1477 = vmatpush1.msra.mxu0 0.0
    %1478 = vmatprep.subr.mxu0 0.0
    %1479 = vmatpush1.msra.mxu0 0.0
    %1480 = vmatprep.subr.mxu0 0.0
    %1481 = vmatpush1.msra.mxu0 0.0
    %1482 = vmatprep.subr.mxu0 0.0
    %1483 = vmatpush1.msra.mxu0 0.0
    %1484 = vmatprep.subr.mxu0 0.0
    %1485 = vmatpush1.msra.mxu0 0.0
    %1486 = vmatprep.subr.mxu0 0.0
    %1487 = vmatpush1.msra.mxu0 0.0
    %1488 = vmatprep.subr.mxu0 0.0
    %1489 = vmatpush1.msra.mxu0 0.0
    %1490 = vmatprep.subr.mxu0 0.0
    %1491 = vmatpush1.msra.mxu0 0.0
    %1492 = vmatprep.subr.mxu0 0.0
    %1493 = vmatpush1.msra.mxu0 0.0
    %1494 = vmatprep.subr.mxu0 0.0
    %1495 = vmatpush1.msra.mxu0 0.0
    %1496 = vmatprep.subr.mxu0 0.0
    %1497 = vmatpush1.msra.mxu0 0.0
    %1498 = vmatprep.subr.mxu0 0.0
    %1499 = vmatpush1.msra.mxu0 0.0
    %1500 = vmatprep.subr.mxu0 0.0
    %1501 = vmatpush1.msra.mxu0 0.0
    %1502 = vmatprep.subr.mxu0 0.0
    %1503 = vmatpush1.msra.mxu0 0.0
    %1504 = vmatprep.subr.mxu0 0.0
    %1505 = vmatpush1.msra.mxu0 0.0
    %1506 = vmatprep.subr.mxu0 0.0
    %1507 = vmatpush1.msra.mxu0 0.0
    %1508 = vmatprep.subr.mxu0 0.0
    %1509 = vmatpush1.msra.mxu0 0.0
    %1510 = vmatprep.subr.mxu0 0.0
    %1511 = vmatpush1.msra.mxu0 0.0
    %1512 = vmatprep.subr.mxu0 0.0
    %1513 = vmatpush1.msra.mxu0 0.0
    %1514 = vmatprep.subr.mxu0 0.0
    %1515 = vmatpush1.msra.mxu0 0.0
    %1516 = vmatprep.subr.mxu0 0.0
    %1517 = vmatpush1.msra.mxu0 0.0
    %1518 = vmatprep.subr.mxu0 0.0
    %1519 = vmatpush1.msra.mxu0 0.0
    %1520 = vmatprep.subr.mxu0 0.0
    %1521 = vmatpush1.msra.mxu0 0.0
    %1522 = vmatprep.subr.mxu0 0.0
    %1523 = vmatpush1.msra.mxu0 0.0
    %1524 = vmatprep.subr.mxu0 0.0
    %1525 = vmatpush1.msra.mxu0 0.0
    %1526 = vmatprep.subr.mxu0 0.0
    %1527 = vmatpush1.msra.mxu0 0.0
    %1528 = vmatprep.mubr.f32.mxu0 0.0
    %1529 = vmatmul.mubr.f32.gmra.mrb[0].mxu0 %v1459
    %v1530 = vpop.f32.mrb[0].mxu0
    %v1531 = vadd.f32 %v1456, %v1530
    %v1532 = vpop.f32.mrb[0].mxu0
    %1533 = vmatprep.mubr.f32.mxu0 0.0
    %1534 = vmatmul.mubr.f32.gmra.mrb[0].mxu0 %v1462
    %v1535 = vpop.f32.mrb[0].mxu0
    %v1536 = vadd.f32 %v1456, %v1535
    %v1537 = vpop.f32.mrb[0].mxu0
    %1538 = vdwg.mxu0
    %v1539 = vmax.f32 %v1531, 0.0
    %v1540 = vmax.f32 %v1536, 0.0
    %v1542 = vlaneseq
    %v1543 = vshrl.u32 %v1542, 7
    %v1544 = vsub.s32 0, %v1543
    %v1545 = vrot.slane %v162, %v1544
    %vm1547 = vcmask 523264
    %v1549 = vsel %vm1547, %v1539, 0
    %v1552 = vsel %vm1547, %v1540, 0
    %1554 = vmatprep.subr.mxu0 0.0
    %1555 = vmatpush1.msra.mxu0 %v154
    %1556 = vmatprep.subr.mxu0 0.0
    %1557 = vmatpush1.msra.mxu0 %v155
    %1558 = vmatprep.subr.mxu0 0.0
    %1559 = vmatpush1.msra.mxu0 %v156
    %1560 = vmatprep.subr.mxu0 0.0
    %1561 = vmatpush1.msra.mxu0 %v157
    %1562 = vmatprep.subr.mxu0 0.0
    %1563 = vmatpush1.msra.mxu0 %v158
    %1564 = vmatprep.subr.mxu0 0.0
    %1565 = vmatpush1.msra.mxu0 %v159
    %1566 = vmatprep.subr.mxu0 0.0
    %1567 = vmatpush1.msra.mxu0 %v160
    %1568 = vmatprep.subr.mxu0 0.0
    %1569 = vmatpush1.msra.mxu0 %v161
    %1570 = vmatprep.subr.mxu0 0.0
    %1571 = vmatpush1.msra.mxu0 0.0
    %1572 = vmatprep.subr.mxu0 0.0
    %1573 = vmatpush1.msra.mxu0 0.0
    %1574 = vmatprep.subr.mxu0 0.0
    %1575 = vmatpush1.msra.mxu0 0.0
    %1576 = vmatprep.subr.mxu0 0.0
    %1577 = vmatpush1.msra.mxu0 0.0
    %1578 = vmatprep.subr.mxu0 0.0
    %1579 = vmatpush1.msra.mxu0 0.0
    %1580 = vmatprep.subr.mxu0 0.0
    %1581 = vmatpush1.msra.mxu0 0.0
    %1582 = vmatprep.subr.mxu0 0.0
    %1583 = vmatpush1.msra.mxu0 0.0
    %1584 = vmatprep.subr.mxu0 0.0
    %1585 = vmatpush1.msra.mxu0 0.0
    %1586 = vmatprep.subr.mxu0 0.0
    %1587 = vmatpush1.msra.mxu0 0.0
    %1588 = vmatprep.subr.mxu0 0.0
    %1589 = vmatpush1.msra.mxu0 0.0
    %1590 = vmatprep.subr.mxu0 0.0
    %1591 = vmatpush1.msra.mxu0 0.0
    %1592 = vmatprep.subr.mxu0 0.0
    %1593 = vmatpush1.msra.mxu0 0.0
    %1594 = vmatprep.subr.mxu0 0.0
    %1595 = vmatpush1.msra.mxu0 0.0
    %1596 = vmatprep.subr.mxu0 0.0
    %1597 = vmatpush1.msra.mxu0 0.0
    %1598 = vmatprep.subr.mxu0 0.0
    %1599 = vmatpush1.msra.mxu0 0.0
    %1600 = vmatprep.subr.mxu0 0.0
    %1601 = vmatpush1.msra.mxu0 0.0
    %1602 = vmatprep.subr.mxu0 0.0
    %1603 = vmatpush1.msra.mxu0 0.0
    %1604 = vmatprep.subr.mxu0 0.0
    %1605 = vmatpush1.msra.mxu0 0.0
    %1606 = vmatprep.subr.mxu0 0.0
    %1607 = vmatpush1.msra.mxu0 0.0
    %1608 = vmatprep.subr.mxu0 0.0
    %1609 = vmatpush1.msra.mxu0 0.0
    %1610 = vmatprep.subr.mxu0 0.0
    %1611 = vmatpush1.msra.mxu0 0.0
    %1612 = vmatprep.subr.mxu0 0.0
    %1613 = vmatpush1.msra.mxu0 0.0
    %1614 = vmatprep.subr.mxu0 0.0
    %1615 = vmatpush1.msra.mxu0 0.0
    %1616 = vmatprep.subr.mxu0 0.0
    %1617 = vmatpush1.msra.mxu0 0.0
    %1618 = vmatprep.mubr.f32.mxu0 0.0
    %1619 = vmatmul.mubr.f32.gmra.mrb[0].mxu0 %v1549
    %v1620 = vpop.f32.mrb[0].mxu0
    %v1621 = vadd.f32 %v1545, %v1620
    %v1622 = vpop.f32.mrb[0].mxu0
    %1623 = vmatprep.mubr.f32.mxu0 0.0
    %1624 = vmatmul.mubr.f32.gmra.mrb[0].mxu0 %v1552
    %v1625 = vpop.f32.mrb[0].mxu0
    %v1626 = vadd.f32 %v1545, %v1625
    %v1627 = vpop.f32.mrb[0].mxu0
    %1628 = vdwg.mxu0
    %v1629 = vadd.f32 %v1450, %v1621
    %v1630 = vadd.f32 %v1451, %v1626
    %v1631 = vsel %vm173, %v1629, 0.0
    %1632 = vadd.xlane.f32.xlu0 %v1631
    %v1633 = vpop.xlane.xlu0 %1632
    %v1634 = vsel %vm173, %v1630, 0.0
    %1635 = vadd.xlane.f32.xlu0 %v1634
    %v1636 = vpop.xlane.xlu0 %1635
    %v1637 = vmul.f32 %v1633, %v1415
    %v1638 = vmul.f32 %v1636, %v1415
    %v1639 = vsub.f32 %v1629, %v1637
    %v1640 = vsub.f32 %v1630, %v1638
    %v1641 = vmul.f32 %v1639, %v1639
    %v1642 = vmul.f32 %v1640, %v1640
    %v1643 = vsel %vm173, %v1641, 0.0
    %1644 = vadd.xlane.f32.xlu0 %v1643
    %v1645 = vpop.xlane.xlu0 %1644
    %v1646 = vsel %vm173, %v1642, 0.0
    %1647 = vadd.xlane.f32.xlu0 %v1646
    %v1648 = vpop.xlane.xlu0 %1647
    %v1649 = vmul.f32 %v1645, %v1415
    %v1650 = vmul.f32 %v1648, %v1415
    %v1651 = vadd.f32 %v1649, 1e-05
    %v1652 = vadd.f32 %v1650, 1e-05
    %v1653 = vrsqrt.pop %v1651
    %v1654 = vrsqrt.pop %v1652
    %v1655 = vmul.f32 %v1639, %v1653
    %v1656 = vmul.f32 %v1640, %v1654
    %v1658 = vlaneseq
    %v1659 = vshrl.u32 %v1658, 7
    %v1660 = vsub.s32 0, %v1659
    %v1661 = vrot.slane %v165, %v1660
    %v1663 = vmul.f32 %v1655, %v1661
    %v1664 = vmul.f32 %v1656, %v1661
    %v1666 = vlaneseq
    %v1667 = vshrl.u32 %v1666, 7
    %v1668 = vsub.s32 0, %v1667
    %v1669 = vrot.slane %v166, %v1668
    %v1671 = vadd.f32 %v1663, %v1669
    %v1672 = vadd.f32 %v1664, %v1669
    %v1673 = vld [vmem:[%s14] sm:$0xff]
    %v1674 = vld [vmem:[%s14 + $0x8] sm:$0xff]
    %v1675 = vld [vmem:[%s14 + $0x10] sm:$0xff]
    %v1676 = vld [vmem:[%s14 + $0x18] sm:$0xff]
    %v1677 = vld [vmem:[%s15] sm:$0x1]
    %v1678 = vld [vmem:[%s16] sm:$0xff]
    %v1679 = vld [vmem:[%s16 + $0x8] sm:$0xff]
    %v1680 = vld [vmem:[%s16 + $0x10] sm:$0xff]
    %v1681 = vld [vmem:[%s16 + $0x18] sm:$0xff]
    %v1682 = vld [vmem:[%s17] sm:$0x1]
    %v1683 = vld [vmem:[%s18] sm:$0xff]
    %v1684 = vld [vmem:[%s18 + $0x8] sm:$0xff]
    %v1685 = vld [vmem:[%s18 + $0x10] sm:$0xff]
    %v1686 = vld [vmem:[%s18 + $0x18] sm:$0xff]
    %v1687 = vld [vmem:[%s19] sm:$0x1]
    %v1688 = vld [vmem:[%s20] sm:$0xff]
    %v1689 = vld [vmem:[%s20 + $0x8] sm:$0xff]
    %v1690 = vld [vmem:[%s20 + $0x10] sm:$0xff]
    %v1691 = vld [vmem:[%s20 + $0x18] sm:$0xff]
    %v1692 = vld [vmem:[%s20 + $0x20] sm:$0xff]
    %v1693 = vld [vmem:[%s20 + $0x28] sm:$0xff]
    %v1694 = vld [vmem:[%s20 + $0x30] sm:$0xff]
    %v1695 = vld [vmem:[%s20 + $0x38] sm:$0xff]
    %v1696 = vld [vmem:[%s21] sm:$0x1]
    %v1697 = vld [vmem:[%s22] sm:$0x1]
    %v1698 = vld [vmem:[%s23] sm:$0x1]
    %v1699 = vld [vmem:[%s24] sm:$0x1]
    %v1700 = vld [vmem:[%s25] sm:$0x1]
    %v1702 = vlaneseq
    %v1703 = vshrl.u32 %v1702, 7
    %v1704 = vsub.s32 0, %v1703
    %v1705 = vrot.slane %v1677, %v1704
    %v1708 = vsel %vm173, %v1671, 0
    %v1711 = vsel %vm173, %v1672, 0
    %1713 = vmatprep.subr.mxu0 0.0
    %1714 = vmatpush1.msra.mxu0 %v1673
    %1715 = vmatprep.subr.mxu0 0.0
    %1716 = vmatpush1.msra.mxu0 %v1674
    %1717 = vmatprep.subr.mxu0 0.0
    %1718 = vmatpush1.msra.mxu0 %v1675
    %1719 = vmatprep.subr.mxu0 0.0
    %1720 = vmatpush1.msra.mxu0 %v1676
    %1721 = vmatprep.subr.mxu0 0.0
    %1722 = vmatpush1.msra.mxu0 0.0
    %1723 = vmatprep.subr.mxu0 0.0
    %1724 = vmatpush1.msra.mxu0 0.0
    %1725 = vmatprep.subr.mxu0 0.0
    %1726 = vmatpush1.msra.mxu0 0.0
    %1727 = vmatprep.subr.mxu0 0.0
    %1728 = vmatpush1.msra.mxu0 0.0
    %1729 = vmatprep.subr.mxu0 0.0
    %1730 = vmatpush1.msra.mxu0 0.0
    %1731 = vmatprep.subr.mxu0 0.0
    %1732 = vmatpush1.msra.mxu0 0.0
    %1733 = vmatprep.subr.mxu0 0.0
    %1734 = vmatpush1.msra.mxu0 0.0
    %1735 = vmatprep.subr.mxu0 0.0
    %1736 = vmatpush1.msra.mxu0 0.0
    %1737 = vmatprep.subr.mxu0 0.0
    %1738 = vmatpush1.msra.mxu0 0.0
    %1739 = vmatprep.subr.mxu0 0.0
    %1740 = vmatpush1.msra.mxu0 0.0
    %1741 = vmatprep.subr.mxu0 0.0
    %1742 = vmatpush1.msra.mxu0 0.0
    %1743 = vmatprep.subr.mxu0 0.0
    %1744 = vmatpush1.msra.mxu0 0.0
    %1745 = vmatprep.subr.mxu0 0.0
    %1746 = vmatpush1.msra.mxu0 0.0
    %1747 = vmatprep.subr.mxu0 0.0
    %1748 = vmatpush1.msra.mxu0 0.0
    %1749 = vmatprep.subr.mxu0 0.0
    %1750 = vmatpush1.msra.mxu0 0.0
    %1751 = vmatprep.subr.mxu0 0.0
    %1752 = vmatpush1.msra.mxu0 0.0
    %1753 = vmatprep.subr.mxu0 0.0
    %1754 = vmatpush1.msra.mxu0 0.0
    %1755 = vmatprep.subr.mxu0 0.0
    %1756 = vmatpush1.msra.mxu0 0.0
    %1757 = vmatprep.subr.mxu0 0.0
    %1758 = vmatpush1.msra.mxu0 0.0
    %1759 = vmatprep.subr.mxu0 0.0
    %1760 = vmatpush1.msra.mxu0 0.0
    %1761 = vmatprep.subr.mxu0 0.0
    %1762 = vmatpush1.msra.mxu0 0.0
    %1763 = vmatprep.subr.mxu0 0.0
    %1764 = vmatpush1.msra.mxu0 0.0
    %1765 = vmatprep.subr.mxu0 0.0
    %1766 = vmatpush1.msra.mxu0 0.0
    %1767 = vmatprep.subr.mxu0 0.0
    %1768 = vmatpush1.msra.mxu0 0.0
    %1769 = vmatprep.subr.mxu0 0.0
    %1770 = vmatpush1.msra.mxu0 0.0
    %1771 = vmatprep.subr.mxu0 0.0
    %1772 = vmatpush1.msra.mxu0 0.0
    %1773 = vmatprep.subr.mxu0 0.0
    %1774 = vmatpush1.msra.mxu0 0.0
    %1775 = vmatprep.subr.mxu0 0.0
    %1776 = vmatpush1.msra.mxu0 0.0
    %1777 = vmatprep.mubr.f32.mxu0 0.0
    %1778 = vmatmul.mubr.f32.gmra.mrb[0].mxu0 %v1708
    %v1779 = vpop.f32.mrb[0].mxu0
    %v1780 = vadd.f32 %v1705, %v1779
    %v1781 = vpop.f32.mrb[0].mxu0
    %1782 = vmatprep.mubr.f32.mxu0 0.0
    %1783 = vmatmul.mubr.f32.gmra.mrb[0].mxu0 %v1711
    %v1784 = vpop.f32.mrb[0].mxu0
    %v1785 = vadd.f32 %v1705, %v1784
    %v1786 = vpop.f32.mrb[0].mxu0
    %1787 = vdwg.mxu0
    %1790 = vrot.lane.b32.xlu0 %v1780, 96
    %v1791 = vpop.permute.xlu0 %1790
    %1792 = vrot.lane.b32.xlu0 %v1785, 96
    %v1793 = vpop.permute.xlu0 %1792
    %v1794 = vsel %vm261, %v1780, 0
    %v1796 = vsel %vm261, %v1785, 0
    %v1798 = vsel %vm261, %v1791, 0
    %v1800 = vsel %vm261, %v1793, 0
    %1802 = vmatprep.subr.mxu0 0.0
    %1803 = vmatpush1.xpose.msra.mxu0 %v1798
    %1804 = vmatprep.subr.mxu0 0.0
    %1805 = vmatpush1.xpose.msra.mxu0 %v1800
    %1806 = vmatprep.subr.mxu0 0.0
    %1807 = vmatpush1.xpose.msra.mxu0 0.0
    %1808 = vmatprep.subr.mxu0 0.0
    %1809 = vmatpush1.xpose.msra.mxu0 0.0
    %1810 = vmatprep.subr.mxu0 0.0
    %1811 = vmatpush1.xpose.msra.mxu0 0.0
    %1812 = vmatprep.subr.mxu0 0.0
    %1813 = vmatpush1.xpose.msra.mxu0 0.0
    %1814 = vmatprep.subr.mxu0 0.0
    %1815 = vmatpush1.xpose.msra.mxu0 0.0
    %1816 = vmatprep.subr.mxu0 0.0
    %1817 = vmatpush1.xpose.msra.mxu0 0.0
    %1818 = vmatprep.subr.mxu0 0.0
    %1819 = vmatpush1.xpose.msra.mxu0 0.0
    %1820 = vmatprep.subr.mxu0 0.0
    %1821 = vmatpush1.xpose.msra.mxu0 0.0
    %1822 = vmatprep.subr.mxu0 0.0
    %1823 = vmatpush1.xpose.msra.mxu0 0.0
    %1824 = vmatprep.subr.mxu0 0.0
    %1825 = vmatpush1.xpose.msra.mxu0 0.0
    %1826 = vmatprep.subr.mxu0 0.0
    %1827 = vmatpush1.xpose.msra.mxu0 0.0
    %1828 = vmatprep.subr.mxu0 0.0
    %1829 = vmatpush1.xpose.msra.mxu0 0.0
    %1830 = vmatprep.subr.mxu0 0.0
    %1831 = vmatpush1.xpose.msra.mxu0 0.0
    %1832 = vmatprep.subr.mxu0 0.0
    %1833 = vmatpush1.xpose.msra.mxu0 0.0
    %1834 = vmatprep.subr.mxu0 0.0
    %1835 = vmatpush1.xpose.msra.mxu0 0.0
    %1836 = vmatprep.subr.mxu0 0.0
    %1837 = vmatpush1.xpose.msra.mxu0 0.0
    %1838 = vmatprep.subr.mxu0 0.0
    %1839 = vmatpush1.xpose.msra.mxu0 0.0
    %1840 = vmatprep.subr.mxu0 0.0
    %1841 = vmatpush1.xpose.msra.mxu0 0.0
    %1842 = vmatprep.subr.mxu0 0.0
    %1843 = vmatpush1.xpose.msra.mxu0 0.0
    %1844 = vmatprep.subr.mxu0 0.0
    %1845 = vmatpush1.xpose.msra.mxu0 0.0
    %1846 = vmatprep.subr.mxu0 0.0
    %1847 = vmatpush1.xpose.msra.mxu0 0.0
    %1848 = vmatprep.subr.mxu0 0.0
    %1849 = vmatpush1.xpose.msra.mxu0 0.0
    %1850 = vmatprep.subr.mxu0 0.0
    %1851 = vmatpush1.xpose.msra.mxu0 0.0
    %1852 = vmatprep.subr.mxu0 0.0
    %1853 = vmatpush1.xpose.msra.mxu0 0.0
    %1854 = vmatprep.subr.mxu0 0.0
    %1855 = vmatpush1.xpose.msra.mxu0 0.0
    %1856 = vmatprep.subr.mxu0 0.0
    %1857 = vmatpush1.xpose.msra.mxu0 0.0
    %1858 = vmatprep.subr.mxu0 0.0
    %1859 = vmatpush1.xpose.msra.mxu0 0.0
    %1860 = vmatprep.subr.mxu0 0.0
    %1861 = vmatpush1.xpose.msra.mxu0 0.0
    %1862 = vmatprep.subr.mxu0 0.0
    %1863 = vmatpush1.xpose.msra.mxu0 0.0
    %1864 = vmatprep.subr.mxu0 0.0
    %1865 = vmatpush1.xpose.msra.mxu0 0.0
    %1866 = vmatprep.mubr.f32.mxu0 0.0
    %1867 = vmatmul.mubr.f32.gmra.mrb[0].mxu0 %v1794
    %v1868 = vpop.f32.mrb[0].mxu0
    %v1869 = vadd.f32 0.0, %v1868
    %v1870 = vpop.f32.mrb[0].mxu0
    %1871 = vmatprep.mubr.f32.mxu0 0.0
    %1872 = vmatmul.mubr.f32.gmra.mrb[0].mxu0 %v1796
    %v1873 = vpop.f32.mrb[0].mxu0
    %v1874 = vadd.f32 0.0, %v1873
    %v1875 = vpop.f32.mrb[0].mxu0
    %1876 = vdwg.mxu0
    %v1877 = vmul.f32 %v1869, 0.35355338
    %v1878 = vmul.f32 %v1874, 0.35355338
    %v1879 = vadd.f32 %v1877, %v137
    %v1880 = vadd.f32 %v1878, %v138
    %v1881 = vsel %vm349, %v1879, -inf
    %1882 = vmax.xlane.f32.xlu0 %v1881
    %v1883 = vpop.xlane.xlu0 %1882
    %v1884 = vsel %vm349, %v1880, -inf
    %1885 = vmax.xlane.f32.xlu0 %v1884
    %v1886 = vpop.xlane.xlu0 %1885
    %v1887 = vsub.f32 %v1879, %v1883
    %v1888 = vsub.f32 %v1880, %v1886
    %v1889 = vmul.f32 %v1887, 1.442695
    %v1890 = vpow.pop %v1889
    %v1891 = vmul.f32 %v1888, 1.442695
    %v1892 = vpow.pop %v1891
    %v1893 = vsel %vm349, %v1890, 0.0
    %1894 = vadd.xlane.f32.xlu0 %v1893
    %v1895 = vpop.xlane.xlu0 %1894
    %v1896 = vsel %vm349, %v1892, 0.0
    %1897 = vadd.xlane.f32.xlu0 %v1896
    %v1898 = vpop.xlane.xlu0 %1897
    %v1899 = vrcp.pop %v1895
    %v1900 = vrcp.pop %v1898
    %v1901 = vmul.f32 %v1890, %v1899
    %v1902 = vmul.f32 %v1892, %v1900
    %1903 = vrot.lane.b32.xlu0 %v1780, 64
    %v1904 = vpop.permute.xlu0 %1903
    %1905 = vrot.lane.b32.xlu0 %v1785, 64
    %v1906 = vpop.permute.xlu0 %1905
    %v1910 = vsel %vm349, %v1901, 0
    %v1913 = vsel %vm349, %v1902, 0
    %1915 = vmatprep.subr.mxu0 0.0
    %1916 = vmatpush1.msra.mxu0 %v1904
    %1917 = vmatprep.subr.mxu0 0.0
    %1918 = vmatpush1.msra.mxu0 %v1906
    %1919 = vmatprep.subr.mxu0 0.0
    %1920 = vmatpush1.msra.mxu0 0.0
    %1921 = vmatprep.subr.mxu0 0.0
    %1922 = vmatpush1.msra.mxu0 0.0
    %1923 = vmatprep.subr.mxu0 0.0
    %1924 = vmatpush1.msra.mxu0 0.0
    %1925 = vmatprep.subr.mxu0 0.0
    %1926 = vmatpush1.msra.mxu0 0.0
    %1927 = vmatprep.subr.mxu0 0.0
    %1928 = vmatpush1.msra.mxu0 0.0
    %1929 = vmatprep.subr.mxu0 0.0
    %1930 = vmatpush1.msra.mxu0 0.0
    %1931 = vmatprep.subr.mxu0 0.0
    %1932 = vmatpush1.msra.mxu0 0.0
    %1933 = vmatprep.subr.mxu0 0.0
    %1934 = vmatpush1.msra.mxu0 0.0
    %1935 = vmatprep.subr.mxu0 0.0
    %1936 = vmatpush1.msra.mxu0 0.0
    %1937 = vmatprep.subr.mxu0 0.0
    %1938 = vmatpush1.msra.mxu0 0.0
    %1939 = vmatprep.subr.mxu0 0.0
    %1940 = vmatpush1.msra.mxu0 0.0
    %1941 = vmatprep.subr.mxu0 0.0
    %1942 = vmatpush1.msra.mxu0 0.0
    %1943 = vmatprep.subr.mxu0 0.0
    %1944 = vmatpush1.msra.mxu0 0.0
    %1945 = vmatprep.subr.mxu0 0.0
    %1946 = vmatpush1.msra.mxu0 0.0
    %1947 = vmatprep.subr.mxu0 0.0
    %1948 = vmatpush1.msra.mxu0 0.0
    %1949 = vmatprep.subr.mxu0 0.0
    %1950 = vmatpush1.msra.mxu0 0.0
    %1951 = vmatprep.subr.mxu0 0.0
    %1952 = vmatpush1.msra.mxu0 0.0
    %1953 = vmatprep.subr.mxu0 0.0
    %1954 = vmatpush1.msra.mxu0 0.0
    %1955 = vmatprep.subr.mxu0 0.0
    %1956 = vmatpush1.msra.mxu0 0.0
    %1957 = vmatprep.subr.mxu0 0.0
    %1958 = vmatpush1.msra.mxu0 0.0
    %1959 = vmatprep.subr.mxu0 0.0
    %1960 = vmatpush1.msra.mxu0 0.0
    %1961 = vmatprep.subr.mxu0 0.0
    %1962 = vmatpush1.msra.mxu0 0.0
    %1963 = vmatprep.subr.mxu0 0.0
    %1964 = vmatpush1.msra.mxu0 0.0
    %1965 = vmatprep.subr.mxu0 0.0
    %1966 = vmatpush1.msra.mxu0 0.0
    %1967 = vmatprep.subr.mxu0 0.0
    %1968 = vmatpush1.msra.mxu0 0.0
    %1969 = vmatprep.subr.mxu0 0.0
    %1970 = vmatpush1.msra.mxu0 0.0
    %1971 = vmatprep.subr.mxu0 0.0
    %1972 = vmatpush1.msra.mxu0 0.0
    %1973 = vmatprep.subr.mxu0 0.0
    %1974 = vmatpush1.msra.mxu0 0.0
    %1975 = vmatprep.subr.mxu0 0.0
    %1976 = vmatpush1.msra.mxu0 0.0
    %1977 = vmatprep.subr.mxu0 0.0
    %1978 = vmatpush1.msra.mxu0 0.0
    %1979 = vmatprep.mubr.f32.mxu0 0.0
    %1980 = vmatmul.mubr.f32.gmra.mrb[0].mxu0 %v1910
    %v1981 = vpop.f32.mrb[0].mxu0
    %v1982 = vadd.f32 0.0, %v1981
    %v1983 = vpop.f32.mrb[0].mxu0
    %1984 = vmatprep.mubr.f32.mxu0 0.0
    %1985 = vmatmul.mubr.f32.gmra.mrb[0].mxu0 %v1913
    %v1986 = vpop.f32.mrb[0].mxu0
    %v1987 = vadd.f32 0.0, %v1986
    %v1988 = vpop.f32.mrb[0].mxu0
    %1989 = vdwg.mxu0
    %1990 = vrot.lane.b32.xlu0 %v1780, 120
    %v1991 = vpop.permute.xlu0 %1990
    %1992 = vrot.lane.b32.xlu0 %v1785, 120
    %v1993 = vpop.permute.xlu0 %1992
    %1994 = vrot.lane.b32.xlu0 %v1780, 88
    %v1995 = vpop.permute.xlu0 %1994
    %1996 = vrot.lane.b32.xlu0 %v1785, 88
    %v1997 = vpop.permute.xlu0 %1996
    %v1998 = vsel %vm261, %v1991, 0
    %v2000 = vsel %vm261, %v1993, 0
    %v2002 = vsel %vm261, %v1995, 0
    %v2004 = vsel %vm261, %v1997, 0
    %2006 = vmatprep.subr.mxu0 0.0
    %2007 = vmatpush1.xpose.msra.mxu0 %v2002
    %2008 = vmatprep.subr.mxu0 0.0
    %2009 = vmatpush1.xpose.msra.mxu0 %v2004
    %2010 = vmatprep.subr.mxu0 0.0
    %2011 = vmatpush1.xpose.msra.mxu0 0.0
    %2012 = vmatprep.subr.mxu0 0.0
    %2013 = vmatpush1.xpose.msra.mxu0 0.0
    %2014 = vmatprep.subr.mxu0 0.0
    %2015 = vmatpush1.xpose.msra.mxu0 0.0
    %2016 = vmatprep.subr.mxu0 0.0
    %2017 = vmatpush1.xpose.msra.mxu0 0.0
    %2018 = vmatprep.subr.mxu0 0.0
    %2019 = vmatpush1.xpose.msra.mxu0 0.0
    %2020 = vmatprep.subr.mxu0 0.0
    %2021 = vmatpush1.xpose.msra.mxu0 0.0
    %2022 = vmatprep.subr.mxu0 0.0
    %2023 = vmatpush1.xpose.msra.mxu0 0.0
    %2024 = vmatprep.subr.mxu0 0.0
    %2025 = vmatpush1.xpose.msra.mxu0 0.0
    %2026 = vmatprep.subr.mxu0 0.0
    %2027 = vmatpush1.xpose.msra.mxu0 0.0
    %2028 = vmatprep.subr.mxu0 0.0
    %2029 = vmatpush1.xpose.msra.mxu0 0.0
    %2030 = vmatprep.subr.mxu0 0.0
    %2031 = vmatpush1.xpose.msra.mxu0 0.0
    %2032 = vmatprep.subr.mxu0 0.0
    %2033 = vmatpush1.xpose.msra.mxu0 0.0
    %2034 = vmatprep.subr.mxu0 0.0
    %2035 = vmatpush1.xpose.msra.mxu0 0.0
    %2036 = vmatprep.subr.mxu0 0.0
    %2037 = vmatpush1.xpose.msra.mxu0 0.0
    %2038 = vmatprep.subr.mxu0 0.0
    %2039 = vmatpush1.xpose.msra.mxu0 0.0
    %2040 = vmatprep.subr.mxu0 0.0
    %2041 = vmatpush1.xpose.msra.mxu0 0.0
    %2042 = vmatprep.subr.mxu0 0.0
    %2043 = vmatpush1.xpose.msra.mxu0 0.0
    %2044 = vmatprep.subr.mxu0 0.0
    %2045 = vmatpush1.xpose.msra.mxu0 0.0
    %2046 = vmatprep.subr.mxu0 0.0
    %2047 = vmatpush1.xpose.msra.mxu0 0.0
    %2048 = vmatprep.subr.mxu0 0.0
    %2049 = vmatpush1.xpose.msra.mxu0 0.0
    %2050 = vmatprep.subr.mxu0 0.0
    %2051 = vmatpush1.xpose.msra.mxu0 0.0
    %2052 = vmatprep.subr.mxu0 0.0
    %2053 = vmatpush1.xpose.msra.mxu0 0.0
    %2054 = vmatprep.subr.mxu0 0.0
    %2055 = vmatpush1.xpose.msra.mxu0 0.0
    %2056 = vmatprep.subr.mxu0 0.0
    %2057 = vmatpush1.xpose.msra.mxu0 0.0
    %2058 = vmatprep.subr.mxu0 0.0
    %2059 = vmatpush1.xpose.msra.mxu0 0.0
    %2060 = vmatprep.subr.mxu0 0.0
    %2061 = vmatpush1.xpose.msra.mxu0 0.0
    %2062 = vmatprep.subr.mxu0 0.0
    %2063 = vmatpush1.xpose.msra.mxu0 0.0
    %2064 = vmatprep.subr.mxu0 0.0
    %2065 = vmatpush1.xpose.msra.mxu0 0.0
    %2066 = vmatprep.subr.mxu0 0.0
    %2067 = vmatpush1.xpose.msra.mxu0 0.0
    %2068 = vmatprep.subr.mxu0 0.0
    %2069 = vmatpush1.xpose.msra.mxu0 0.0
    %2070 = vmatprep.mubr.f32.mxu0 0.0
    %2071 = vmatmul.mubr.f32.gmra.mrb[0].mxu0 %v1998
    %v2072 = vpop.f32.mrb[0].mxu0
    %v2073 = vadd.f32 0.0, %v2072
    %v2074 = vpop.f32.mrb[0].mxu0
    %2075 = vmatprep.mubr.f32.mxu0 0.0
    %2076 = vmatmul.mubr.f32.gmra.mrb[0].mxu0 %v2000
    %v2077 = vpop.f32.mrb[0].mxu0
    %v2078 = vadd.f32 0.0, %v2077
    %v2079 = vpop.f32.mrb[0].mxu0
    %2080 = vdwg.mxu0
    %v2081 = vmul.f32 %v2073, 0.35355338
    %v2082 = vmul.f32 %v2078, 0.35355338
    %v2083 = vadd.f32 %v2081, %v137
    %v2084 = vadd.f32 %v2082, %v138
    %v2085 = vsel %vm349, %v2083, -inf
    %2086 = vmax.xlane.f32.xlu0 %v2085
    %v2087 = vpop.xlane.xlu0 %2086
    %v2088 = vsel %vm349, %v2084, -inf
    %2089 = vmax.xlane.f32.xlu0 %v2088
    %v2090 = vpop.xlane.xlu0 %2089
    %v2091 = vsub.f32 %v2083, %v2087
    %v2092 = vsub.f32 %v2084, %v2090
    %v2093 = vmul.f32 %v2091, 1.442695
    %v2094 = vpow.pop %v2093
    %v2095 = vmul.f32 %v2092, 1.442695
    %v2096 = vpow.pop %v2095
    %v2097 = vsel %vm349, %v2094, 0.0
    %2098 = vadd.xlane.f32.xlu0 %v2097
    %v2099 = vpop.xlane.xlu0 %2098
    %v2100 = vsel %vm349, %v2096, 0.0
    %2101 = vadd.xlane.f32.xlu0 %v2100
    %v2102 = vpop.xlane.xlu0 %2101
    %v2103 = vrcp.pop %v2099
    %v2104 = vrcp.pop %v2102
    %v2105 = vmul.f32 %v2094, %v2103
    %v2106 = vmul.f32 %v2096, %v2104
    %2107 = vrot.lane.b32.xlu0 %v1780, 56
    %v2108 = vpop.permute.xlu0 %2107
    %2109 = vrot.lane.b32.xlu0 %v1785, 56
    %v2110 = vpop.permute.xlu0 %2109
    %v2114 = vsel %vm349, %v2105, 0
    %v2117 = vsel %vm349, %v2106, 0
    %2119 = vmatprep.subr.mxu0 0.0
    %2120 = vmatpush1.msra.mxu0 %v2108
    %2121 = vmatprep.subr.mxu0 0.0
    %2122 = vmatpush1.msra.mxu0 %v2110
    %2123 = vmatprep.subr.mxu0 0.0
    %2124 = vmatpush1.msra.mxu0 0.0
    %2125 = vmatprep.subr.mxu0 0.0
    %2126 = vmatpush1.msra.mxu0 0.0
    %2127 = vmatprep.subr.mxu0 0.0
    %2128 = vmatpush1.msra.mxu0 0.0
    %2129 = vmatprep.subr.mxu0 0.0
    %2130 = vmatpush1.msra.mxu0 0.0
    %2131 = vmatprep.subr.mxu0 0.0
    %2132 = vmatpush1.msra.mxu0 0.0
    %2133 = vmatprep.subr.mxu0 0.0
    %2134 = vmatpush1.msra.mxu0 0.0
    %2135 = vmatprep.subr.mxu0 0.0
    %2136 = vmatpush1.msra.mxu0 0.0
    %2137 = vmatprep.subr.mxu0 0.0
    %2138 = vmatpush1.msra.mxu0 0.0
    %2139 = vmatprep.subr.mxu0 0.0
    %2140 = vmatpush1.msra.mxu0 0.0
    %2141 = vmatprep.subr.mxu0 0.0
    %2142 = vmatpush1.msra.mxu0 0.0
    %2143 = vmatprep.subr.mxu0 0.0
    %2144 = vmatpush1.msra.mxu0 0.0
    %2145 = vmatprep.subr.mxu0 0.0
    %2146 = vmatpush1.msra.mxu0 0.0
    %2147 = vmatprep.subr.mxu0 0.0
    %2148 = vmatpush1.msra.mxu0 0.0
    %2149 = vmatprep.subr.mxu0 0.0
    %2150 = vmatpush1.msra.mxu0 0.0
    %2151 = vmatprep.subr.mxu0 0.0
    %2152 = vmatpush1.msra.mxu0 0.0
    %2153 = vmatprep.subr.mxu0 0.0
    %2154 = vmatpush1.msra.mxu0 0.0
    %2155 = vmatprep.subr.mxu0 0.0
    %2156 = vmatpush1.msra.mxu0 0.0
    %2157 = vmatprep.subr.mxu0 0.0
    %2158 = vmatpush1.msra.mxu0 0.0
    %2159 = vmatprep.subr.mxu0 0.0
    %2160 = vmatpush1.msra.mxu0 0.0
    %2161 = vmatprep.subr.mxu0 0.0
    %2162 = vmatpush1.msra.mxu0 0.0
    %2163 = vmatprep.subr.mxu0 0.0
    %2164 = vmatpush1.msra.mxu0 0.0
    %2165 = vmatprep.subr.mxu0 0.0
    %2166 = vmatpush1.msra.mxu0 0.0
    %2167 = vmatprep.subr.mxu0 0.0
    %2168 = vmatpush1.msra.mxu0 0.0
    %2169 = vmatprep.subr.mxu0 0.0
    %2170 = vmatpush1.msra.mxu0 0.0
    %2171 = vmatprep.subr.mxu0 0.0
    %2172 = vmatpush1.msra.mxu0 0.0
    %2173 = vmatprep.subr.mxu0 0.0
    %2174 = vmatpush1.msra.mxu0 0.0
    %2175 = vmatprep.subr.mxu0 0.0
    %2176 = vmatpush1.msra.mxu0 0.0
    %2177 = vmatprep.subr.mxu0 0.0
    %2178 = vmatpush1.msra.mxu0 0.0
    %2179 = vmatprep.subr.mxu0 0.0
    %2180 = vmatpush1.msra.mxu0 0.0
    %2181 = vmatprep.subr.mxu0 0.0
    %2182 = vmatpush1.msra.mxu0 0.0
    %2183 = vmatprep.mubr.f32.mxu0 0.0
    %2184 = vmatmul.mubr.f32.gmra.mrb[0].mxu0 %v2114
    %v2185 = vpop.f32.mrb[0].mxu0
    %v2186 = vadd.f32 0.0, %v2185
    %v2187 = vpop.f32.mrb[0].mxu0
    %2188 = vmatprep.mubr.f32.mxu0 0.0
    %2189 = vmatmul.mubr.f32.gmra.mrb[0].mxu0 %v2117
    %v2190 = vpop.f32.mrb[0].mxu0
    %v2191 = vadd.f32 0.0, %v2190
    %v2192 = vpop.f32.mrb[0].mxu0
    %2193 = vdwg.mxu0
    %v2195 = vsel %vm261, %v2186, 0
    %v2198 = vsel %vm261, %v2191, 0
    %2200 = vmatprep.subr.mxu0 0.0
    %2201 = vmatpush1.msra.mxu0 %v1679
    %2202 = vmatprep.subr.mxu0 0.0
    %2203 = vmatpush1.msra.mxu0 0.0
    %2204 = vmatprep.subr.mxu0 0.0
    %2205 = vmatpush1.msra.mxu0 0.0
    %2206 = vmatprep.subr.mxu0 0.0
    %2207 = vmatpush1.msra.mxu0 0.0
    %2208 = vmatprep.subr.mxu0 0.0
    %2209 = vmatpush1.msra.mxu0 0.0
    %2210 = vmatprep.subr.mxu0 0.0
    %2211 = vmatpush1.msra.mxu0 0.0
    %2212 = vmatprep.subr.mxu0 0.0
    %2213 = vmatpush1.msra.mxu0 0.0
    %2214 = vmatprep.subr.mxu0 0.0
    %2215 = vmatpush1.msra.mxu0 0.0
    %2216 = vmatprep.subr.mxu0 0.0
    %2217 = vmatpush1.msra.mxu0 0.0
    %2218 = vmatprep.subr.mxu0 0.0
    %2219 = vmatpush1.msra.mxu0 0.0
    %2220 = vmatprep.subr.mxu0 0.0
    %2221 = vmatpush1.msra.mxu0 0.0
    %2222 = vmatprep.subr.mxu0 0.0
    %2223 = vmatpush1.msra.mxu0 0.0
    %2224 = vmatprep.subr.mxu0 0.0
    %2225 = vmatpush1.msra.mxu0 0.0
    %2226 = vmatprep.subr.mxu0 0.0
    %2227 = vmatpush1.msra.mxu0 0.0
    %2228 = vmatprep.subr.mxu0 0.0
    %2229 = vmatpush1.msra.mxu0 0.0
    %2230 = vmatprep.subr.mxu0 0.0
    %2231 = vmatpush1.msra.mxu0 0.0
    %2232 = vmatprep.subr.mxu0 0.0
    %2233 = vmatpush1.msra.mxu0 0.0
    %2234 = vmatprep.subr.mxu0 0.0
    %2235 = vmatpush1.msra.mxu0 0.0
    %2236 = vmatprep.subr.mxu0 0.0
    %2237 = vmatpush1.msra.mxu0 0.0
    %2238 = vmatprep.subr.mxu0 0.0
    %2239 = vmatpush1.msra.mxu0 0.0
    %2240 = vmatprep.subr.mxu0 0.0
    %2241 = vmatpush1.msra.mxu0 0.0
    %2242 = vmatprep.subr.mxu0 0.0
    %2243 = vmatpush1.msra.mxu0 0.0
    %2244 = vmatprep.subr.mxu0 0.0
    %2245 = vmatpush1.msra.mxu0 0.0
    %2246 = vmatprep.subr.mxu0 0.0
    %2247 = vmatpush1.msra.mxu0 0.0
    %2248 = vmatprep.subr.mxu0 0.0
    %2249 = vmatpush1.msra.mxu0 0.0
    %2250 = vmatprep.subr.mxu0 0.0
    %2251 = vmatpush1.msra.mxu0 0.0
    %2252 = vmatprep.subr.mxu0 0.0
    %2253 = vmatpush1.msra.mxu0 0.0
    %2254 = vmatprep.subr.mxu0 0.0
    %2255 = vmatpush1.msra.mxu0 0.0
    %2256 = vmatprep.subr.mxu0 0.0
    %2257 = vmatpush1.msra.mxu0 0.0
    %2258 = vmatprep.subr.mxu0 0.0
    %2259 = vmatpush1.msra.mxu0 0.0
    %2260 = vmatprep.subr.mxu0 0.0
    %2261 = vmatpush1.msra.mxu0 0.0
    %2262 = vmatprep.subr.mxu0 0.0
    %2263 = vmatpush1.msra.mxu0 0.0
    %2264 = vmatprep.mubr.f32.mxu0 0.0
    %2265 = vmatmul.mubr.f32.gmra.mrb[0].mxu0 %v2195
    %v2266 = vpop.f32.mrb[0].mxu0
    %v2267 = vadd.f32 0.0, %v2266
    %v2268 = vpop.f32.mrb[0].mxu0
    %2269 = vmatprep.mubr.f32.mxu0 0.0
    %2270 = vmatmul.mubr.f32.gmra.mrb[0].mxu0 %v2198
    %v2271 = vpop.f32.mrb[0].mxu0
    %v2272 = vadd.f32 0.0, %v2271
    %v2273 = vpop.f32.mrb[0].mxu0
    %2274 = vdwg.mxu0
    %v2276 = vsel %vm261, %v1982, 0
    %v2279 = vsel %vm261, %v1987, 0
    %2281 = vmatprep.subr.mxu0 0.0
    %2282 = vmatpush1.msra.mxu0 %v1678
    %2283 = vmatprep.subr.mxu0 0.0
    %2284 = vmatpush1.msra.mxu0 0.0
    %2285 = vmatprep.subr.mxu0 0.0
    %2286 = vmatpush1.msra.mxu0 0.0
    %2287 = vmatprep.subr.mxu0 0.0
    %2288 = vmatpush1.msra.mxu0 0.0
    %2289 = vmatprep.subr.mxu0 0.0
    %2290 = vmatpush1.msra.mxu0 0.0
    %2291 = vmatprep.subr.mxu0 0.0
    %2292 = vmatpush1.msra.mxu0 0.0
    %2293 = vmatprep.subr.mxu0 0.0
    %2294 = vmatpush1.msra.mxu0 0.0
    %2295 = vmatprep.subr.mxu0 0.0
    %2296 = vmatpush1.msra.mxu0 0.0
    %2297 = vmatprep.subr.mxu0 0.0
    %2298 = vmatpush1.msra.mxu0 0.0
    %2299 = vmatprep.subr.mxu0 0.0
    %2300 = vmatpush1.msra.mxu0 0.0
    %2301 = vmatprep.subr.mxu0 0.0
    %2302 = vmatpush1.msra.mxu0 0.0
    %2303 = vmatprep.subr.mxu0 0.0
    %2304 = vmatpush1.msra.mxu0 0.0
    %2305 = vmatprep.subr.mxu0 0.0
    %2306 = vmatpush1.msra.mxu0 0.0
    %2307 = vmatprep.subr.mxu0 0.0
    %2308 = vmatpush1.msra.mxu0 0.0
    %2309 = vmatprep.subr.mxu0 0.0
    %2310 = vmatpush1.msra.mxu0 0.0
    %2311 = vmatprep.subr.mxu0 0.0
    %2312 = vmatpush1.msra.mxu0 0.0
    %2313 = vmatprep.subr.mxu0 0.0
    %2314 = vmatpush1.msra.mxu0 0.0
    %2315 = vmatprep.subr.mxu0 0.0
    %2316 = vmatpush1.msra.mxu0 0.0
    %2317 = vmatprep.subr.mxu0 0.0
    %2318 = vmatpush1.msra.mxu0 0.0
    %2319 = vmatprep.subr.mxu0 0.0
    %2320 = vmatpush1.msra.mxu0 0.0
    %2321 = vmatprep.subr.mxu0 0.0
    %2322 = vmatpush1.msra.mxu0 0.0
    %2323 = vmatprep.subr.mxu0 0.0
    %2324 = vmatpush1.msra.mxu0 0.0
    %2325 = vmatprep.subr.mxu0 0.0
    %2326 = vmatpush1.msra.mxu0 0.0
    %2327 = vmatprep.subr.mxu0 0.0
    %2328 = vmatpush1.msra.mxu0 0.0
    %2329 = vmatprep.subr.mxu0 0.0
    %2330 = vmatpush1.msra.mxu0 0.0
    %2331 = vmatprep.subr.mxu0 0.0
    %2332 = vmatpush1.msra.mxu0 0.0
    %2333 = vmatprep.subr.mxu0 0.0
    %2334 = vmatpush1.msra.mxu0 0.0
    %2335 = vmatprep.subr.mxu0 0.0
    %2336 = vmatpush1.msra.mxu0 0.0
    %2337 = vmatprep.subr.mxu0 0.0
    %2338 = vmatpush1.msra.mxu0 0.0
    %2339 = vmatprep.subr.mxu0 0.0
    %2340 = vmatpush1.msra.mxu0 0.0
    %2341 = vmatprep.subr.mxu0 0.0
    %2342 = vmatpush1.msra.mxu0 0.0
    %2343 = vmatprep.subr.mxu0 0.0
    %2344 = vmatpush1.msra.mxu0 0.0
    %2345 = vmatprep.mubr.f32.mxu0 0.0
    %2346 = vmatmul.mubr.f32.gmra.mrb[0].mxu0 %v2276
    %v2347 = vpop.f32.mrb[0].mxu0
    %v2348 = vadd.f32 %v2267, %v2347
    %v2349 = vpop.f32.mrb[0].mxu0
    %2350 = vmatprep.mubr.f32.mxu0 0.0
    %2351 = vmatmul.mubr.f32.gmra.mrb[0].mxu0 %v2279
    %v2352 = vpop.f32.mrb[0].mxu0
    %v2353 = vadd.f32 %v2272, %v2352
    %v2354 = vpop.f32.mrb[0].mxu0
    %2355 = vdwg.mxu0
    %2356 = vrot.lane.b32.xlu0 %v1780, 112
    %v2357 = vpop.permute.xlu0 %2356
    %2358 = vrot.lane.b32.xlu0 %v1785, 112
    %v2359 = vpop.permute.xlu0 %2358
    %2360 = vrot.lane.b32.xlu0 %v1780, 80
    %v2361 = vpop.permute.xlu0 %2360
    %2362 = vrot.lane.b32.xlu0 %v1785, 80
    %v2363 = vpop.permute.xlu0 %2362
    %v2364 = vsel %vm261, %v2357, 0
    %v2366 = vsel %vm261, %v2359, 0
    %v2368 = vsel %vm261, %v2361, 0
    %v2370 = vsel %vm261, %v2363, 0
    %2372 = vmatprep.subr.mxu0 0.0
    %2373 = vmatpush1.xpose.msra.mxu0 %v2368
    %2374 = vmatprep.subr.mxu0 0.0
    %2375 = vmatpush1.xpose.msra.mxu0 %v2370
    %2376 = vmatprep.subr.mxu0 0.0
    %2377 = vmatpush1.xpose.msra.mxu0 0.0
    %2378 = vmatprep.subr.mxu0 0.0
    %2379 = vmatpush1.xpose.msra.mxu0 0.0
    %2380 = vmatprep.subr.mxu0 0.0
    %2381 = vmatpush1.xpose.msra.mxu0 0.0
    %2382 = vmatprep.subr.mxu0 0.0
    %2383 = vmatpush1.xpose.msra.mxu0 0.0
    %2384 = vmatprep.subr.mxu0 0.0
    %2385 = vmatpush1.xpose.msra.mxu0 0.0
    %2386 = vmatprep.subr.mxu0 0.0
    %2387 = vmatpush1.xpose.msra.mxu0 0.0
    %2388 = vmatprep.subr.mxu0 0.0
    %2389 = vmatpush1.xpose.msra.mxu0 0.0
    %2390 = vmatprep.subr.mxu0 0.0
    %2391 = vmatpush1.xpose.msra.mxu0 0.0
    %2392 = vmatprep.subr.mxu0 0.0
    %2393 = vmatpush1.xpose.msra.mxu0 0.0
    %2394 = vmatprep.subr.mxu0 0.0
    %2395 = vmatpush1.xpose.msra.mxu0 0.0
    %2396 = vmatprep.subr.mxu0 0.0
    %2397 = vmatpush1.xpose.msra.mxu0 0.0
    %2398 = vmatprep.subr.mxu0 0.0
    %2399 = vmatpush1.xpose.msra.mxu0 0.0
    %2400 = vmatprep.subr.mxu0 0.0
    %2401 = vmatpush1.xpose.msra.mxu0 0.0
    %2402 = vmatprep.subr.mxu0 0.0
    %2403 = vmatpush1.xpose.msra.mxu0 0.0
    %2404 = vmatprep.subr.mxu0 0.0
    %2405 = vmatpush1.xpose.msra.mxu0 0.0
    %2406 = vmatprep.subr.mxu0 0.0
    %2407 = vmatpush1.xpose.msra.mxu0 0.0
    %2408 = vmatprep.subr.mxu0 0.0
    %2409 = vmatpush1.xpose.msra.mxu0 0.0
    %2410 = vmatprep.subr.mxu0 0.0
    %2411 = vmatpush1.xpose.msra.mxu0 0.0
    %2412 = vmatprep.subr.mxu0 0.0
    %2413 = vmatpush1.xpose.msra.mxu0 0.0
    %2414 = vmatprep.subr.mxu0 0.0
    %2415 = vmatpush1.xpose.msra.mxu0 0.0
    %2416 = vmatprep.subr.mxu0 0.0
    %2417 = vmatpush1.xpose.msra.mxu0 0.0
    %2418 = vmatprep.subr.mxu0 0.0
    %2419 = vmatpush1.xpose.msra.mxu0 0.0
    %2420 = vmatprep.subr.mxu0 0.0
    %2421 = vmatpush1.xpose.msra.mxu0 0.0
    %2422 = vmatprep.subr.mxu0 0.0
    %2423 = vmatpush1.xpose.msra.mxu0 0.0
    %2424 = vmatprep.subr.mxu0 0.0
    %2425 = vmatpush1.xpose.msra.mxu0 0.0
    %2426 = vmatprep.subr.mxu0 0.0
    %2427 = vmatpush1.xpose.msra.mxu0 0.0
    %2428 = vmatprep.subr.mxu0 0.0
    %2429 = vmatpush1.xpose.msra.mxu0 0.0
    %2430 = vmatprep.subr.mxu0 0.0
    %2431 = vmatpush1.xpose.msra.mxu0 0.0
    %2432 = vmatprep.subr.mxu0 0.0
    %2433 = vmatpush1.xpose.msra.mxu0 0.0
    %2434 = vmatprep.subr.mxu0 0.0
    %2435 = vmatpush1.xpose.msra.mxu0 0.0
    %2436 = vmatprep.mubr.f32.mxu0 0.0
    %2437 = vmatmul.mubr.f32.gmra.mrb[0].mxu0 %v2364
    %v2438 = vpop.f32.mrb[0].mxu0
    %v2439 = vadd.f32 0.0, %v2438
    %v2440 = vpop.f32.mrb[0].mxu0
    %2441 = vmatprep.mubr.f32.mxu0 0.0
    %2442 = vmatmul.mubr.f32.gmra.mrb[0].mxu0 %v2366
    %v2443 = vpop.f32.mrb[0].mxu0
    %v2444 = vadd.f32 0.0, %v2443
    %v2445 = vpop.f32.mrb[0].mxu0
    %2446 = vdwg.mxu0
    %v2447 = vmul.f32 %v2439, 0.35355338
    %v2448 = vmul.f32 %v2444, 0.35355338
    %v2449 = vadd.f32 %v2447, %v137
    %v2450 = vadd.f32 %v2448, %v138
    %v2451 = vsel %vm349, %v2449, -inf
    %2452 = vmax.xlane.f32.xlu0 %v2451
    %v2453 = vpop.xlane.xlu0 %2452
    %v2454 = vsel %vm349, %v2450, -inf
    %2455 = vmax.xlane.f32.xlu0 %v2454
    %v2456 = vpop.xlane.xlu0 %2455
    %v2457 = vsub.f32 %v2449, %v2453
    %v2458 = vsub.f32 %v2450, %v2456
    %v2459 = vmul.f32 %v2457, 1.442695
    %v2460 = vpow.pop %v2459
    %v2461 = vmul.f32 %v2458, 1.442695
    %v2462 = vpow.pop %v2461
    %v2463 = vsel %vm349, %v2460, 0.0
    %2464 = vadd.xlane.f32.xlu0 %v2463
    %v2465 = vpop.xlane.xlu0 %2464
    %v2466 = vsel %vm349, %v2462, 0.0
    %2467 = vadd.xlane.f32.xlu0 %v2466
    %v2468 = vpop.xlane.xlu0 %2467
    %v2469 = vrcp.pop %v2465
    %v2470 = vrcp.pop %v2468
    %v2471 = vmul.f32 %v2460, %v2469
    %v2472 = vmul.f32 %v2462, %v2470
    %2473 = vrot.lane.b32.xlu0 %v1780, 48
    %v2474 = vpop.permute.xlu0 %2473
    %2475 = vrot.lane.b32.xlu0 %v1785, 48
    %v2476 = vpop.permute.xlu0 %2475
    %v2480 = vsel %vm349, %v2471, 0
    %v2483 = vsel %vm349, %v2472, 0
    %2485 = vmatprep.subr.mxu0 0.0
    %2486 = vmatpush1.msra.mxu0 %v2474
    %2487 = vmatprep.subr.mxu0 0.0
    %2488 = vmatpush1.msra.mxu0 %v2476
    %2489 = vmatprep.subr.mxu0 0.0
    %2490 = vmatpush1.msra.mxu0 0.0
    %2491 = vmatprep.subr.mxu0 0.0
    %2492 = vmatpush1.msra.mxu0 0.0
    %2493 = vmatprep.subr.mxu0 0.0
    %2494 = vmatpush1.msra.mxu0 0.0
    %2495 = vmatprep.subr.mxu0 0.0
    %2496 = vmatpush1.msra.mxu0 0.0
    %2497 = vmatprep.subr.mxu0 0.0
    %2498 = vmatpush1.msra.mxu0 0.0
    %2499 = vmatprep.subr.mxu0 0.0
    %2500 = vmatpush1.msra.mxu0 0.0
    %2501 = vmatprep.subr.mxu0 0.0
    %2502 = vmatpush1.msra.mxu0 0.0
    %2503 = vmatprep.subr.mxu0 0.0
    %2504 = vmatpush1.msra.mxu0 0.0
    %2505 = vmatprep.subr.mxu0 0.0
    %2506 = vmatpush1.msra.mxu0 0.0
    %2507 = vmatprep.subr.mxu0 0.0
    %2508 = vmatpush1.msra.mxu0 0.0
    %2509 = vmatprep.subr.mxu0 0.0
    %2510 = vmatpush1.msra.mxu0 0.0
    %2511 = vmatprep.subr.mxu0 0.0
    %2512 = vmatpush1.msra.mxu0 0.0
    %2513 = vmatprep.subr.mxu0 0.0
    %2514 = vmatpush1.msra.mxu0 0.0
    %2515 = vmatprep.subr.mxu0 0.0
    %2516 = vmatpush1.msra.mxu0 0.0
    %2517 = vmatprep.subr.mxu0 0.0
    %2518 = vmatpush1.msra.mxu0 0.0
    %2519 = vmatprep.subr.mxu0 0.0
    %2520 = vmatpush1.msra.mxu0 0.0
    %2521 = vmatprep.subr.mxu0 0.0
    %2522 = vmatpush1.msra.mxu0 0.0
    %2523 = vmatprep.subr.mxu0 0.0
    %2524 = vmatpush1.msra.mxu0 0.0
    %2525 = vmatprep.subr.mxu0 0.0
    %2526 = vmatpush1.msra.mxu0 0.0
    %2527 = vmatprep.subr.mxu0 0.0
    %2528 = vmatpush1.msra.mxu0 0.0
    %2529 = vmatprep.subr.mxu0 0.0
    %2530 = vmatpush1.msra.mxu0 0.0
    %2531 = vmatprep.subr.mxu0 0.0
    %2532 = vmatpush1.msra.mxu0 0.0
    %2533 = vmatprep.subr.mxu0 0.0
    %2534 = vmatpush1.msra.mxu0 0.0
    %2535 = vmatprep.subr.mxu0 0.0
    %2536 = vmatpush1.msra.mxu0 0.0
    %2537 = vmatprep.subr.mxu0 0.0
    %2538 = vmatpush1.msra.mxu0 0.0
    %2539 = vmatprep.subr.mxu0 0.0
    %2540 = vmatpush1.msra.mxu0 0.0
    %2541 = vmatprep.subr.mxu0 0.0
    %2542 = vmatpush1.msra.mxu0 0.0
    %2543 = vmatprep.subr.mxu0 0.0
    %2544 = vmatpush1.msra.mxu0 0.0
    %2545 = vmatprep.subr.mxu0 0.0
    %2546 = vmatpush1.msra.mxu0 0.0
    %2547 = vmatprep.subr.mxu0 0.0
    %2548 = vmatpush1.msra.mxu0 0.0
    %2549 = vmatprep.mubr.f32.mxu0 0.0
    %2550 = vmatmul.mubr.f32.gmra.mrb[0].mxu0 %v2480
    %v2551 = vpop.f32.mrb[0].mxu0
    %v2552 = vadd.f32 0.0, %v2551
    %v2553 = vpop.f32.mrb[0].mxu0
    %2554 = vmatprep.mubr.f32.mxu0 0.0
    %2555 = vmatmul.mubr.f32.gmra.mrb[0].mxu0 %v2483
    %v2556 = vpop.f32.mrb[0].mxu0
    %v2557 = vadd.f32 0.0, %v2556
    %v2558 = vpop.f32.mrb[0].mxu0
    %2559 = vdwg.mxu0
    %v2561 = vsel %vm261, %v2552, 0
    %v2564 = vsel %vm261, %v2557, 0
    %2566 = vmatprep.subr.mxu0 0.0
    %2567 = vmatpush1.msra.mxu0 %v1680
    %2568 = vmatprep.subr.mxu0 0.0
    %2569 = vmatpush1.msra.mxu0 0.0
    %2570 = vmatprep.subr.mxu0 0.0
    %2571 = vmatpush1.msra.mxu0 0.0
    %2572 = vmatprep.subr.mxu0 0.0
    %2573 = vmatpush1.msra.mxu0 0.0
    %2574 = vmatprep.subr.mxu0 0.0
    %2575 = vmatpush1.msra.mxu0 0.0
    %2576 = vmatprep.subr.mxu0 0.0
    %2577 = vmatpush1.msra.mxu0 0.0
    %2578 = vmatprep.subr.mxu0 0.0
    %2579 = vmatpush1.msra.mxu0 0.0
    %2580 = vmatprep.subr.mxu0 0.0
    %2581 = vmatpush1.msra.mxu0 0.0
    %2582 = vmatprep.subr.mxu0 0.0
    %2583 = vmatpush1.msra.mxu0 0.0
    %2584 = vmatprep.subr.mxu0 0.0
    %2585 = vmatpush1.msra.mxu0 0.0
    %2586 = vmatprep.subr.mxu0 0.0
    %2587 = vmatpush1.msra.mxu0 0.0
    %2588 = vmatprep.subr.mxu0 0.0
    %2589 = vmatpush1.msra.mxu0 0.0
    %2590 = vmatprep.subr.mxu0 0.0
    %2591 = vmatpush1.msra.mxu0 0.0
    %2592 = vmatprep.subr.mxu0 0.0
    %2593 = vmatpush1.msra.mxu0 0.0
    %2594 = vmatprep.subr.mxu0 0.0
    %2595 = vmatpush1.msra.mxu0 0.0
    %2596 = vmatprep.subr.mxu0 0.0
    %2597 = vmatpush1.msra.mxu0 0.0
    %2598 = vmatprep.subr.mxu0 0.0
    %2599 = vmatpush1.msra.mxu0 0.0
    %2600 = vmatprep.subr.mxu0 0.0
    %2601 = vmatpush1.msra.mxu0 0.0
    %2602 = vmatprep.subr.mxu0 0.0
    %2603 = vmatpush1.msra.mxu0 0.0
    %2604 = vmatprep.subr.mxu0 0.0
    %2605 = vmatpush1.msra.mxu0 0.0
    %2606 = vmatprep.subr.mxu0 0.0
    %2607 = vmatpush1.msra.mxu0 0.0
    %2608 = vmatprep.subr.mxu0 0.0
    %2609 = vmatpush1.msra.mxu0 0.0
    %2610 = vmatprep.subr.mxu0 0.0
    %2611 = vmatpush1.msra.mxu0 0.0
    %2612 = vmatprep.subr.mxu0 0.0
    %2613 = vmatpush1.msra.mxu0 0.0
    %2614 = vmatprep.subr.mxu0 0.0
    %2615 = vmatpush1.msra.mxu0 0.0
    %2616 = vmatprep.subr.mxu0 0.0
    %2617 = vmatpush1.msra.mxu0 0.0
    %2618 = vmatprep.subr.mxu0 0.0
    %2619 = vmatpush1.msra.mxu0 0.0
    %2620 = vmatprep.subr.mxu0 0.0
    %2621 = vmatpush1.msra.mxu0 0.0
    %2622 = vmatprep.subr.mxu0 0.0
    %2623 = vmatpush1.msra.mxu0 0.0
    %2624 = vmatprep.subr.mxu0 0.0
    %2625 = vmatpush1.msra.mxu0 0.0
    %2626 = vmatprep.subr.mxu0 0.0
    %2627 = vmatpush1.msra.mxu0 0.0
    %2628 = vmatprep.subr.mxu0 0.0
    %2629 = vmatpush1.msra.mxu0 0.0
    %2630 = vmatprep.mubr.f32.mxu0 0.0
    %2631 = vmatmul.mubr.f32.gmra.mrb[0].mxu0 %v2561
    %v2632 = vpop.f32.mrb[0].mxu0
    %v2633 = vadd.f32 0.0, %v2632
    %v2634 = vpop.f32.mrb[0].mxu0
    %2635 = vmatprep.mubr.f32.mxu0 0.0
    %2636 = vmatmul.mubr.f32.gmra.mrb[0].mxu0 %v2564
    %v2637 = vpop.f32.mrb[0].mxu0
    %v2638 = vadd.f32 0.0, %v2637
    %v2639 = vpop.f32.mrb[0].mxu0
    %2640 = vdwg.mxu0
    %v2641 = vadd.f32 %v2348, %v2633
    %v2642 = vadd.f32 %v2353, %v2638
    %2643 = vrot.lane.b32.xlu0 %v1780, 104
    %v2644 = vpop.permute.xlu0 %2643
    %2645 = vrot.lane.b32.xlu0 %v1785, 104
    %v2646 = vpop.permute.xlu0 %2645
    %2647 = vrot.lane.b32.xlu0 %v1780, 72
    %v2648 = vpop.permute.xlu0 %2647
    %2649 = vrot.lane.b32.xlu0 %v1785, 72
    %v2650 = vpop.permute.xlu0 %2649
    %v2651 = vsel %vm261, %v2644, 0
    %v2653 = vsel %vm261, %v2646, 0
    %v2655 = vsel %vm261, %v2648, 0
    %v2657 = vsel %vm261, %v2650, 0
    %2659 = vmatprep.subr.mxu0 0.0
    %2660 = vmatpush1.xpose.msra.mxu0 %v2655
    %2661 = vmatprep.subr.mxu0 0.0
    %2662 = vmatpush1.xpose.msra.mxu0 %v2657
    %2663 = vmatprep.subr.mxu0 0.0
    %2664 = vmatpush1.xpose.msra.mxu0 0.0
    %2665 = vmatprep.subr.mxu0 0.0
    %2666 = vmatpush1.xpose.msra.mxu0 0.0
    %2667 = vmatprep.subr.mxu0 0.0
    %2668 = vmatpush1.xpose.msra.mxu0 0.0
    %2669 = vmatprep.subr.mxu0 0.0
    %2670 = vmatpush1.xpose.msra.mxu0 0.0
    %2671 = vmatprep.subr.mxu0 0.0
    %2672 = vmatpush1.xpose.msra.mxu0 0.0
    %2673 = vmatprep.subr.mxu0 0.0
    %2674 = vmatpush1.xpose.msra.mxu0 0.0
    %2675 = vmatprep.subr.mxu0 0.0
    %2676 = vmatpush1.xpose.msra.mxu0 0.0
    %2677 = vmatprep.subr.mxu0 0.0
    %2678 = vmatpush1.xpose.msra.mxu0 0.0
    %2679 = vmatprep.subr.mxu0 0.0
    %2680 = vmatpush1.xpose.msra.mxu0 0.0
    %2681 = vmatprep.subr.mxu0 0.0
    %2682 = vmatpush1.xpose.msra.mxu0 0.0
    %2683 = vmatprep.subr.mxu0 0.0
    %2684 = vmatpush1.xpose.msra.mxu0 0.0
    %2685 = vmatprep.subr.mxu0 0.0
    %2686 = vmatpush1.xpose.msra.mxu0 0.0
    %2687 = vmatprep.subr.mxu0 0.0
    %2688 = vmatpush1.xpose.msra.mxu0 0.0
    %2689 = vmatprep.subr.mxu0 0.0
    %2690 = vmatpush1.xpose.msra.mxu0 0.0
    %2691 = vmatprep.subr.mxu0 0.0
    %2692 = vmatpush1.xpose.msra.mxu0 0.0
    %2693 = vmatprep.subr.mxu0 0.0
    %2694 = vmatpush1.xpose.msra.mxu0 0.0
    %2695 = vmatprep.subr.mxu0 0.0
    %2696 = vmatpush1.xpose.msra.mxu0 0.0
    %2697 = vmatprep.subr.mxu0 0.0
    %2698 = vmatpush1.xpose.msra.mxu0 0.0
    %2699 = vmatprep.subr.mxu0 0.0
    %2700 = vmatpush1.xpose.msra.mxu0 0.0
    %2701 = vmatprep.subr.mxu0 0.0
    %2702 = vmatpush1.xpose.msra.mxu0 0.0
    %2703 = vmatprep.subr.mxu0 0.0
    %2704 = vmatpush1.xpose.msra.mxu0 0.0
    %2705 = vmatprep.subr.mxu0 0.0
    %2706 = vmatpush1.xpose.msra.mxu0 0.0
    %2707 = vmatprep.subr.mxu0 0.0
    %2708 = vmatpush1.xpose.msra.mxu0 0.0
    %2709 = vmatprep.subr.mxu0 0.0
    %2710 = vmatpush1.xpose.msra.mxu0 0.0
    %2711 = vmatprep.subr.mxu0 0.0
    %2712 = vmatpush1.xpose.msra.mxu0 0.0
    %2713 = vmatprep.subr.mxu0 0.0
    %2714 = vmatpush1.xpose.msra.mxu0 0.0
    %2715 = vmatprep.subr.mxu0 0.0
    %2716 = vmatpush1.xpose.msra.mxu0 0.0
    %2717 = vmatprep.subr.mxu0 0.0
    %2718 = vmatpush1.xpose.msra.mxu0 0.0
    %2719 = vmatprep.subr.mxu0 0.0
    %2720 = vmatpush1.xpose.msra.mxu0 0.0
    %2721 = vmatprep.subr.mxu0 0.0
    %2722 = vmatpush1.xpose.msra.mxu0 0.0
    %2723 = vmatprep.mubr.f32.mxu0 0.0
    %2724 = vmatmul.mubr.f32.gmra.mrb[0].mxu0 %v2651
    %v2725 = vpop.f32.mrb[0].mxu0
    %v2726 = vadd.f32 0.0, %v2725
    %v2727 = vpop.f32.mrb[0].mxu0
    %2728 = vmatprep.mubr.f32.mxu0 0.0
    %2729 = vmatmul.mubr.f32.gmra.mrb[0].mxu0 %v2653
    %v2730 = vpop.f32.mrb[0].mxu0
    %v2731 = vadd.f32 0.0, %v2730
    %v2732 = vpop.f32.mrb[0].mxu0
    %2733 = vdwg.mxu0
    %v2734 = vmul.f32 %v2726, 0.35355338
    %v2735 = vmul.f32 %v2731, 0.35355338
    %v2736 = vadd.f32 %v2734, %v137
    %v2737 = vadd.f32 %v2735, %v138
    %v2738 = vsel %vm349, %v2736, -inf
    %2739 = vmax.xlane.f32.xlu0 %v2738
    %v2740 = vpop.xlane.xlu0 %2739
    %v2741 = vsel %vm349, %v2737, -inf
    %2742 = vmax.xlane.f32.xlu0 %v2741
    %v2743 = vpop.xlane.xlu0 %2742
    %v2744 = vsub.f32 %v2736, %v2740
    %v2745 = vsub.f32 %v2737, %v2743
    %v2746 = vmul.f32 %v2744, 1.442695
    %v2747 = vpow.pop %v2746
    %v2748 = vmul.f32 %v2745, 1.442695
    %v2749 = vpow.pop %v2748
    %v2750 = vsel %vm349, %v2747, 0.0
    %2751 = vadd.xlane.f32.xlu0 %v2750
    %v2752 = vpop.xlane.xlu0 %2751
    %v2753 = vsel %vm349, %v2749, 0.0
    %2754 = vadd.xlane.f32.xlu0 %v2753
    %v2755 = vpop.xlane.xlu0 %2754
    %v2756 = vrcp.pop %v2752
    %v2757 = vrcp.pop %v2755
    %v2758 = vmul.f32 %v2747, %v2756
    %v2759 = vmul.f32 %v2749, %v2757
    %2760 = vrot.lane.b32.xlu0 %v1780, 40
    %v2761 = vpop.permute.xlu0 %2760
    %2762 = vrot.lane.b32.xlu0 %v1785, 40
    %v2763 = vpop.permute.xlu0 %2762
    %v2767 = vsel %vm349, %v2758, 0
    %v2770 = vsel %vm349, %v2759, 0
    %2772 = vmatprep.subr.mxu0 0.0
    %2773 = vmatpush1.msra.mxu0 %v2761
    %2774 = vmatprep.subr.mxu0 0.0
    %2775 = vmatpush1.msra.mxu0 %v2763
    %2776 = vmatprep.subr.mxu0 0.0
    %2777 = vmatpush1.msra.mxu0 0.0
    %2778 = vmatprep.subr.mxu0 0.0
    %2779 = vmatpush1.msra.mxu0 0.0
    %2780 = vmatprep.subr.mxu0 0.0
    %2781 = vmatpush1.msra.mxu0 0.0
    %2782 = vmatprep.subr.mxu0 0.0
    %2783 = vmatpush1.msra.mxu0 0.0
    %2784 = vmatprep.subr.mxu0 0.0
    %2785 = vmatpush1.msra.mxu0 0.0
    %2786 = vmatprep.subr.mxu0 0.0
    %2787 = vmatpush1.msra.mxu0 0.0
    %2788 = vmatprep.subr.mxu0 0.0
    %2789 = vmatpush1.msra.mxu0 0.0
    %2790 = vmatprep.subr.mxu0 0.0
    %2791 = vmatpush1.msra.mxu0 0.0
    %2792 = vmatprep.subr.mxu0 0.0
    %2793 = vmatpush1.msra.mxu0 0.0
    %2794 = vmatprep.subr.mxu0 0.0
    %2795 = vmatpush1.msra.mxu0 0.0
    %2796 = vmatprep.subr.mxu0 0.0
    %2797 = vmatpush1.msra.mxu0 0.0
    %2798 = vmatprep.subr.mxu0 0.0
    %2799 = vmatpush1.msra.mxu0 0.0
    %2800 = vmatprep.subr.mxu0 0.0
    %2801 = vmatpush1.msra.mxu0 0.0
    %2802 = vmatprep.subr.mxu0 0.0
    %2803 = vmatpush1.msra.mxu0 0.0
    %2804 = vmatprep.subr.mxu0 0.0
    %2805 = vmatpush1.msra.mxu0 0.0
    %2806 = vmatprep.subr.mxu0 0.0
    %2807 = vmatpush1.msra.mxu0 0.0
    %2808 = vmatprep.subr.mxu0 0.0
    %2809 = vmatpush1.msra.mxu0 0.0
    %2810 = vmatprep.subr.mxu0 0.0
    %2811 = vmatpush1.msra.mxu0 0.0
    %2812 = vmatprep.subr.mxu0 0.0
    %2813 = vmatpush1.msra.mxu0 0.0
    %2814 = vmatprep.subr.mxu0 0.0
    %2815 = vmatpush1.msra.mxu0 0.0
    %2816 = vmatprep.subr.mxu0 0.0
    %2817 = vmatpush1.msra.mxu0 0.0
    %2818 = vmatprep.subr.mxu0 0.0
    %2819 = vmatpush1.msra.mxu0 0.0
    %2820 = vmatprep.subr.mxu0 0.0
    %2821 = vmatpush1.msra.mxu0 0.0
    %2822 = vmatprep.subr.mxu0 0.0
    %2823 = vmatpush1.msra.mxu0 0.0
    %2824 = vmatprep.subr.mxu0 0.0
    %2825 = vmatpush1.msra.mxu0 0.0
    %2826 = vmatprep.subr.mxu0 0.0
    %2827 = vmatpush1.msra.mxu0 0.0
    %2828 = vmatprep.subr.mxu0 0.0
    %2829 = vmatpush1.msra.mxu0 0.0
    %2830 = vmatprep.subr.mxu0 0.0
    %2831 = vmatpush1.msra.mxu0 0.0
    %2832 = vmatprep.subr.mxu0 0.0
    %2833 = vmatpush1.msra.mxu0 0.0
    %2834 = vmatprep.subr.mxu0 0.0
    %2835 = vmatpush1.msra.mxu0 0.0
    %2836 = vmatprep.mubr.f32.mxu0 0.0
    %2837 = vmatmul.mubr.f32.gmra.mrb[0].mxu0 %v2767
    %v2838 = vpop.f32.mrb[0].mxu0
    %v2839 = vadd.f32 0.0, %v2838
    %v2840 = vpop.f32.mrb[0].mxu0
    %2841 = vmatprep.mubr.f32.mxu0 0.0
    %2842 = vmatmul.mubr.f32.gmra.mrb[0].mxu0 %v2770
    %v2843 = vpop.f32.mrb[0].mxu0
    %v2844 = vadd.f32 0.0, %v2843
    %v2845 = vpop.f32.mrb[0].mxu0
    %2846 = vdwg.mxu0
    %v2848 = vsel %vm261, %v2839, 0
    %v2851 = vsel %vm261, %v2844, 0
    %2853 = vmatprep.subr.mxu0 0.0
    %2854 = vmatpush1.msra.mxu0 %v1681
    %2855 = vmatprep.subr.mxu0 0.0
    %2856 = vmatpush1.msra.mxu0 0.0
    %2857 = vmatprep.subr.mxu0 0.0
    %2858 = vmatpush1.msra.mxu0 0.0
    %2859 = vmatprep.subr.mxu0 0.0
    %2860 = vmatpush1.msra.mxu0 0.0
    %2861 = vmatprep.subr.mxu0 0.0
    %2862 = vmatpush1.msra.mxu0 0.0
    %2863 = vmatprep.subr.mxu0 0.0
    %2864 = vmatpush1.msra.mxu0 0.0
    %2865 = vmatprep.subr.mxu0 0.0
    %2866 = vmatpush1.msra.mxu0 0.0
    %2867 = vmatprep.subr.mxu0 0.0
    %2868 = vmatpush1.msra.mxu0 0.0
    %2869 = vmatprep.subr.mxu0 0.0
    %2870 = vmatpush1.msra.mxu0 0.0
    %2871 = vmatprep.subr.mxu0 0.0
    %2872 = vmatpush1.msra.mxu0 0.0
    %2873 = vmatprep.subr.mxu0 0.0
    %2874 = vmatpush1.msra.mxu0 0.0
    %2875 = vmatprep.subr.mxu0 0.0
    %2876 = vmatpush1.msra.mxu0 0.0
    %2877 = vmatprep.subr.mxu0 0.0
    %2878 = vmatpush1.msra.mxu0 0.0
    %2879 = vmatprep.subr.mxu0 0.0
    %2880 = vmatpush1.msra.mxu0 0.0
    %2881 = vmatprep.subr.mxu0 0.0
    %2882 = vmatpush1.msra.mxu0 0.0
    %2883 = vmatprep.subr.mxu0 0.0
    %2884 = vmatpush1.msra.mxu0 0.0
    %2885 = vmatprep.subr.mxu0 0.0
    %2886 = vmatpush1.msra.mxu0 0.0
    %2887 = vmatprep.subr.mxu0 0.0
    %2888 = vmatpush1.msra.mxu0 0.0
    %2889 = vmatprep.subr.mxu0 0.0
    %2890 = vmatpush1.msra.mxu0 0.0
    %2891 = vmatprep.subr.mxu0 0.0
    %2892 = vmatpush1.msra.mxu0 0.0
    %2893 = vmatprep.subr.mxu0 0.0
    %2894 = vmatpush1.msra.mxu0 0.0
    %2895 = vmatprep.subr.mxu0 0.0
    %2896 = vmatpush1.msra.mxu0 0.0
    %2897 = vmatprep.subr.mxu0 0.0
    %2898 = vmatpush1.msra.mxu0 0.0
    %2899 = vmatprep.subr.mxu0 0.0
    %2900 = vmatpush1.msra.mxu0 0.0
    %2901 = vmatprep.subr.mxu0 0.0
    %2902 = vmatpush1.msra.mxu0 0.0
    %2903 = vmatprep.subr.mxu0 0.0
    %2904 = vmatpush1.msra.mxu0 0.0
    %2905 = vmatprep.subr.mxu0 0.0
    %2906 = vmatpush1.msra.mxu0 0.0
    %2907 = vmatprep.subr.mxu0 0.0
    %2908 = vmatpush1.msra.mxu0 0.0
    %2909 = vmatprep.subr.mxu0 0.0
    %2910 = vmatpush1.msra.mxu0 0.0
    %2911 = vmatprep.subr.mxu0 0.0
    %2912 = vmatpush1.msra.mxu0 0.0
    %2913 = vmatprep.subr.mxu0 0.0
    %2914 = vmatpush1.msra.mxu0 0.0
    %2915 = vmatprep.subr.mxu0 0.0
    %2916 = vmatpush1.msra.mxu0 0.0
    %2917 = vmatprep.mubr.f32.mxu0 0.0
    %2918 = vmatmul.mubr.f32.gmra.mrb[0].mxu0 %v2848
    %v2919 = vpop.f32.mrb[0].mxu0
    %v2920 = vadd.f32 0.0, %v2919
    %v2921 = vpop.f32.mrb[0].mxu0
    %2922 = vmatprep.mubr.f32.mxu0 0.0
    %2923 = vmatmul.mubr.f32.gmra.mrb[0].mxu0 %v2851
    %v2924 = vpop.f32.mrb[0].mxu0
    %v2925 = vadd.f32 0.0, %v2924
    %v2926 = vpop.f32.mrb[0].mxu0
    %2927 = vdwg.mxu0
    %v2928 = vadd.f32 %v2641, %v2920
    %v2929 = vadd.f32 %v2642, %v2925
    %v2931 = vlaneseq
    %v2932 = vshrl.u32 %v2931, 7
    %v2933 = vsub.s32 0, %v2932
    %v2934 = vrot.slane %v1682, %v2933
    %v2936 = vadd.f32 %v2928, %v2934
    %v2937 = vadd.f32 %v2929, %v2934
    %v2938 = vadd.f32 %v1671, %v2936
    %v2939 = vadd.f32 %v1672, %v2937
    %v2940 = vsel %vm173, %v2938, 0.0
    %2941 = vadd.xlane.f32.xlu0 %v2940
    %v2942 = vpop.xlane.xlu0 %2941
    %v2943 = vsel %vm173, %v2939, 0.0
    %2944 = vadd.xlane.f32.xlu0 %v2943
    %v2945 = vpop.xlane.xlu0 %2944
    %v2946 = vmul.f32 %v2942, %v1415
    %v2947 = vmul.f32 %v2945, %v1415
    %v2948 = vsub.f32 %v2938, %v2946
    %v2949 = vsub.f32 %v2939, %v2947
    %v2950 = vmul.f32 %v2948, %v2948
    %v2951 = vmul.f32 %v2949, %v2949
    %v2952 = vsel %vm173, %v2950, 0.0
    %2953 = vadd.xlane.f32.xlu0 %v2952
    %v2954 = vpop.xlane.xlu0 %2953
    %v2955 = vsel %vm173, %v2951, 0.0
    %2956 = vadd.xlane.f32.xlu0 %v2955
    %v2957 = vpop.xlane.xlu0 %2956
    %v2958 = vmul.f32 %v2954, %v1415
    %v2959 = vmul.f32 %v2957, %v1415
    %v2960 = vadd.f32 %v2958, 1e-05
    %v2961 = vadd.f32 %v2959, 1e-05
    %v2962 = vrsqrt.pop %v2960
    %v2963 = vrsqrt.pop %v2961
    %v2964 = vmul.f32 %v2948, %v2962
    %v2965 = vmul.f32 %v2949, %v2963
    %v2967 = vlaneseq
    %v2968 = vshrl.u32 %v2967, 7
    %v2969 = vsub.s32 0, %v2968
    %v2970 = vrot.slane %v1697, %v2969
    %v2972 = vmul.f32 %v2964, %v2970
    %v2973 = vmul.f32 %v2965, %v2970
    %v2975 = vlaneseq
    %v2976 = vshrl.u32 %v2975, 7
    %v2977 = vsub.s32 0, %v2976
    %v2978 = vrot.slane %v1698, %v2977
    %v2980 = vadd.f32 %v2972, %v2978
    %v2981 = vadd.f32 %v2973, %v2978
    %v2983 = vlaneseq
    %v2984 = vshrl.u32 %v2983, 7
    %v2985 = vsub.s32 0, %v2984
    %v2986 = vrot.slane %v1687, %v2985
    %v2989 = vsel %vm173, %v2980, 0
    %v2992 = vsel %vm173, %v2981, 0
    %2994 = vmatprep.subr.mxu0 0.0
    %2995 = vmatpush1.msra.mxu0 %v1683
    %2996 = vmatprep.subr.mxu0 0.0
    %2997 = vmatpush1.msra.mxu0 %v1684
    %2998 = vmatprep.subr.mxu0 0.0
    %2999 = vmatpush1.msra.mxu0 %v1685
    %3000 = vmatprep.subr.mxu0 0.0
    %3001 = vmatpush1.msra.mxu0 %v1686
    %3002 = vmatprep.subr.mxu0 0.0
    %3003 = vmatpush1.msra.mxu0 0.0
    %3004 = vmatprep.subr.mxu0 0.0
    %3005 = vmatpush1.msra.mxu0 0.0
    %3006 = vmatprep.subr.mxu0 0.0
    %3007 = vmatpush1.msra.mxu0 0.0
    %3008 = vmatprep.subr.mxu0 0.0
    %3009 = vmatpush1.msra.mxu0 0.0
    %3010 = vmatprep.subr.mxu0 0.0
    %3011 = vmatpush1.msra.mxu0 0.0
    %3012 = vmatprep.subr.mxu0 0.0
    %3013 = vmatpush1.msra.mxu0 0.0
    %3014 = vmatprep.subr.mxu0 0.0
    %3015 = vmatpush1.msra.mxu0 0.0
    %3016 = vmatprep.subr.mxu0 0.0
    %3017 = vmatpush1.msra.mxu0 0.0
    %3018 = vmatprep.subr.mxu0 0.0
    %3019 = vmatpush1.msra.mxu0 0.0
    %3020 = vmatprep.subr.mxu0 0.0
    %3021 = vmatpush1.msra.mxu0 0.0
    %3022 = vmatprep.subr.mxu0 0.0
    %3023 = vmatpush1.msra.mxu0 0.0
    %3024 = vmatprep.subr.mxu0 0.0
    %3025 = vmatpush1.msra.mxu0 0.0
    %3026 = vmatprep.subr.mxu0 0.0
    %3027 = vmatpush1.msra.mxu0 0.0
    %3028 = vmatprep.subr.mxu0 0.0
    %3029 = vmatpush1.msra.mxu0 0.0
    %3030 = vmatprep.subr.mxu0 0.0
    %3031 = vmatpush1.msra.mxu0 0.0
    %3032 = vmatprep.subr.mxu0 0.0
    %3033 = vmatpush1.msra.mxu0 0.0
    %3034 = vmatprep.subr.mxu0 0.0
    %3035 = vmatpush1.msra.mxu0 0.0
    %3036 = vmatprep.subr.mxu0 0.0
    %3037 = vmatpush1.msra.mxu0 0.0
    %3038 = vmatprep.subr.mxu0 0.0
    %3039 = vmatpush1.msra.mxu0 0.0
    %3040 = vmatprep.subr.mxu0 0.0
    %3041 = vmatpush1.msra.mxu0 0.0
    %3042 = vmatprep.subr.mxu0 0.0
    %3043 = vmatpush1.msra.mxu0 0.0
    %3044 = vmatprep.subr.mxu0 0.0
    %3045 = vmatpush1.msra.mxu0 0.0
    %3046 = vmatprep.subr.mxu0 0.0
    %3047 = vmatpush1.msra.mxu0 0.0
    %3048 = vmatprep.subr.mxu0 0.0
    %3049 = vmatpush1.msra.mxu0 0.0
    %3050 = vmatprep.subr.mxu0 0.0
    %3051 = vmatpush1.msra.mxu0 0.0
    %3052 = vmatprep.subr.mxu0 0.0
    %3053 = vmatpush1.msra.mxu0 0.0
    %3054 = vmatprep.subr.mxu0 0.0
    %3055 = vmatpush1.msra.mxu0 0.0
    %3056 = vmatprep.subr.mxu0 0.0
    %3057 = vmatpush1.msra.mxu0 0.0
    %3058 = vmatprep.mubr.f32.mxu0 0.0
    %3059 = vmatmul.mubr.f32.gmra.mrb[0].mxu0 %v2989
    %v3060 = vpop.f32.mrb[0].mxu0
    %v3061 = vadd.f32 %v2986, %v3060
    %v3062 = vpop.f32.mrb[0].mxu0
    %3063 = vmatprep.mubr.f32.mxu0 0.0
    %3064 = vmatmul.mubr.f32.gmra.mrb[0].mxu0 %v2992
    %v3065 = vpop.f32.mrb[0].mxu0
    %v3066 = vadd.f32 %v2986, %v3065
    %v3067 = vpop.f32.mrb[0].mxu0
    %3068 = vdwg.mxu0
    %v3069 = vmax.f32 %v3061, 0.0
    %v3070 = vmax.f32 %v3066, 0.0
    %v3072 = vlaneseq
    %v3073 = vshrl.u32 %v3072, 7
    %v3074 = vsub.s32 0, %v3073
    %v3075 = vrot.slane %v1696, %v3074
    %v3078 = vsel %vm1547, %v3069, 0
    %v3081 = vsel %vm1547, %v3070, 0
    %3083 = vmatprep.subr.mxu0 0.0
    %3084 = vmatpush1.msra.mxu0 %v1688
    %3085 = vmatprep.subr.mxu0 0.0
    %3086 = vmatpush1.msra.mxu0 %v1689
    %3087 = vmatprep.subr.mxu0 0.0
    %3088 = vmatpush1.msra.mxu0 %v1690
    %3089 = vmatprep.subr.mxu0 0.0
    %3090 = vmatpush1.msra.mxu0 %v1691
    %3091 = vmatprep.subr.mxu0 0.0
    %3092 = vmatpush1.msra.mxu0 %v1692
    %3093 = vmatprep.subr.mxu0 0.0
    %3094 = vmatpush1.msra.mxu0 %v1693
    %3095 = vmatprep.subr.mxu0 0.0
    %3096 = vmatpush1.msra.mxu0 %v1694
    %3097 = vmatprep.subr.mxu0 0.0
    %3098 = vmatpush1.msra.mxu0 %v1695
    %3099 = vmatprep.subr.mxu0 0.0
    %3100 = vmatpush1.msra.mxu0 0.0
    %3101 = vmatprep.subr.mxu0 0.0
    %3102 = vmatpush1.msra.mxu0 0.0
    %3103 = vmatprep.subr.mxu0 0.0
    %3104 = vmatpush1.msra.mxu0 0.0
    %3105 = vmatprep.subr.mxu0 0.0
    %3106 = vmatpush1.msra.mxu0 0.0
    %3107 = vmatprep.subr.mxu0 0.0
    %3108 = vmatpush1.msra.mxu0 0.0
    %3109 = vmatprep.subr.mxu0 0.0
    %3110 = vmatpush1.msra.mxu0 0.0
    %3111 = vmatprep.subr.mxu0 0.0
    %3112 = vmatpush1.msra.mxu0 0.0
    %3113 = vmatprep.subr.mxu0 0.0
    %3114 = vmatpush1.msra.mxu0 0.0
    %3115 = vmatprep.subr.mxu0 0.0
    %3116 = vmatpush1.msra.mxu0 0.0
    %3117 = vmatprep.subr.mxu0 0.0
    %3118 = vmatpush1.msra.mxu0 0.0
    %3119 = vmatprep.subr.mxu0 0.0
    %3120 = vmatpush1.msra.mxu0 0.0
    %3121 = vmatprep.subr.mxu0 0.0
    %3122 = vmatpush1.msra.mxu0 0.0
    %3123 = vmatprep.subr.mxu0 0.0
    %3124 = vmatpush1.msra.mxu0 0.0
    %3125 = vmatprep.subr.mxu0 0.0
    %3126 = vmatpush1.msra.mxu0 0.0
    %3127 = vmatprep.subr.mxu0 0.0
    %3128 = vmatpush1.msra.mxu0 0.0
    %3129 = vmatprep.subr.mxu0 0.0
    %3130 = vmatpush1.msra.mxu0 0.0
    %3131 = vmatprep.subr.mxu0 0.0
    %3132 = vmatpush1.msra.mxu0 0.0
    %3133 = vmatprep.subr.mxu0 0.0
    %3134 = vmatpush1.msra.mxu0 0.0
    %3135 = vmatprep.subr.mxu0 0.0
    %3136 = vmatpush1.msra.mxu0 0.0
    %3137 = vmatprep.subr.mxu0 0.0
    %3138 = vmatpush1.msra.mxu0 0.0
    %3139 = vmatprep.subr.mxu0 0.0
    %3140 = vmatpush1.msra.mxu0 0.0
    %3141 = vmatprep.subr.mxu0 0.0
    %3142 = vmatpush1.msra.mxu0 0.0
    %3143 = vmatprep.subr.mxu0 0.0
    %3144 = vmatpush1.msra.mxu0 0.0
    %3145 = vmatprep.subr.mxu0 0.0
    %3146 = vmatpush1.msra.mxu0 0.0
    %3147 = vmatprep.mubr.f32.mxu0 0.0
    %3148 = vmatmul.mubr.f32.gmra.mrb[0].mxu0 %v3078
    %v3149 = vpop.f32.mrb[0].mxu0
    %v3150 = vadd.f32 %v3075, %v3149
    %v3151 = vpop.f32.mrb[0].mxu0
    %3152 = vmatprep.mubr.f32.mxu0 0.0
    %3153 = vmatmul.mubr.f32.gmra.mrb[0].mxu0 %v3081
    %v3154 = vpop.f32.mrb[0].mxu0
    %v3155 = vadd.f32 %v3075, %v3154
    %v3156 = vpop.f32.mrb[0].mxu0
    %3157 = vdwg.mxu0
    %v3158 = vadd.f32 %v2980, %v3150
    %v3159 = vadd.f32 %v2981, %v3155
    %v3160 = vsel %vm173, %v3158, 0.0
    %3161 = vadd.xlane.f32.xlu0 %v3160
    %v3162 = vpop.xlane.xlu0 %3161
    %v3163 = vsel %vm173, %v3159, 0.0
    %3164 = vadd.xlane.f32.xlu0 %v3163
    %v3165 = vpop.xlane.xlu0 %3164
    %v3166 = vmul.f32 %v3162, %v1415
    %v3167 = vmul.f32 %v3165, %v1415
    %v3168 = vsub.f32 %v3158, %v3166
    %v3169 = vsub.f32 %v3159, %v3167
    %v3170 = vmul.f32 %v3168, %v3168
    %v3171 = vmul.f32 %v3169, %v3169
    %v3172 = vsel %vm173, %v3170, 0.0
    %3173 = vadd.xlane.f32.xlu0 %v3172
    %v3174 = vpop.xlane.xlu0 %3173
    %v3175 = vsel %vm173, %v3171, 0.0
    %3176 = vadd.xlane.f32.xlu0 %v3175
    %v3177 = vpop.xlane.xlu0 %3176
    %v3178 = vmul.f32 %v3174, %v1415
    %v3179 = vmul.f32 %v3177, %v1415
    %v3180 = vadd.f32 %v3178, 1e-05
    %v3181 = vadd.f32 %v3179, 1e-05
    %v3182 = vrsqrt.pop %v3180
    %v3183 = vrsqrt.pop %v3181
    %v3184 = vmul.f32 %v3168, %v3182
    %v3185 = vmul.f32 %v3169, %v3183
    %v3187 = vlaneseq
    %v3188 = vshrl.u32 %v3187, 7
    %v3189 = vsub.s32 0, %v3188
    %v3190 = vrot.slane %v1699, %v3189
    %v3192 = vmul.f32 %v3184, %v3190
    %v3193 = vmul.f32 %v3185, %v3190
    %v3195 = vlaneseq
    %v3196 = vshrl.u32 %v3195, 7
    %v3197 = vsub.s32 0, %v3196
    %v3198 = vrot.slane %v1700, %v3197
    %v3200 = vadd.f32 %v3192, %v3198
    %v3201 = vadd.f32 %v3193, %v3198
    %3202 = vst.msk [vmem:[#allocation10] sm:$0xff] %vm173, %v3200
    %3203 = vst.msk [vmem:[#allocation10 + $0x8] sm:$0xff] %vm173, %v3201
    // Predicated region
    $region122: #{tpu_custom_call.1} parent=1 // pred_check
      _
    $region123: #{tpu_custom_call.1} parent=1 // pred_check_branch
      %3205 = sbr.rel (0) target = $region125
    $region124: #{tpu_custom_call.1} parent=1 // pred_region
      %s3207 = ssub.s32 256, 256
      %3208 = vsyncadd [#allocation4], %s3207
      %s3209 = sshll.u32 [#allocation10], 4
      %s3210 = int_to_ptr.vmem [resolvable:$true] %s3209
      %3215 = dma.vmem_to_hbm [thread:$0]  %s3210, 256, %s26, [#allocation4], 128, 128, 8
    $region125: #{tpu_custom_call.1} parent=1 // pred_fallthru
      _
    // Predicated region
    $region126: #{tpu_custom_call.1} parent=1 // pred_check
      _
    $region127: #{tpu_custom_call.1} parent=1 // pred_check_branch
      %3217 = sbr.rel (0) target = $region129
    $region128: #{tpu_custom_call.1} parent=1 // pred_region
      %3218 = dma.done [#allocation4], 256
    $region129: #{tpu_custom_call.1} parent=1 // pred_fallthru
      _
    %3219 = vsyncpa [#allocation3], 1
    %3220 = vsyncpa [#allocation6], 1
    %3221 = vsyncpa [#allocation9], 1
    %3222 = vsyncpa [#allocation4], 1

</llo_original>
